<compile_context>
chip_gen: v7x
topology: tpu7x:2x2x1
jax: 0.10.0
libtpu: 0.0.40
codegen_flags: <defaults>
</compile_context>

<pallas_src>
import math
import functools

import jax
import jax.numpy as jnp
import numpy as np
from jax.experimental import pallas as pl
from jax.experimental.pallas import tpu as pltpu


# ----------------------------- shared math helper -----------------------------

def _norm(x, alpha, bias, eps=1e-6, approx=False):
    """PyTorch `Norm`: alpha * (x - mean) / (std_unbiased + eps) + bias."""
    d = x.shape[-1]
    mean = jnp.mean(x, axis=-1, keepdims=True)
    xc = x - mean
    var = jnp.sum(xc * xc, axis=-1, keepdims=True) / (d - 1)   # unbiased (torch.std)
    denom = jnp.sqrt(var) + eps
    if approx:                               # in-kernel path: EUP reciprocal
        return alpha * xc * pl.reciprocal(denom, approx=True) + bias
    return alpha * xc / denom + bias         # reference path (plain JAX)


# ---------------------------------- kernel ------------------------------------

def encoder_fused_kernel(tok_ref, embed_ref, pe_ref,
                         n1a_ref, n1b_ref, wqkv_ref, bqkv_ref, wo_ref, bo_ref,
                         n2a_ref, n2b_ref, w1_ref, b1_ref, w2_ref, b2_ref,
                         na_ref, nb_ref, out_ref,
                         *, n_layers, heads, seq, d_model, id_kind):
    """One grid step = one batch sample; activation slab is (S, D)."""
    dk = d_model // heads

    # ---- Embedding gather (one-hot combine on the VPU; exact select) ----
    tok = tok_ref[...]                                           # (S, 1) int32
    emb = embed_ref[...]                                         # (id_kind, D) f32
    x = jnp.zeros((seq, d_model), jnp.float32)
    for c in range(id_kind):                                     # static unroll (id_kind=3)
        x = x + jnp.where(tok == c, emb[c:c + 1, :], 0.0)

    # ---- PositionalEncoder: sqrt(d_model) * x + pe ----
    x = math.sqrt(d_model) * x + pe_ref[...]                     # (S, D) f32

    for n in range(n_layers):                                    # static unroll
        # ------------------- multi-head self-attention -------------------
        x2 = _norm(x, n1a_ref[n], n1b_ref[n], approx=True)
        # fused q/k/v projection; 1/sqrt(dk) already folded into wq/bq at pack time
        qkv = jnp.dot(x2.astype(jnp.bfloat16), wqkv_ref[n],
                      preferred_element_type=jnp.float32) + bqkv_ref[n]   # (S, 3D)

        # head-batched tensors (H, S, dk); slices are static & resolved at trace time
        qh = jnp.stack([qkv[:, h * dk:(h + 1) * dk]
                        for h in range(heads)], axis=0).astype(jnp.bfloat16)
        kh = jnp.stack([qkv[:, d_model + h * dk:d_model + (h + 1) * dk]
                        for h in range(heads)], axis=0).astype(jnp.bfloat16)
        vh = jnp.stack([qkv[:, 2 * d_model + h * dk:2 * d_model + (h + 1) * dk]
                        for h in range(heads)], axis=0).astype(jnp.bfloat16)

        # single head-batched score / softmax / context
        s = jnp.einsum('hqd,hkd->hqk', qh, kh,
                       preferred_element_type=jnp.float32)        # (H, S, S)
        s = s - jnp.max(s, axis=-1, keepdims=True)
        e = jnp.exp(s)
        p = e * pl.reciprocal(jnp.sum(e, axis=-1, keepdims=True), approx=True)
        ctx = jnp.einsum('hqk,hkd->hqd', p.astype(jnp.bfloat16), vh,
                         preferred_element_type=jnp.float32)      # (H, S, dk)

        # single output projection against the full wo
        concat = jnp.concatenate([ctx[h] for h in range(heads)], axis=-1)  # (S, D)
        attn = jnp.dot(concat.astype(jnp.bfloat16), wo_ref[n],
                       preferred_element_type=jnp.float32) + bo_ref[n]
        x = x + attn                                              # residual 1 (dropout=id)

        # --------------------------- feed-forward --------------------------
        x2 = _norm(x, n2a_ref[n], n2b_ref[n], approx=True)
        h1 = jnp.dot(x2.astype(jnp.bfloat16), w1_ref[n],
                     preferred_element_type=jnp.float32) + b1_ref[n]
        h1 = jnp.maximum(h1, 0.0)                                 # ReLU (dropout=id)
        ff = jnp.dot(h1.astype(jnp.bfloat16), w2_ref[n],
                     preferred_element_type=jnp.float32) + b2_ref[n]
        x = x + ff                                                # residual 2 (dropout=id)

    out_ref[...] = _norm(x, na_ref[...], nb_ref[...], approx=True)


# --------------------------- parameter packing (once) --------------------------

def pack_params(params, heads):
    """Pack/stack per-layer params once (outside the forward path).

    q/k/v fused into one (D, 3D) weight; the 1/sqrt(d_k) attention scale is
    folded into wq and bq; matmul weights stored in bf16 (f32 accumulation
    happens in-kernel), norms/biases stay f32.
    """
    layers = params["layers"]
    D = layers[0]["wq"].shape[0]
    dk = D // heads
    scale = 1.0 / math.sqrt(dk)

    def st(key, dtype=jnp.float32):
        return jnp.stack([lp[key] for lp in layers]).astype(dtype)

    wqkv = jnp.stack([jnp.concatenate([lp["wq"] * scale, lp["wk"], lp["wv"]], axis=1)
                      for lp in layers]).astype(jnp.bfloat16)             # (N, D, 3D)
    bqkv = jnp.stack([jnp.concatenate([lp["bq"] * scale, lp["bk"], lp["bv"]], axis=1)
                      for lp in layers])                                   # (N, 1, 3D)
    return dict(
        embed=params["embed"].astype(jnp.float32),                         # (id_kind, D)
        pe=params["pe"].astype(jnp.float32),                               # (S, D)
        n1a=st("n1a"), n1b=st("n1b"),
        wqkv=wqkv, bqkv=bqkv,
        wo=st("wo", jnp.bfloat16), bo=st("bo"),
        n2a=st("n2a"), n2b=st("n2b"),
        w1=st("w1", jnp.bfloat16), b1=st("b1"),
        w2=st("w2", jnp.bfloat16), b2=st("b2"),
        norm_a=params["norm_a"], norm_b=params["norm_b"],
    )


# ------------------------------- pallas wrapper --------------------------------

@functools.partial(jax.jit, static_argnames=("d_model", "heads", "id_kind"))
def encoder_forward(tokens, packed, *, d_model, heads, id_kind=3):
    B, S = tokens.shape
    N = packed["wqkv"].shape[0]
    assert packed["pe"].shape[0] == S, "seq must equal max_board_len (PyTorch PE broadcast)"

    tok = tokens.reshape(B * S, 1).astype(jnp.int32)

    args = (tok, packed["embed"], packed["pe"],
            packed["n1a"], packed["n1b"], packed["wqkv"], packed["bqkv"],
            packed["wo"], packed["bo"], packed["n2a"], packed["n2b"],
            packed["w1"], packed["b1"], packed["w2"], packed["b2"],
            packed["norm_a"], packed["norm_b"])

    def _full_spec(a):
        # whole array resident in VMEM; constant block index -> fetched once
        nd = a.ndim
        return pl.BlockSpec(a.shape, lambda b, _nd=nd: (0,) * _nd)

    in_specs = ([pl.BlockSpec((S, 1), lambda b: (b, 0))]          # per-sample tokens
                + [_full_spec(a) for a in args[1:]])

    out = pl.pallas_call(
        functools.partial(encoder_fused_kernel, n_layers=N, heads=heads,
                          seq=S, d_model=d_model, id_kind=id_kind),
        out_shape=jax.ShapeDtypeStruct((B * S, d_model), jnp.float32),
        grid=(B,),                                                 # one sample per step
        in_specs=in_specs,
        out_specs=pl.BlockSpec((S, d_model), lambda b: (b, 0)),
        compiler_params=pltpu.CompilerParams(
            dimension_semantics=("parallel",)),                    # 2nd TC on v7x
    )(*args)
    return out.reshape(B, S, d_model)


# ---------------------------- parameter construction ---------------------------

def make_pe_table(max_board_len, d_model):
    pe = np.zeros((max_board_len, d_model), dtype=np.float32)
    for pos in range(max_board_len):
        for i in range(0, d_model, 2):
            pe[pos, i] = math.sin(pos / 10000 ** (2 * i / d_model))
            pe[pos, i + 1] = math.cos(pos / 10000 ** (2 * i / d_model))
    return jnp.asarray(pe)                                                 # (S, D)


def init_params(key, d_model, d_ff, N, heads, id_kind=3, max_board_len=64):
    def linear(k, fan_in, fan_out):
        k1, k2 = jax.random.split(k)
        w = jax.random.normal(k1, (fan_in, fan_out), jnp.float32) / math.sqrt(fan_in)
        b = 0.01 * jax.random.normal(k2, (1, fan_out), jnp.float32)
        return w, b

    keys = jax.random.split(key, N + 1)
    params = {
        "embed": jax.random.normal(keys[0], (id_kind, d_model), jnp.float32),
        "pe": make_pe_table(max_board_len, d_model),
        "norm_a": jnp.ones((1, d_model), jnp.float32),
        "norm_b": jnp.zeros((1, d_model), jnp.float32),
        "layers": [],
    }
    for n in range(N):
        lk = jax.random.split(keys[n + 1], 6)
        wq, bq = linear(lk[0], d_model, d_model)
        wk, bk = linear(lk[1], d_model, d_model)
        wv, bv = linear(lk[2], d_model, d_model)
        wo, bo = linear(lk[3], d_model, d_model)
        w1, b1 = linear(lk[4], d_model, d_ff)
        w2, b2 = linear(lk[5], d_ff, d_model)
        params["layers"].append(dict(
            n1a=jnp.ones((1, d_model), jnp.float32), n1b=jnp.zeros((1, d_model), jnp.float32),
            wq=wq, bq=bq, wk=wk, bk=bk, wv=wv, bv=bv, wo=wo, bo=bo,
            n2a=jnp.ones((1, d_model), jnp.float32), n2b=jnp.zeros((1, d_model), jnp.float32),
            w1=w1, b1=b1, w2=w2, b2=b2,
        ))
    return params


# ------------------------------ pure-JAX reference ------------------------------

def reference_forward(tokens, params, *, d_model, heads):
    x = jnp.take(params["embed"], tokens, axis=0)
    x = math.sqrt(d_model) * x + params["pe"][None]
    d_k = d_model // heads
    B, S, _ = x.shape
    for lp in params["layers"]:
        x2 = _norm(x, lp["n1a"], lp["n1b"])
        q = x2 @ lp["wq"] + lp["bq"]
        k = x2 @ lp["wk"] + lp["bk"]
        v = x2 @ lp["wv"] + lp["bv"]
        qh = q.reshape(B, S, heads, d_k).transpose(0, 2, 1, 3)
        kh = k.reshape(B, S, heads, d_k).transpose(0, 2, 1, 3)
        vh = v.reshape(B, S, heads, d_k).transpose(0, 2, 1, 3)
        s = jnp.einsum("bhqd,bhkd->bhqk", qh, kh) / math.sqrt(d_k)
        p = jax.nn.softmax(s, axis=-1)
        o = jnp.einsum("bhqk,bhkd->bhqd", p, vh)
        concat = o.transpose(0, 2, 1, 3).reshape(B, S, d_model)
        x = x + (concat @ lp["wo"] + lp["bo"])
        x2 = _norm(x, lp["n2a"], lp["n2b"])
        ff = jnp.maximum(x2 @ lp["w1"] + lp["b1"], 0.0) @ lp["w2"] + lp["b2"]
        x = x + ff
    return _norm(x, params["norm_a"], params["norm_b"])


# ------------------------------------- main -------------------------------------

if __name__ == "__main__":
    # seq must equal max_board_len (=64): the PyTorch PE buffer broadcast requires it.
    B, S = 2, 64
    d_model, d_ff, N, heads = 32, 64, 2, 4

    key = jax.random.PRNGKey(0)
    k_param, k_tok = jax.random.split(key)
    params = init_params(k_param, d_model, d_ff, N, heads, max_board_len=S)
    tokens = jax.random.randint(k_tok, (B, S), 0, 3, dtype=jnp.int32)

    # Pack once (outside the forward path) -- review item 1.
    packed = pack_params(params, heads)

    out = encoder_forward(tokens, packed, d_model=d_model, heads=heads)
    out = jax.block_until_ready(out)

    ref = reference_forward(tokens, params, d_model=d_model, heads=heads)
    assert out.shape == (B, S, d_model)
    assert bool(jnp.all(jnp.isfinite(out)))
    # Kernel uses bf16 MXU inputs (incl. the scale folded into wq) with f32
    # accumulation; the reference is all-f32, so tolerance is set at bf16 level.
    assert bool(jnp.allclose(out, ref, rtol=4e-2, atol=4e-2)), "mismatch vs reference"

    print("KERNEL_OK")
</pallas_src>

<mosaic_0001>
module attributes {stable_mosaic.version = 11 : i64} {
  func.func @encoder_fused_kernel(%arg0: i32, %arg1: memref<64x1xi32, #tpu.memory_space<vmem>>, %arg2: memref<3x32xf32, #tpu.memory_space<vmem>>, %arg3: memref<64x32xf32, #tpu.memory_space<vmem>>, %arg4: memref<2x1x32xf32, #tpu.memory_space<vmem>>, %arg5: memref<2x1x32xf32, #tpu.memory_space<vmem>>, %arg6: memref<2x32x96xbf16, #tpu.memory_space<vmem>>, %arg7: memref<2x1x96xf32, #tpu.memory_space<vmem>>, %arg8: memref<2x32x32xbf16, #tpu.memory_space<vmem>>, %arg9: memref<2x1x32xf32, #tpu.memory_space<vmem>>, %arg10: memref<2x1x32xf32, #tpu.memory_space<vmem>>, %arg11: memref<2x1x32xf32, #tpu.memory_space<vmem>>, %arg12: memref<2x32x64xbf16, #tpu.memory_space<vmem>>, %arg13: memref<2x1x64xf32, #tpu.memory_space<vmem>>, %arg14: memref<2x64x32xbf16, #tpu.memory_space<vmem>>, %arg15: memref<2x1x32xf32, #tpu.memory_space<vmem>>, %arg16: memref<1x32xf32, #tpu.memory_space<vmem>>, %arg17: memref<1x32xf32, #tpu.memory_space<vmem>>, %arg18: memref<64x32xf32, #tpu.memory_space<vmem>>) attributes {dimension_semantics = [#tpu.dimension_semantics<parallel>], iteration_bounds = array<i64: 2>, scalar_prefetch = 0 : i64, scratch_operands = 0 : i64, tpu.core_type = #tpu.core_type<tc>, window_params = [{transform_indices = @transform_0, window_bounds = array<i64: 64, 1>}, {pipeline_mode = #tpu.pipeline_mode<synchronous>, transform_indices = @transform_1, window_bounds = array<i64: 3, 32>}, {pipeline_mode = #tpu.pipeline_mode<synchronous>, transform_indices = @transform_2, window_bounds = array<i64: 64, 32>}, {pipeline_mode = #tpu.pipeline_mode<synchronous>, transform_indices = @transform_3, window_bounds = array<i64: 2, 1, 32>}, {pipeline_mode = #tpu.pipeline_mode<synchronous>, transform_indices = @transform_4, window_bounds = array<i64: 2, 1, 32>}, {pipeline_mode = #tpu.pipeline_mode<synchronous>, transform_indices = @transform_5, window_bounds = array<i64: 2, 32, 96>}, {pipeline_mode = #tpu.pipeline_mode<synchronous>, transform_indices = @transform_6, window_bounds = array<i64: 2, 1, 96>}, {pipeline_mode = #tpu.pipeline_mode<synchronous>, transform_indices = @transform_7, window_bounds = array<i64: 2, 32, 32>}, {pipeline_mode = #tpu.pipeline_mode<synchronous>, transform_indices = @transform_8, window_bounds = array<i64: 2, 1, 32>}, {pipeline_mode = #tpu.pipeline_mode<synchronous>, transform_indices = @transform_9, window_bounds = array<i64: 2, 1, 32>}, {pipeline_mode = #tpu.pipeline_mode<synchronous>, transform_indices = @transform_10, window_bounds = array<i64: 2, 1, 32>}, {pipeline_mode = #tpu.pipeline_mode<synchronous>, transform_indices = @transform_11, window_bounds = array<i64: 2, 32, 64>}, {pipeline_mode = #tpu.pipeline_mode<synchronous>, transform_indices = @transform_12, window_bounds = array<i64: 2, 1, 64>}, {pipeline_mode = #tpu.pipeline_mode<synchronous>, transform_indices = @transform_13, window_bounds = array<i64: 2, 64, 32>}, {pipeline_mode = #tpu.pipeline_mode<synchronous>, transform_indices = @transform_14, window_bounds = array<i64: 2, 1, 32>}, {pipeline_mode = #tpu.pipeline_mode<synchronous>, transform_indices = @transform_15, window_bounds = array<i64: 1, 32>}, {pipeline_mode = #tpu.pipeline_mode<synchronous>, transform_indices = @transform_16, window_bounds = array<i64: 1, 32>}, {transform_indices = @transform_17, window_bounds = array<i64: 64, 32>}]} {
    %c0 = arith.constant 0 : index
    %c0_0 = arith.constant 0 : index
    %0 = vector.load %arg1[%c0, %c0_0] : memref<64x1xi32, #tpu.memory_space<vmem>>, vector<64x1xi32>
    %c0_1 = arith.constant 0 : index
    %c0_2 = arith.constant 0 : index
    %1 = vector.load %arg2[%c0_1, %c0_2] : memref<3x32xf32, #tpu.memory_space<vmem>>, vector<3x32xf32>
    %cst = arith.constant 0.000000e+00 : f32
    %2 = vector.broadcast %cst : f32 to vector<64x32xf32>
    %c0_i32 = arith.constant 0 : i32
    %3 = vector.broadcast %c0_i32 : i32 to vector<64x1xi32>
    %4 = arith.cmpi eq, %0, %3 : vector<64x1xi32>
    %5 = vector.extract_strided_slice %1 {offsets = [0, 0], sizes = [1, 32], strides = [1, 1]} : vector<3x32xf32> to vector<1x32xf32>
    %cst_3 = arith.constant 0.000000e+00 : f32
    %6 = vector.shape_cast %4 : vector<64x1xi1> to vector<64x1xi1>
    %7 = vector.broadcast %6 : vector<64x1xi1> to vector<64x32xi1>
    %8 = vector.shape_cast %5 : vector<1x32xf32> to vector<1x32xf32>
    %9 = vector.broadcast %8 : vector<1x32xf32> to vector<64x32xf32>
    %10 = vector.broadcast %cst_3 : f32 to vector<64x32xf32>
    %11 = arith.select %7, %9, %10 : vector<64x32xi1>, vector<64x32xf32>
    %12 = arith.addf %2, %11 : vector<64x32xf32>
    %c1_i32 = arith.constant 1 : i32
    %13 = vector.broadcast %c1_i32 : i32 to vector<64x1xi32>
    %14 = arith.cmpi eq, %0, %13 : vector<64x1xi32>
    %15 = vector.extract_strided_slice %1 {offsets = [1, 0], sizes = [1, 32], strides = [1, 1]} : vector<3x32xf32> to vector<1x32xf32>
    %cst_4 = arith.constant 0.000000e+00 : f32
    %16 = vector.shape_cast %14 : vector<64x1xi1> to vector<64x1xi1>
    %17 = vector.broadcast %16 : vector<64x1xi1> to vector<64x32xi1>
    %18 = vector.shape_cast %15 : vector<1x32xf32> to vector<1x32xf32>
    %19 = vector.broadcast %18 : vector<1x32xf32> to vector<64x32xf32>
    %20 = vector.broadcast %cst_4 : f32 to vector<64x32xf32>
    %21 = arith.select %17, %19, %20 : vector<64x32xi1>, vector<64x32xf32>
    %22 = arith.addf %12, %21 : vector<64x32xf32>
    %c2_i32 = arith.constant 2 : i32
    %23 = vector.broadcast %c2_i32 : i32 to vector<64x1xi32>
    %24 = arith.cmpi eq, %0, %23 : vector<64x1xi32>
    %25 = vector.extract_strided_slice %1 {offsets = [2, 0], sizes = [1, 32], strides = [1, 1]} : vector<3x32xf32> to vector<1x32xf32>
    %cst_5 = arith.constant 0.000000e+00 : f32
    %26 = vector.shape_cast %24 : vector<64x1xi1> to vector<64x1xi1>
    %27 = vector.broadcast %26 : vector<64x1xi1> to vector<64x32xi1>
    %28 = vector.shape_cast %25 : vector<1x32xf32> to vector<1x32xf32>
    %29 = vector.broadcast %28 : vector<1x32xf32> to vector<64x32xf32>
    %30 = vector.broadcast %cst_5 : f32 to vector<64x32xf32>
    %31 = arith.select %27, %29, %30 : vector<64x32xi1>, vector<64x32xf32>
    %32 = arith.addf %22, %31 : vector<64x32xf32>
    %cst_6 = arith.constant 5.65685415 : f32
    %33 = vector.broadcast %cst_6 : f32 to vector<64x32xf32>
    %34 = arith.mulf %33, %32 : vector<64x32xf32>
    %c0_7 = arith.constant 0 : index
    %c0_8 = arith.constant 0 : index
    %35 = vector.load %arg3[%c0_7, %c0_8] : memref<64x32xf32, #tpu.memory_space<vmem>>, vector<64x32xf32>
    %36 = arith.addf %34, %35 : vector<64x32xf32>
    %c0_9 = arith.constant 0 : index
    %c0_10 = arith.constant 0 : index
    %c0_11 = arith.constant 0 : index
    %37 = vector.load %arg4[%c0_9, %c0_10, %c0_11] : memref<2x1x32xf32, #tpu.memory_space<vmem>>, vector<1x1x32xf32>
    %38 = vector.shape_cast %37 : vector<1x1x32xf32> to vector<1x32xf32>
    %c0_12 = arith.constant 0 : index
    %c0_13 = arith.constant 0 : index
    %c0_14 = arith.constant 0 : index
    %39 = vector.load %arg5[%c0_12, %c0_13, %c0_14] : memref<2x1x32xf32, #tpu.memory_space<vmem>>, vector<1x1x32xf32>
    %40 = vector.shape_cast %39 : vector<1x1x32xf32> to vector<1x32xf32>
    %cst_15 = arith.constant dense<0.000000e+00> : vector<64xf32>
    %41 = vector.multi_reduction <add>, %36, %cst_15 [1] : vector<64x32xf32> to vector<64xf32>
    %42 = vector.shape_cast %41 : vector<64xf32> to vector<64x1xf32>
    %cst_16 = arith.constant 3.200000e+01 : f32
    %43 = vector.broadcast %cst_16 : f32 to vector<64x1xf32>
    %44 = arith.divf %42, %43 : vector<64x1xf32>
    %45 = vector.broadcast %44 : vector<64x1xf32> to vector<64x32xf32>
    %46 = arith.subf %36, %45 : vector<64x32xf32>
    %47 = arith.mulf %46, %46 : vector<64x32xf32>
    %cst_17 = arith.constant dense<0.000000e+00> : vector<64xf32>
    %48 = vector.multi_reduction <add>, %47, %cst_17 [1] : vector<64x32xf32> to vector<64xf32>
    %49 = vector.shape_cast %48 : vector<64xf32> to vector<64x1xf32>
    %cst_18 = arith.constant 3.100000e+01 : f32
    %50 = vector.broadcast %cst_18 : f32 to vector<64x1xf32>
    %51 = arith.divf %49, %50 : vector<64x1xf32>
    %52 = math.sqrt %51 : vector<64x1xf32>
    %cst_19 = arith.constant 9.99999997E-7 : f32
    %53 = vector.broadcast %cst_19 : f32 to vector<64x1xf32>
    %54 = arith.addf %52, %53 : vector<64x1xf32>
    %55 = vector.broadcast %38 : vector<1x32xf32> to vector<64x32xf32>
    %56 = arith.mulf %55, %46 : vector<64x32xf32>
    %57 = tpu.reciprocal %54 {approx = true} : vector<64x1xf32> -> vector<64x1xf32>
    %58 = vector.broadcast %57 : vector<64x1xf32> to vector<64x32xf32>
    %59 = arith.mulf %56, %58 : vector<64x32xf32>
    %60 = vector.broadcast %40 : vector<1x32xf32> to vector<64x32xf32>
    %61 = arith.addf %59, %60 : vector<64x32xf32>
    %62 = arith.truncf %61 : vector<64x32xf32> to vector<64x32xbf16>
    %c0_20 = arith.constant 0 : index
    %c0_21 = arith.constant 0 : index
    %c0_22 = arith.constant 0 : index
    %63 = vector.load %arg6[%c0_20, %c0_21, %c0_22] : memref<2x32x96xbf16, #tpu.memory_space<vmem>>, vector<1x32x96xbf16>
    %64 = vector.shape_cast %63 : vector<1x32x96xbf16> to vector<32x96xbf16>
    %cst_23 = arith.constant dense<0.000000e+00> : vector<64x96xf32>
    %65 = tpu.matmul %62, %64, %cst_23 {dimension_numbers = #tpu.dot_dimension_numbers<[1], [0], [0], [1], [0, 0, 1, 1], [], []>} : vector<64x32xbf16>, vector<32x96xbf16>, vector<64x96xf32> -> vector<64x96xf32>
    %c0_24 = arith.constant 0 : index
    %c0_25 = arith.constant 0 : index
    %c0_26 = arith.constant 0 : index
    %66 = vector.load %arg7[%c0_24, %c0_25, %c0_26] : memref<2x1x96xf32, #tpu.memory_space<vmem>>, vector<1x1x96xf32>
    %67 = vector.shape_cast %66 : vector<1x1x96xf32> to vector<1x96xf32>
    %68 = vector.broadcast %67 : vector<1x96xf32> to vector<64x96xf32>
    %69 = arith.addf %65, %68 : vector<64x96xf32>
    %70 = vector.extract_strided_slice %69 {offsets = [0, 0], sizes = [64, 8], strides = [1, 1]} : vector<64x96xf32> to vector<64x8xf32>
    %71 = vector.extract_strided_slice %69 {offsets = [0, 8], sizes = [64, 8], strides = [1, 1]} : vector<64x96xf32> to vector<64x8xf32>
    %72 = vector.extract_strided_slice %69 {offsets = [0, 16], sizes = [64, 8], strides = [1, 1]} : vector<64x96xf32> to vector<64x8xf32>
    %73 = vector.extract_strided_slice %69 {offsets = [0, 24], sizes = [64, 8], strides = [1, 1]} : vector<64x96xf32> to vector<64x8xf32>
    %74 = vector.shape_cast %70 : vector<64x8xf32> to vector<1x64x8xf32>
    %75 = vector.shape_cast %71 : vector<64x8xf32> to vector<1x64x8xf32>
    %76 = vector.shape_cast %72 : vector<64x8xf32> to vector<1x64x8xf32>
    %77 = vector.shape_cast %73 : vector<64x8xf32> to vector<1x64x8xf32>
    %78 = tpu.concatenate %74, %75, %76, %77 in 0 : vector<1x64x8xf32>, vector<1x64x8xf32>, vector<1x64x8xf32>, vector<1x64x8xf32> -> vector<4x64x8xf32>
    %79 = arith.truncf %78 : vector<4x64x8xf32> to vector<4x64x8xbf16>
    %80 = vector.extract_strided_slice %69 {offsets = [0, 32], sizes = [64, 8], strides = [1, 1]} : vector<64x96xf32> to vector<64x8xf32>
    %81 = vector.extract_strided_slice %69 {offsets = [0, 40], sizes = [64, 8], strides = [1, 1]} : vector<64x96xf32> to vector<64x8xf32>
    %82 = vector.extract_strided_slice %69 {offsets = [0, 48], sizes = [64, 8], strides = [1, 1]} : vector<64x96xf32> to vector<64x8xf32>
    %83 = vector.extract_strided_slice %69 {offsets = [0, 56], sizes = [64, 8], strides = [1, 1]} : vector<64x96xf32> to vector<64x8xf32>
    %84 = vector.shape_cast %80 : vector<64x8xf32> to vector<1x64x8xf32>
    %85 = vector.shape_cast %81 : vector<64x8xf32> to vector<1x64x8xf32>
    %86 = vector.shape_cast %82 : vector<64x8xf32> to vector<1x64x8xf32>
    %87 = vector.shape_cast %83 : vector<64x8xf32> to vector<1x64x8xf32>
    %88 = tpu.concatenate %84, %85, %86, %87 in 0 : vector<1x64x8xf32>, vector<1x64x8xf32>, vector<1x64x8xf32>, vector<1x64x8xf32> -> vector<4x64x8xf32>
    %89 = arith.truncf %88 : vector<4x64x8xf32> to vector<4x64x8xbf16>
    %90 = vector.extract_strided_slice %69 {offsets = [0, 64], sizes = [64, 8], strides = [1, 1]} : vector<64x96xf32> to vector<64x8xf32>
    %91 = vector.extract_strided_slice %69 {offsets = [0, 72], sizes = [64, 8], strides = [1, 1]} : vector<64x96xf32> to vector<64x8xf32>
    %92 = vector.extract_strided_slice %69 {offsets = [0, 80], sizes = [64, 8], strides = [1, 1]} : vector<64x96xf32> to vector<64x8xf32>
    %93 = vector.extract_strided_slice %69 {offsets = [0, 88], sizes = [64, 8], strides = [1, 1]} : vector<64x96xf32> to vector<64x8xf32>
    %94 = vector.shape_cast %90 : vector<64x8xf32> to vector<1x64x8xf32>
    %95 = vector.shape_cast %91 : vector<64x8xf32> to vector<1x64x8xf32>
    %96 = vector.shape_cast %92 : vector<64x8xf32> to vector<1x64x8xf32>
    %97 = vector.shape_cast %93 : vector<64x8xf32> to vector<1x64x8xf32>
    %98 = tpu.concatenate %94, %95, %96, %97 in 0 : vector<1x64x8xf32>, vector<1x64x8xf32>, vector<1x64x8xf32>, vector<1x64x8xf32> -> vector<4x64x8xf32>
    %99 = arith.truncf %98 : vector<4x64x8xf32> to vector<4x64x8xbf16>
    "tpu.trace_start"() <{level = 10 : i32, message = "hqd,hkd->hqk"}> : () -> ()
    %cst_27 = arith.constant dense<0.000000e+00> : vector<4x64x64xf32>
    %100 = tpu.matmul %79, %89, %cst_27 {dimension_numbers = #tpu.dot_dimension_numbers<[2], [2], [1], [1], [0, 0, 0, 1, 1, 1], [0], [0]>} : vector<4x64x8xbf16>, vector<4x64x8xbf16>, vector<4x64x64xf32> -> vector<4x64x64xf32>
    "tpu.trace_stop"() : () -> ()
    %cst_28 = arith.constant dense<0xFF800000> : vector<4x64xf32>
    %101 = vector.multi_reduction <maximumf>, %100, %cst_28 [2] : vector<4x64x64xf32> to vector<4x64xf32>
    %102 = vector.shape_cast %101 : vector<4x64xf32> to vector<4x64x1xf32>
    %103 = vector.broadcast %102 : vector<4x64x1xf32> to vector<4x64x64xf32>
    %104 = arith.subf %100, %103 : vector<4x64x64xf32>
    %105 = math.exp %104 : vector<4x64x64xf32>
    %cst_29 = arith.constant dense<0.000000e+00> : vector<4x64xf32>
    %106 = vector.multi_reduction <add>, %105, %cst_29 [2] : vector<4x64x64xf32> to vector<4x64xf32>
    %107 = vector.shape_cast %106 : vector<4x64xf32> to vector<4x64x1xf32>
    %108 = tpu.reciprocal %107 {approx = true} : vector<4x64x1xf32> -> vector<4x64x1xf32>
    %109 = vector.broadcast %108 : vector<4x64x1xf32> to vector<4x64x64xf32>
    %110 = arith.mulf %105, %109 : vector<4x64x64xf32>
    %111 = arith.truncf %110 : vector<4x64x64xf32> to vector<4x64x64xbf16>
    "tpu.trace_start"() <{level = 10 : i32, message = "hqk,hkd->hqd"}> : () -> ()
    %cst_30 = arith.constant dense<0.000000e+00> : vector<4x64x8xf32>
    %112 = tpu.matmul %111, %99, %cst_30 {dimension_numbers = #tpu.dot_dimension_numbers<[2], [1], [1], [2], [0, 0, 0, 1, 1, 2], [0], [0]>} : vector<4x64x64xbf16>, vector<4x64x8xbf16>, vector<4x64x8xf32> -> vector<4x64x8xf32>
    "tpu.trace_stop"() : () -> ()
    %113 = vector.extract_strided_slice %112 {offsets = [0, 0, 0], sizes = [1, 64, 8], strides = [1, 1, 1]} : vector<4x64x8xf32> to vector<1x64x8xf32>
    %114 = vector.shape_cast %113 : vector<1x64x8xf32> to vector<64x8xf32>
    %115 = vector.extract_strided_slice %112 {offsets = [1, 0, 0], sizes = [1, 64, 8], strides = [1, 1, 1]} : vector<4x64x8xf32> to vector<1x64x8xf32>
    %116 = vector.shape_cast %115 : vector<1x64x8xf32> to vector<64x8xf32>
    %117 = vector.extract_strided_slice %112 {offsets = [2, 0, 0], sizes = [1, 64, 8], strides = [1, 1, 1]} : vector<4x64x8xf32> to vector<1x64x8xf32>
    %118 = vector.shape_cast %117 : vector<1x64x8xf32> to vector<64x8xf32>
    %119 = vector.extract_strided_slice %112 {offsets = [3, 0, 0], sizes = [1, 64, 8], strides = [1, 1, 1]} : vector<4x64x8xf32> to vector<1x64x8xf32>
    %120 = vector.shape_cast %119 : vector<1x64x8xf32> to vector<64x8xf32>
    %121 = tpu.concatenate %114, %116, %118, %120 in 1 : vector<64x8xf32>, vector<64x8xf32>, vector<64x8xf32>, vector<64x8xf32> -> vector<64x32xf32>
    %122 = arith.truncf %121 : vector<64x32xf32> to vector<64x32xbf16>
    %c0_31 = arith.constant 0 : index
    %c0_32 = arith.constant 0 : index
    %c0_33 = arith.constant 0 : index
    %123 = vector.load %arg8[%c0_31, %c0_32, %c0_33] : memref<2x32x32xbf16, #tpu.memory_space<vmem>>, vector<1x32x32xbf16>
    %124 = vector.shape_cast %123 : vector<1x32x32xbf16> to vector<32x32xbf16>
    %cst_34 = arith.constant dense<0.000000e+00> : vector<64x32xf32>
    %125 = tpu.matmul %122, %124, %cst_34 {dimension_numbers = #tpu.dot_dimension_numbers<[1], [0], [0], [1], [0, 0, 1, 1], [], []>} : vector<64x32xbf16>, vector<32x32xbf16>, vector<64x32xf32> -> vector<64x32xf32>
    %c0_35 = arith.constant 0 : index
    %c0_36 = arith.constant 0 : index
    %c0_37 = arith.constant 0 : index
    %126 = vector.load %arg9[%c0_35, %c0_36, %c0_37] : memref<2x1x32xf32, #tpu.memory_space<vmem>>, vector<1x1x32xf32>
    %127 = vector.shape_cast %126 : vector<1x1x32xf32> to vector<1x32xf32>
    %128 = vector.broadcast %127 : vector<1x32xf32> to vector<64x32xf32>
    %129 = arith.addf %125, %128 : vector<64x32xf32>
    %130 = arith.addf %36, %129 : vector<64x32xf32>
    %c0_38 = arith.constant 0 : index
    %c0_39 = arith.constant 0 : index
    %c0_40 = arith.constant 0 : index
    %131 = vector.load %arg10[%c0_38, %c0_39, %c0_40] : memref<2x1x32xf32, #tpu.memory_space<vmem>>, vector<1x1x32xf32>
    %132 = vector.shape_cast %131 : vector<1x1x32xf32> to vector<1x32xf32>
    %c0_41 = arith.constant 0 : index
    %c0_42 = arith.constant 0 : index
    %c0_43 = arith.constant 0 : index
    %133 = vector.load %arg11[%c0_41, %c0_42, %c0_43] : memref<2x1x32xf32, #tpu.memory_space<vmem>>, vector<1x1x32xf32>
    %134 = vector.shape_cast %133 : vector<1x1x32xf32> to vector<1x32xf32>
    %cst_44 = arith.constant dense<0.000000e+00> : vector<64xf32>
    %135 = vector.multi_reduction <add>, %130, %cst_44 [1] : vector<64x32xf32> to vector<64xf32>
    %136 = vector.shape_cast %135 : vector<64xf32> to vector<64x1xf32>
    %cst_45 = arith.constant 3.200000e+01 : f32
    %137 = vector.broadcast %cst_45 : f32 to vector<64x1xf32>
    %138 = arith.divf %136, %137 : vector<64x1xf32>
    %139 = vector.broadcast %138 : vector<64x1xf32> to vector<64x32xf32>
    %140 = arith.subf %130, %139 : vector<64x32xf32>
    %141 = arith.mulf %140, %140 : vector<64x32xf32>
    %cst_46 = arith.constant dense<0.000000e+00> : vector<64xf32>
    %142 = vector.multi_reduction <add>, %141, %cst_46 [1] : vector<64x32xf32> to vector<64xf32>
    %143 = vector.shape_cast %142 : vector<64xf32> to vector<64x1xf32>
    %cst_47 = arith.constant 3.100000e+01 : f32
    %144 = vector.broadcast %cst_47 : f32 to vector<64x1xf32>
    %145 = arith.divf %143, %144 : vector<64x1xf32>
    %146 = math.sqrt %145 : vector<64x1xf32>
    %cst_48 = arith.constant 9.99999997E-7 : f32
    %147 = vector.broadcast %cst_48 : f32 to vector<64x1xf32>
    %148 = arith.addf %146, %147 : vector<64x1xf32>
    %149 = vector.broadcast %132 : vector<1x32xf32> to vector<64x32xf32>
    %150 = arith.mulf %149, %140 : vector<64x32xf32>
    %151 = tpu.reciprocal %148 {approx = true} : vector<64x1xf32> -> vector<64x1xf32>
    %152 = vector.broadcast %151 : vector<64x1xf32> to vector<64x32xf32>
    %153 = arith.mulf %150, %152 : vector<64x32xf32>
    %154 = vector.broadcast %134 : vector<1x32xf32> to vector<64x32xf32>
    %155 = arith.addf %153, %154 : vector<64x32xf32>
    %156 = arith.truncf %155 : vector<64x32xf32> to vector<64x32xbf16>
    %c0_49 = arith.constant 0 : index
    %c0_50 = arith.constant 0 : index
    %c0_51 = arith.constant 0 : index
    %157 = vector.load %arg12[%c0_49, %c0_50, %c0_51] : memref<2x32x64xbf16, #tpu.memory_space<vmem>>, vector<1x32x64xbf16>
    %158 = vector.shape_cast %157 : vector<1x32x64xbf16> to vector<32x64xbf16>
    %cst_52 = arith.constant dense<0.000000e+00> : vector<64x64xf32>
    %159 = tpu.matmul %156, %158, %cst_52 {dimension_numbers = #tpu.dot_dimension_numbers<[1], [0], [0], [1], [0, 0, 1, 1], [], []>} : vector<64x32xbf16>, vector<32x64xbf16>, vector<64x64xf32> -> vector<64x64xf32>
    %c0_53 = arith.constant 0 : index
    %c0_54 = arith.constant 0 : index
    %c0_55 = arith.constant 0 : index
    %160 = vector.load %arg13[%c0_53, %c0_54, %c0_55] : memref<2x1x64xf32, #tpu.memory_space<vmem>>, vector<1x1x64xf32>
    %161 = vector.shape_cast %160 : vector<1x1x64xf32> to vector<1x64xf32>
    %162 = vector.broadcast %161 : vector<1x64xf32> to vector<64x64xf32>
    %163 = arith.addf %159, %162 : vector<64x64xf32>
    %cst_56 = arith.constant 0.000000e+00 : f32
    %164 = vector.broadcast %cst_56 : f32 to vector<64x64xf32>
    %165 = arith.maximumf %163, %164 : vector<64x64xf32>
    %166 = arith.truncf %165 : vector<64x64xf32> to vector<64x64xbf16>
    %c0_57 = arith.constant 0 : index
    %c0_58 = arith.constant 0 : index
    %c0_59 = arith.constant 0 : index
    %167 = vector.load %arg14[%c0_57, %c0_58, %c0_59] : memref<2x64x32xbf16, #tpu.memory_space<vmem>>, vector<1x64x32xbf16>
    %168 = vector.shape_cast %167 : vector<1x64x32xbf16> to vector<64x32xbf16>
    %cst_60 = arith.constant dense<0.000000e+00> : vector<64x32xf32>
    %169 = tpu.matmul %166, %168, %cst_60 {dimension_numbers = #tpu.dot_dimension_numbers<[1], [0], [0], [1], [0, 0, 1, 1], [], []>} : vector<64x64xbf16>, vector<64x32xbf16>, vector<64x32xf32> -> vector<64x32xf32>
    %c0_61 = arith.constant 0 : index
    %c0_62 = arith.constant 0 : index
    %c0_63 = arith.constant 0 : index
    %170 = vector.load %arg15[%c0_61, %c0_62, %c0_63] : memref<2x1x32xf32, #tpu.memory_space<vmem>>, vector<1x1x32xf32>
    %171 = vector.shape_cast %170 : vector<1x1x32xf32> to vector<1x32xf32>
    %172 = vector.broadcast %171 : vector<1x32xf32> to vector<64x32xf32>
    %173 = arith.addf %169, %172 : vector<64x32xf32>
    %174 = arith.addf %130, %173 : vector<64x32xf32>
    %c1 = arith.constant 1 : index
    %c0_64 = arith.constant 0 : index
    %c0_65 = arith.constant 0 : index
    %175 = vector.load %arg4[%c1, %c0_64, %c0_65] : memref<2x1x32xf32, #tpu.memory_space<vmem>>, vector<1x1x32xf32>
    %176 = vector.shape_cast %175 : vector<1x1x32xf32> to vector<1x32xf32>
    %c1_66 = arith.constant 1 : index
    %c0_67 = arith.constant 0 : index
    %c0_68 = arith.constant 0 : index
    %177 = vector.load %arg5[%c1_66, %c0_67, %c0_68] : memref<2x1x32xf32, #tpu.memory_space<vmem>>, vector<1x1x32xf32>
    %178 = vector.shape_cast %177 : vector<1x1x32xf32> to vector<1x32xf32>
    %cst_69 = arith.constant dense<0.000000e+00> : vector<64xf32>
    %179 = vector.multi_reduction <add>, %174, %cst_69 [1] : vector<64x32xf32> to vector<64xf32>
    %180 = vector.shape_cast %179 : vector<64xf32> to vector<64x1xf32>
    %cst_70 = arith.constant 3.200000e+01 : f32
    %181 = vector.broadcast %cst_70 : f32 to vector<64x1xf32>
    %182 = arith.divf %180, %181 : vector<64x1xf32>
    %183 = vector.broadcast %182 : vector<64x1xf32> to vector<64x32xf32>
    %184 = arith.subf %174, %183 : vector<64x32xf32>
    %185 = arith.mulf %184, %184 : vector<64x32xf32>
    %cst_71 = arith.constant dense<0.000000e+00> : vector<64xf32>
    %186 = vector.multi_reduction <add>, %185, %cst_71 [1] : vector<64x32xf32> to vector<64xf32>
    %187 = vector.shape_cast %186 : vector<64xf32> to vector<64x1xf32>
    %cst_72 = arith.constant 3.100000e+01 : f32
    %188 = vector.broadcast %cst_72 : f32 to vector<64x1xf32>
    %189 = arith.divf %187, %188 : vector<64x1xf32>
    %190 = math.sqrt %189 : vector<64x1xf32>
    %cst_73 = arith.constant 9.99999997E-7 : f32
    %191 = vector.broadcast %cst_73 : f32 to vector<64x1xf32>
    %192 = arith.addf %190, %191 : vector<64x1xf32>
    %193 = vector.broadcast %176 : vector<1x32xf32> to vector<64x32xf32>
    %194 = arith.mulf %193, %184 : vector<64x32xf32>
    %195 = tpu.reciprocal %192 {approx = true} : vector<64x1xf32> -> vector<64x1xf32>
    %196 = vector.broadcast %195 : vector<64x1xf32> to vector<64x32xf32>
    %197 = arith.mulf %194, %196 : vector<64x32xf32>
    %198 = vector.broadcast %178 : vector<1x32xf32> to vector<64x32xf32>
    %199 = arith.addf %197, %198 : vector<64x32xf32>
    %200 = arith.truncf %199 : vector<64x32xf32> to vector<64x32xbf16>
    %c1_74 = arith.constant 1 : index
    %c0_75 = arith.constant 0 : index
    %c0_76 = arith.constant 0 : index
    %201 = vector.load %arg6[%c1_74, %c0_75, %c0_76] : memref<2x32x96xbf16, #tpu.memory_space<vmem>>, vector<1x32x96xbf16>
    %202 = vector.shape_cast %201 : vector<1x32x96xbf16> to vector<32x96xbf16>
    %cst_77 = arith.constant dense<0.000000e+00> : vector<64x96xf32>
    %203 = tpu.matmul %200, %202, %cst_77 {dimension_numbers = #tpu.dot_dimension_numbers<[1], [0], [0], [1], [0, 0, 1, 1], [], []>} : vector<64x32xbf16>, vector<32x96xbf16>, vector<64x96xf32> -> vector<64x96xf32>
    %c1_78 = arith.constant 1 : index
    %c0_79 = arith.constant 0 : index
    %c0_80 = arith.constant 0 : index
    %204 = vector.load %arg7[%c1_78, %c0_79, %c0_80] : memref<2x1x96xf32, #tpu.memory_space<vmem>>, vector<1x1x96xf32>
    %205 = vector.shape_cast %204 : vector<1x1x96xf32> to vector<1x96xf32>
    %206 = vector.broadcast %205 : vector<1x96xf32> to vector<64x96xf32>
    %207 = arith.addf %203, %206 : vector<64x96xf32>
    %208 = vector.extract_strided_slice %207 {offsets = [0, 0], sizes = [64, 8], strides = [1, 1]} : vector<64x96xf32> to vector<64x8xf32>
    %209 = vector.extract_strided_slice %207 {offsets = [0, 8], sizes = [64, 8], strides = [1, 1]} : vector<64x96xf32> to vector<64x8xf32>
    %210 = vector.extract_strided_slice %207 {offsets = [0, 16], sizes = [64, 8], strides = [1, 1]} : vector<64x96xf32> to vector<64x8xf32>
    %211 = vector.extract_strided_slice %207 {offsets = [0, 24], sizes = [64, 8], strides = [1, 1]} : vector<64x96xf32> to vector<64x8xf32>
    %212 = vector.shape_cast %208 : vector<64x8xf32> to vector<1x64x8xf32>
    %213 = vector.shape_cast %209 : vector<64x8xf32> to vector<1x64x8xf32>
    %214 = vector.shape_cast %210 : vector<64x8xf32> to vector<1x64x8xf32>
    %215 = vector.shape_cast %211 : vector<64x8xf32> to vector<1x64x8xf32>
    %216 = tpu.concatenate %212, %213, %214, %215 in 0 : vector<1x64x8xf32>, vector<1x64x8xf32>, vector<1x64x8xf32>, vector<1x64x8xf32> -> vector<4x64x8xf32>
    %217 = arith.truncf %216 : vector<4x64x8xf32> to vector<4x64x8xbf16>
    %218 = vector.extract_strided_slice %207 {offsets = [0, 32], sizes = [64, 8], strides = [1, 1]} : vector<64x96xf32> to vector<64x8xf32>
    %219 = vector.extract_strided_slice %207 {offsets = [0, 40], sizes = [64, 8], strides = [1, 1]} : vector<64x96xf32> to vector<64x8xf32>
    %220 = vector.extract_strided_slice %207 {offsets = [0, 48], sizes = [64, 8], strides = [1, 1]} : vector<64x96xf32> to vector<64x8xf32>
    %221 = vector.extract_strided_slice %207 {offsets = [0, 56], sizes = [64, 8], strides = [1, 1]} : vector<64x96xf32> to vector<64x8xf32>
    %222 = vector.shape_cast %218 : vector<64x8xf32> to vector<1x64x8xf32>
    %223 = vector.shape_cast %219 : vector<64x8xf32> to vector<1x64x8xf32>
    %224 = vector.shape_cast %220 : vector<64x8xf32> to vector<1x64x8xf32>
    %225 = vector.shape_cast %221 : vector<64x8xf32> to vector<1x64x8xf32>
    %226 = tpu.concatenate %222, %223, %224, %225 in 0 : vector<1x64x8xf32>, vector<1x64x8xf32>, vector<1x64x8xf32>, vector<1x64x8xf32> -> vector<4x64x8xf32>
    %227 = arith.truncf %226 : vector<4x64x8xf32> to vector<4x64x8xbf16>
    %228 = vector.extract_strided_slice %207 {offsets = [0, 64], sizes = [64, 8], strides = [1, 1]} : vector<64x96xf32> to vector<64x8xf32>
    %229 = vector.extract_strided_slice %207 {offsets = [0, 72], sizes = [64, 8], strides = [1, 1]} : vector<64x96xf32> to vector<64x8xf32>
    %230 = vector.extract_strided_slice %207 {offsets = [0, 80], sizes = [64, 8], strides = [1, 1]} : vector<64x96xf32> to vector<64x8xf32>
    %231 = vector.extract_strided_slice %207 {offsets = [0, 88], sizes = [64, 8], strides = [1, 1]} : vector<64x96xf32> to vector<64x8xf32>
    %232 = vector.shape_cast %228 : vector<64x8xf32> to vector<1x64x8xf32>
    %233 = vector.shape_cast %229 : vector<64x8xf32> to vector<1x64x8xf32>
    %234 = vector.shape_cast %230 : vector<64x8xf32> to vector<1x64x8xf32>
    %235 = vector.shape_cast %231 : vector<64x8xf32> to vector<1x64x8xf32>
    %236 = tpu.concatenate %232, %233, %234, %235 in 0 : vector<1x64x8xf32>, vector<1x64x8xf32>, vector<1x64x8xf32>, vector<1x64x8xf32> -> vector<4x64x8xf32>
    %237 = arith.truncf %236 : vector<4x64x8xf32> to vector<4x64x8xbf16>
    "tpu.trace_start"() <{level = 10 : i32, message = "hqd,hkd->hqk"}> : () -> ()
    %cst_81 = arith.constant dense<0.000000e+00> : vector<4x64x64xf32>
    %238 = tpu.matmul %217, %227, %cst_81 {dimension_numbers = #tpu.dot_dimension_numbers<[2], [2], [1], [1], [0, 0, 0, 1, 1, 1], [0], [0]>} : vector<4x64x8xbf16>, vector<4x64x8xbf16>, vector<4x64x64xf32> -> vector<4x64x64xf32>
    "tpu.trace_stop"() : () -> ()
    %cst_82 = arith.constant dense<0xFF800000> : vector<4x64xf32>
    %239 = vector.multi_reduction <maximumf>, %238, %cst_82 [2] : vector<4x64x64xf32> to vector<4x64xf32>
    %240 = vector.shape_cast %239 : vector<4x64xf32> to vector<4x64x1xf32>
    %241 = vector.broadcast %240 : vector<4x64x1xf32> to vector<4x64x64xf32>
    %242 = arith.subf %238, %241 : vector<4x64x64xf32>
    %243 = math.exp %242 : vector<4x64x64xf32>
    %cst_83 = arith.constant dense<0.000000e+00> : vector<4x64xf32>
    %244 = vector.multi_reduction <add>, %243, %cst_83 [2] : vector<4x64x64xf32> to vector<4x64xf32>
    %245 = vector.shape_cast %244 : vector<4x64xf32> to vector<4x64x1xf32>
    %246 = tpu.reciprocal %245 {approx = true} : vector<4x64x1xf32> -> vector<4x64x1xf32>
    %247 = vector.broadcast %246 : vector<4x64x1xf32> to vector<4x64x64xf32>
    %248 = arith.mulf %243, %247 : vector<4x64x64xf32>
    %249 = arith.truncf %248 : vector<4x64x64xf32> to vector<4x64x64xbf16>
    "tpu.trace_start"() <{level = 10 : i32, message = "hqk,hkd->hqd"}> : () -> ()
    %cst_84 = arith.constant dense<0.000000e+00> : vector<4x64x8xf32>
    %250 = tpu.matmul %249, %237, %cst_84 {dimension_numbers = #tpu.dot_dimension_numbers<[2], [1], [1], [2], [0, 0, 0, 1, 1, 2], [0], [0]>} : vector<4x64x64xbf16>, vector<4x64x8xbf16>, vector<4x64x8xf32> -> vector<4x64x8xf32>
    "tpu.trace_stop"() : () -> ()
    %251 = vector.extract_strided_slice %250 {offsets = [0, 0, 0], sizes = [1, 64, 8], strides = [1, 1, 1]} : vector<4x64x8xf32> to vector<1x64x8xf32>
    %252 = vector.shape_cast %251 : vector<1x64x8xf32> to vector<64x8xf32>
    %253 = vector.extract_strided_slice %250 {offsets = [1, 0, 0], sizes = [1, 64, 8], strides = [1, 1, 1]} : vector<4x64x8xf32> to vector<1x64x8xf32>
    %254 = vector.shape_cast %253 : vector<1x64x8xf32> to vector<64x8xf32>
    %255 = vector.extract_strided_slice %250 {offsets = [2, 0, 0], sizes = [1, 64, 8], strides = [1, 1, 1]} : vector<4x64x8xf32> to vector<1x64x8xf32>
    %256 = vector.shape_cast %255 : vector<1x64x8xf32> to vector<64x8xf32>
    %257 = vector.extract_strided_slice %250 {offsets = [3, 0, 0], sizes = [1, 64, 8], strides = [1, 1, 1]} : vector<4x64x8xf32> to vector<1x64x8xf32>
    %258 = vector.shape_cast %257 : vector<1x64x8xf32> to vector<64x8xf32>
    %259 = tpu.concatenate %252, %254, %256, %258 in 1 : vector<64x8xf32>, vector<64x8xf32>, vector<64x8xf32>, vector<64x8xf32> -> vector<64x32xf32>
    %260 = arith.truncf %259 : vector<64x32xf32> to vector<64x32xbf16>
    %c1_85 = arith.constant 1 : index
    %c0_86 = arith.constant 0 : index
    %c0_87 = arith.constant 0 : index
    %261 = vector.load %arg8[%c1_85, %c0_86, %c0_87] : memref<2x32x32xbf16, #tpu.memory_space<vmem>>, vector<1x32x32xbf16>
    %262 = vector.shape_cast %261 : vector<1x32x32xbf16> to vector<32x32xbf16>
    %cst_88 = arith.constant dense<0.000000e+00> : vector<64x32xf32>
    %263 = tpu.matmul %260, %262, %cst_88 {dimension_numbers = #tpu.dot_dimension_numbers<[1], [0], [0], [1], [0, 0, 1, 1], [], []>} : vector<64x32xbf16>, vector<32x32xbf16>, vector<64x32xf32> -> vector<64x32xf32>
    %c1_89 = arith.constant 1 : index
    %c0_90 = arith.constant 0 : index
    %c0_91 = arith.constant 0 : index
    %264 = vector.load %arg9[%c1_89, %c0_90, %c0_91] : memref<2x1x32xf32, #tpu.memory_space<vmem>>, vector<1x1x32xf32>
    %265 = vector.shape_cast %264 : vector<1x1x32xf32> to vector<1x32xf32>
    %266 = vector.broadcast %265 : vector<1x32xf32> to vector<64x32xf32>
    %267 = arith.addf %263, %266 : vector<64x32xf32>
    %268 = arith.addf %174, %267 : vector<64x32xf32>
    %c1_92 = arith.constant 1 : index
    %c0_93 = arith.constant 0 : index
    %c0_94 = arith.constant 0 : index
    %269 = vector.load %arg10[%c1_92, %c0_93, %c0_94] : memref<2x1x32xf32, #tpu.memory_space<vmem>>, vector<1x1x32xf32>
    %270 = vector.shape_cast %269 : vector<1x1x32xf32> to vector<1x32xf32>
    %c1_95 = arith.constant 1 : index
    %c0_96 = arith.constant 0 : index
    %c0_97 = arith.constant 0 : index
    %271 = vector.load %arg11[%c1_95, %c0_96, %c0_97] : memref<2x1x32xf32, #tpu.memory_space<vmem>>, vector<1x1x32xf32>
    %272 = vector.shape_cast %271 : vector<1x1x32xf32> to vector<1x32xf32>
    %cst_98 = arith.constant dense<0.000000e+00> : vector<64xf32>
    %273 = vector.multi_reduction <add>, %268, %cst_98 [1] : vector<64x32xf32> to vector<64xf32>
    %274 = vector.shape_cast %273 : vector<64xf32> to vector<64x1xf32>
    %cst_99 = arith.constant 3.200000e+01 : f32
    %275 = vector.broadcast %cst_99 : f32 to vector<64x1xf32>
    %276 = arith.divf %274, %275 : vector<64x1xf32>
    %277 = vector.broadcast %276 : vector<64x1xf32> to vector<64x32xf32>
    %278 = arith.subf %268, %277 : vector<64x32xf32>
    %279 = arith.mulf %278, %278 : vector<64x32xf32>
    %cst_100 = arith.constant dense<0.000000e+00> : vector<64xf32>
    %280 = vector.multi_reduction <add>, %279, %cst_100 [1] : vector<64x32xf32> to vector<64xf32>
    %281 = vector.shape_cast %280 : vector<64xf32> to vector<64x1xf32>
    %cst_101 = arith.constant 3.100000e+01 : f32
    %282 = vector.broadcast %cst_101 : f32 to vector<64x1xf32>
    %283 = arith.divf %281, %282 : vector<64x1xf32>
    %284 = math.sqrt %283 : vector<64x1xf32>
    %cst_102 = arith.constant 9.99999997E-7 : f32
    %285 = vector.broadcast %cst_102 : f32 to vector<64x1xf32>
    %286 = arith.addf %284, %285 : vector<64x1xf32>
    %287 = vector.broadcast %270 : vector<1x32xf32> to vector<64x32xf32>
    %288 = arith.mulf %287, %278 : vector<64x32xf32>
    %289 = tpu.reciprocal %286 {approx = true} : vector<64x1xf32> -> vector<64x1xf32>
    %290 = vector.broadcast %289 : vector<64x1xf32> to vector<64x32xf32>
    %291 = arith.mulf %288, %290 : vector<64x32xf32>
    %292 = vector.broadcast %272 : vector<1x32xf32> to vector<64x32xf32>
    %293 = arith.addf %291, %292 : vector<64x32xf32>
    %294 = arith.truncf %293 : vector<64x32xf32> to vector<64x32xbf16>
    %c1_103 = arith.constant 1 : index
    %c0_104 = arith.constant 0 : index
    %c0_105 = arith.constant 0 : index
    %295 = vector.load %arg12[%c1_103, %c0_104, %c0_105] : memref<2x32x64xbf16, #tpu.memory_space<vmem>>, vector<1x32x64xbf16>
    %296 = vector.shape_cast %295 : vector<1x32x64xbf16> to vector<32x64xbf16>
    %cst_106 = arith.constant dense<0.000000e+00> : vector<64x64xf32>
    %297 = tpu.matmul %294, %296, %cst_106 {dimension_numbers = #tpu.dot_dimension_numbers<[1], [0], [0], [1], [0, 0, 1, 1], [], []>} : vector<64x32xbf16>, vector<32x64xbf16>, vector<64x64xf32> -> vector<64x64xf32>
    %c1_107 = arith.constant 1 : index
    %c0_108 = arith.constant 0 : index
    %c0_109 = arith.constant 0 : index
    %298 = vector.load %arg13[%c1_107, %c0_108, %c0_109] : memref<2x1x64xf32, #tpu.memory_space<vmem>>, vector<1x1x64xf32>
    %299 = vector.shape_cast %298 : vector<1x1x64xf32> to vector<1x64xf32>
    %300 = vector.broadcast %299 : vector<1x64xf32> to vector<64x64xf32>
    %301 = arith.addf %297, %300 : vector<64x64xf32>
    %cst_110 = arith.constant 0.000000e+00 : f32
    %302 = vector.broadcast %cst_110 : f32 to vector<64x64xf32>
    %303 = arith.maximumf %301, %302 : vector<64x64xf32>
    %304 = arith.truncf %303 : vector<64x64xf32> to vector<64x64xbf16>
    %c1_111 = arith.constant 1 : index
    %c0_112 = arith.constant 0 : index
    %c0_113 = arith.constant 0 : index
    %305 = vector.load %arg14[%c1_111, %c0_112, %c0_113] : memref<2x64x32xbf16, #tpu.memory_space<vmem>>, vector<1x64x32xbf16>
    %306 = vector.shape_cast %305 : vector<1x64x32xbf16> to vector<64x32xbf16>
    %cst_114 = arith.constant dense<0.000000e+00> : vector<64x32xf32>
    %307 = tpu.matmul %304, %306, %cst_114 {dimension_numbers = #tpu.dot_dimension_numbers<[1], [0], [0], [1], [0, 0, 1, 1], [], []>} : vector<64x64xbf16>, vector<64x32xbf16>, vector<64x32xf32> -> vector<64x32xf32>
    %c1_115 = arith.constant 1 : index
    %c0_116 = arith.constant 0 : index
    %c0_117 = arith.constant 0 : index
    %308 = vector.load %arg15[%c1_115, %c0_116, %c0_117] : memref<2x1x32xf32, #tpu.memory_space<vmem>>, vector<1x1x32xf32>
    %309 = vector.shape_cast %308 : vector<1x1x32xf32> to vector<1x32xf32>
    %310 = vector.broadcast %309 : vector<1x32xf32> to vector<64x32xf32>
    %311 = arith.addf %307, %310 : vector<64x32xf32>
    %312 = arith.addf %268, %311 : vector<64x32xf32>
    %c0_118 = arith.constant 0 : index
    %c0_119 = arith.constant 0 : index
    %313 = vector.load %arg16[%c0_118, %c0_119] : memref<1x32xf32, #tpu.memory_space<vmem>>, vector<1x32xf32>
    %c0_120 = arith.constant 0 : index
    %c0_121 = arith.constant 0 : index
    %314 = vector.load %arg17[%c0_120, %c0_121] : memref<1x32xf32, #tpu.memory_space<vmem>>, vector<1x32xf32>
    %cst_122 = arith.constant dense<0.000000e+00> : vector<64xf32>
    %315 = vector.multi_reduction <add>, %312, %cst_122 [1] : vector<64x32xf32> to vector<64xf32>
    %316 = vector.shape_cast %315 : vector<64xf32> to vector<64x1xf32>
    %cst_123 = arith.constant 3.200000e+01 : f32
    %317 = vector.broadcast %cst_123 : f32 to vector<64x1xf32>
    %318 = arith.divf %316, %317 : vector<64x1xf32>
    %319 = vector.broadcast %318 : vector<64x1xf32> to vector<64x32xf32>
    %320 = arith.subf %312, %319 : vector<64x32xf32>
    %321 = arith.mulf %320, %320 : vector<64x32xf32>
    %cst_124 = arith.constant dense<0.000000e+00> : vector<64xf32>
    %322 = vector.multi_reduction <add>, %321, %cst_124 [1] : vector<64x32xf32> to vector<64xf32>
    %323 = vector.shape_cast %322 : vector<64xf32> to vector<64x1xf32>
    %cst_125 = arith.constant 3.100000e+01 : f32
    %324 = vector.broadcast %cst_125 : f32 to vector<64x1xf32>
    %325 = arith.divf %323, %324 : vector<64x1xf32>
    %326 = math.sqrt %325 : vector<64x1xf32>
    %cst_126 = arith.constant 9.99999997E-7 : f32
    %327 = vector.broadcast %cst_126 : f32 to vector<64x1xf32>
    %328 = arith.addf %326, %327 : vector<64x1xf32>
    %329 = vector.broadcast %313 : vector<1x32xf32> to vector<64x32xf32>
    %330 = arith.mulf %329, %320 : vector<64x32xf32>
    %331 = tpu.reciprocal %328 {approx = true} : vector<64x1xf32> -> vector<64x1xf32>
    %332 = vector.broadcast %331 : vector<64x1xf32> to vector<64x32xf32>
    %333 = arith.mulf %330, %332 : vector<64x32xf32>
    %334 = vector.broadcast %314 : vector<1x32xf32> to vector<64x32xf32>
    %335 = arith.addf %333, %334 : vector<64x32xf32>
    %c0_127 = arith.constant 0 : index
    %c0_128 = arith.constant 0 : index
    %336 = vector.load %arg18[%c0_127, %c0_128] : memref<64x32xf32, #tpu.memory_space<vmem>>, vector<64x32xf32>
    tpu.vector_store %arg18[%c0_127, %c0_128], %335 {strides = array<i32>} : memref<64x32xf32, #tpu.memory_space<vmem>>, vector<64x32xf32>,
    return
  }
  func.func @transform_0(%arg0: i32) -> (i32, i32) {
    %c0_i32 = arith.constant 0 : i32
    %c0_i32_0 = arith.constant 0 : i32
    return %arg0, %c0_i32 : i32, i32
  }
  func.func @transform_1(%arg0: i32) -> (i32, i32) {
    %c0_i32 = arith.constant 0 : i32
    %c0_i32_0 = arith.constant 0 : i32
    %c0_i32_1 = arith.constant 0 : i32
    return %c0_i32, %c0_i32_0 : i32, i32
  }
  func.func @transform_2(%arg0: i32) -> (i32, i32) {
    %c0_i32 = arith.constant 0 : i32
    %c0_i32_0 = arith.constant 0 : i32
    %c0_i32_1 = arith.constant 0 : i32
    return %c0_i32, %c0_i32_0 : i32, i32
  }
  func.func @transform_3(%arg0: i32) -> (i32, i32, i32) {
    %c0_i32 = arith.constant 0 : i32
    %c0_i32_0 = arith.constant 0 : i32
    %c0_i32_1 = arith.constant 0 : i32
    %c0_i32_2 = arith.constant 0 : i32
    return %c0_i32, %c0_i32_0, %c0_i32_1 : i32, i32, i32
  }
  func.func @transform_4(%arg0: i32) -> (i32, i32, i32) {
    %c0_i32 = arith.constant 0 : i32
    %c0_i32_0 = arith.constant 0 : i32
    %c0_i32_1 = arith.constant 0 : i32
    %c0_i32_2 = arith.constant 0 : i32
    return %c0_i32, %c0_i32_0, %c0_i32_1 : i32, i32, i32
  }
  func.func @transform_5(%arg0: i32) -> (i32, i32, i32) {
    %c0_i32 = arith.constant 0 : i32
    %c0_i32_0 = arith.constant 0 : i32
    %c0_i32_1 = arith.constant 0 : i32
    %c0_i32_2 = arith.constant 0 : i32
    return %c0_i32, %c0_i32_0, %c0_i32_1 : i32, i32, i32
  }
  func.func @transform_6(%arg0: i32) -> (i32, i32, i32) {
    %c0_i32 = arith.constant 0 : i32
    %c0_i32_0 = arith.constant 0 : i32
    %c0_i32_1 = arith.constant 0 : i32
    %c0_i32_2 = arith.constant 0 : i32
    return %c0_i32, %c0_i32_0, %c0_i32_1 : i32, i32, i32
  }
  func.func @transform_7(%arg0: i32) -> (i32, i32, i32) {
    %c0_i32 = arith.constant 0 : i32
    %c0_i32_0 = arith.constant 0 : i32
    %c0_i32_1 = arith.constant 0 : i32
    %c0_i32_2 = arith.constant 0 : i32
    return %c0_i32, %c0_i32_0, %c0_i32_1 : i32, i32, i32
  }
  func.func @transform_8(%arg0: i32) -> (i32, i32, i32) {
    %c0_i32 = arith.constant 0 : i32
    %c0_i32_0 = arith.constant 0 : i32
    %c0_i32_1 = arith.constant 0 : i32
    %c0_i32_2 = arith.constant 0 : i32
    return %c0_i32, %c0_i32_0, %c0_i32_1 : i32, i32, i32
  }
  func.func @transform_9(%arg0: i32) -> (i32, i32, i32) {
    %c0_i32 = arith.constant 0 : i32
    %c0_i32_0 = arith.constant 0 : i32
    %c0_i32_1 = arith.constant 0 : i32
    %c0_i32_2 = arith.constant 0 : i32
    return %c0_i32, %c0_i32_0, %c0_i32_1 : i32, i32, i32
  }
  func.func @transform_10(%arg0: i32) -> (i32, i32, i32) {
    %c0_i32 = arith.constant 0 : i32
    %c0_i32_0 = arith.constant 0 : i32
    %c0_i32_1 = arith.constant 0 : i32
    %c0_i32_2 = arith.constant 0 : i32
    return %c0_i32, %c0_i32_0, %c0_i32_1 : i32, i32, i32
  }
  func.func @transform_11(%arg0: i32) -> (i32, i32, i32) {
    %c0_i32 = arith.constant 0 : i32
    %c0_i32_0 = arith.constant 0 : i32
    %c0_i32_1 = arith.constant 0 : i32
    %c0_i32_2 = arith.constant 0 : i32
    return %c0_i32, %c0_i32_0, %c0_i32_1 : i32, i32, i32
  }
  func.func @transform_12(%arg0: i32) -> (i32, i32, i32) {
    %c0_i32 = arith.constant 0 : i32
    %c0_i32_0 = arith.constant 0 : i32
    %c0_i32_1 = arith.constant 0 : i32
    %c0_i32_2 = arith.constant 0 : i32
    return %c0_i32, %c0_i32_0, %c0_i32_1 : i32, i32, i32
  }
  func.func @transform_13(%arg0: i32) -> (i32, i32, i32) {
    %c0_i32 = arith.constant 0 : i32
    %c0_i32_0 = arith.constant 0 : i32
    %c0_i32_1 = arith.constant 0 : i32
    %c0_i32_2 = arith.constant 0 : i32
    return %c0_i32, %c0_i32_0, %c0_i32_1 : i32, i32, i32
  }
  func.func @transform_14(%arg0: i32) -> (i32, i32, i32) {
    %c0_i32 = arith.constant 0 : i32
    %c0_i32_0 = arith.constant 0 : i32
    %c0_i32_1 = arith.constant 0 : i32
    %c0_i32_2 = arith.constant 0 : i32
    return %c0_i32, %c0_i32_0, %c0_i32_1 : i32, i32, i32
  }
  func.func @transform_15(%arg0: i32) -> (i32, i32) {
    %c0_i32 = arith.constant 0 : i32
    %c0_i32_0 = arith.constant 0 : i32
    %c0_i32_1 = arith.constant 0 : i32
    return %c0_i32, %c0_i32_0 : i32, i32
  }
  func.func @transform_16(%arg0: i32) -> (i32, i32) {
    %c0_i32 = arith.constant 0 : i32
    %c0_i32_0 = arith.constant 0 : i32
    %c0_i32_1 = arith.constant 0 : i32
    return %c0_i32, %c0_i32_0 : i32, i32
  }
  func.func @transform_17(%arg0: i32) -> (i32, i32) {
    %c0_i32 = arith.constant 0 : i32
    %c0_i32_0 = arith.constant 0 : i32
    return %arg0, %c0_i32 : i32, i32
  }
}

</mosaic_0001>

<llo_original>
// kernel: encoder_forward.1
$region0: #{encoder_forward.1}
  #allocation0 [shape = 'u32[]', space=smem, size = 0x4, offset = 0x4, fixed_abs, tag = 'smem constant byte address 0x4 - core index']
  #allocation1 [shape = 'u32[144,128]{1,0:T(1,128)}', space=vmem, size = 0x12000, scoped, tag = 'internal scratch']
  %s0 = inlined_call_operand.vmem [shape: s32[128,1], index: 0, kind: input, shape index: {}]
  %s1 = inlined_call_operand.vmem [shape: f32[3,32], index: 1, kind: input, shape index: {}]
  %s2 = inlined_call_operand.vmem [shape: f32[64,32], index: 2, kind: input, shape index: {}]
  %s3 = inlined_call_operand.vmem [shape: f32[2,1,32], index: 3, kind: input, shape index: {}]
  %s4 = inlined_call_operand.vmem [shape: f32[2,1,32], index: 4, kind: input, shape index: {}]
  %s5 = inlined_call_operand.vmem [shape: bf16[2,32,96], index: 5, kind: input, shape index: {}]
  %s6 = inlined_call_operand.vmem [shape: f32[2,1,96], index: 6, kind: input, shape index: {}]
  %s7 = inlined_call_operand.vmem [shape: bf16[2,32,32], index: 7, kind: input, shape index: {}]
  %s8 = inlined_call_operand.vmem [shape: f32[2,1,32], index: 8, kind: input, shape index: {}]
  %s9 = inlined_call_operand.vmem [shape: f32[2,1,32], index: 9, kind: input, shape index: {}]
  %s10 = inlined_call_operand.vmem [shape: f32[2,1,32], index: 10, kind: input, shape index: {}]
  %s11 = inlined_call_operand.vmem [shape: bf16[2,32,64], index: 11, kind: input, shape index: {}]
  %s12 = inlined_call_operand.vmem [shape: f32[2,1,64], index: 12, kind: input, shape index: {}]
  %s13 = inlined_call_operand.vmem [shape: bf16[2,64,32], index: 13, kind: input, shape index: {}]
  %s14 = inlined_call_operand.vmem [shape: f32[2,1,32], index: 14, kind: input, shape index: {}]
  %s15 = inlined_call_operand.vmem [shape: f32[1,32], index: 15, kind: input, shape index: {}]
  %s16 = inlined_call_operand.vmem [shape: f32[1,32], index: 16, kind: input, shape index: {}]
  %s17 = inlined_call_operand.vmem [shape: f32[128,32], index: 17, kind: output, shape index: {}]
  %s18 = sld [smem:[#allocation0]]
  $region101: #{encoder_forward.1} parent=0
    _
  %s20 = ssub.s32 1, %s18
  %s21 = scalar_select 0, %s20, %s18
  loop: start=0, step=1, limit=4
  $region2: #{encoder_forward.1} parent=0 // loop_pre_header
    _
  $region3: #{encoder_forward.1} parent=0 // loop_header
    %s23 = sphi 0, %s27
    %p24 = scmp.ge.s32.totalorder %s23, 4
    %s33 = sphi 0, %s35
    %s36 = sphi 0, %s33
    %s37 = sphi 0, %s36
    %s53 = sphi 0, %s37
    %s57 = sphi 0, %s57
    %s59 = sphi 0, %s57
    %s60 = sphi 0, %s59
    %s74 = sphi 0, %s60
    %s78 = sphi 0, %s78
    %s80 = sphi 0, %s78
    %s81 = sphi 0, %s80
    %s95 = sphi 0, %s81
    %s99 = sphi 0, %s99
    %s101 = sphi 0, %s99
    %s102 = sphi 0, %s101
    %s116 = sphi 0, %s102
    %s120 = sphi 0, %s120
    %s122 = sphi 0, %s120
    %s123 = sphi 0, %s122
    %s137 = sphi 0, %s123
    %s141 = sphi 0, %s141
    %s143 = sphi 0, %s141
    %s144 = sphi 0, %s143
    %s158 = sphi 0, %s144
    %s162 = sphi 0, %s162
    %s164 = sphi 0, %s162
    %s165 = sphi 0, %s164
    %s179 = sphi 0, %s165
    %s183 = sphi 0, %s183
    %s185 = sphi 0, %s183
    %s186 = sphi 0, %s185
    %s200 = sphi 0, %s186
    %s204 = sphi 0, %s204
    %s206 = sphi 0, %s204
    %s207 = sphi 0, %s206
    %s221 = sphi 0, %s207
    %s225 = sphi 0, %s225
    %s227 = sphi 0, %s225
    %s228 = sphi 0, %s227
    %s242 = sphi 0, %s228
    %s246 = sphi 0, %s246
    %s248 = sphi 0, %s246
    %s249 = sphi 0, %s248
    %s263 = sphi 0, %s249
    %s267 = sphi 0, %s267
    %s269 = sphi 0, %s267
    %s270 = sphi 0, %s269
    %s284 = sphi 0, %s270
    %s288 = sphi 0, %s288
    %s290 = sphi 0, %s288
    %s291 = sphi 0, %s290
    %s305 = sphi 0, %s291
    %s309 = sphi 0, %s309
    %s311 = sphi 0, %s309
    %s312 = sphi 0, %s311
    %s326 = sphi 0, %s312
    %s330 = sphi 0, %s330
    %s332 = sphi 0, %s330
    %s333 = sphi 0, %s332
    %s347 = sphi 0, %s333
    %s351 = sphi 0, %s351
    %s353 = sphi 0, %s351
    %s354 = sphi 0, %s353
    %s368 = sphi 0, %s354
    %s372 = sphi 0, %s372
    %s374 = sphi 0, %s372
    %s375 = sphi 0, %s374
    %s389 = sphi 0, %s375
    %s395 = sphi 0, %s397
    %s398 = sphi 0, %s395
    %s399 = sphi 0, %s398
    %s415 = sphi 0, %s399
  $region4: #{encoder_forward.1} parent=0 // loop_header_branch
    %26 = sbr.rel (%p24) target = $region8
  $region5: #{encoder_forward.1} parent=0 // loop_body
    %s28 = ssub.s32 %s23, 1
    %s29 = ssub.s32 %s23, 2
    %s30 = sadd.s32 %s23, 1
    %s31 = ssub.s32 %s23, %s30
    %p32 = scmp.eq.s32.totalorder %s31, 0
    %s34 = sadd.s32 %s33, 1
    %s35 = scalar_select %p32, %s33, %s34
    %p38 = pneg %p32
    %p39 = scmp.eq.s32.totalorder %s23, 1
    %p40 = por %p38, %p39
    %p41 = scmp.ne.s32.totalorder %s33, %s36
    %p42 = scmp.eq.s32.totalorder %s23, 0
    %p43 = por %p41, %p42
    %p44 = scmp.ne.s32.totalorder %s33, %s36
    %p45 = scmp.eq.s32.totalorder %s28, 1
    %p46 = por %p44, %p45
    %p47 = scmp.ne.s32.totalorder %s36, %s37
    %p48 = scmp.eq.s32.totalorder %s28, 0
    %p49 = por %p47, %p48
    %p50 = scmp.ne.s32.totalorder %s36, %s37
    %p51 = scmp.eq.s32.totalorder %s29, 1
    %p52 = por %p50, %p51
    %p54 = scmp.ne.s32.totalorder %s37, %s53
    %p55 = scmp.eq.s32.totalorder %s29, 0
    %p56 = por %p54, %p55
    %s58 = sadd.s32 %s57, 1
    %p61 = scmp.eq.s32.totalorder %s23, 1
    %p62 = scmp.ne.s32.totalorder %s57, %s59
    %p63 = scmp.eq.s32.totalorder %s23, 0
    %p64 = por %p62, %p63
    %p65 = scmp.ne.s32.totalorder %s57, %s59
    %p66 = scmp.eq.s32.totalorder %s28, 1
    %p67 = por %p65, %p66
    %p68 = scmp.ne.s32.totalorder %s59, %s60
    %p69 = scmp.eq.s32.totalorder %s28, 0
    %p70 = por %p68, %p69
    %p71 = scmp.ne.s32.totalorder %s59, %s60
    %p72 = scmp.eq.s32.totalorder %s29, 1
    %p73 = por %p71, %p72
    %p75 = scmp.ne.s32.totalorder %s60, %s74
    %p76 = scmp.eq.s32.totalorder %s29, 0
    %p77 = por %p75, %p76
    %s79 = sadd.s32 %s78, 1
    %p82 = scmp.eq.s32.totalorder %s23, 1
    %p83 = scmp.ne.s32.totalorder %s78, %s80
    %p84 = scmp.eq.s32.totalorder %s23, 0
    %p85 = por %p83, %p84
    %p86 = scmp.ne.s32.totalorder %s78, %s80
    %p87 = scmp.eq.s32.totalorder %s28, 1
    %p88 = por %p86, %p87
    %p89 = scmp.ne.s32.totalorder %s80, %s81
    %p90 = scmp.eq.s32.totalorder %s28, 0
    %p91 = por %p89, %p90
    %p92 = scmp.ne.s32.totalorder %s80, %s81
    %p93 = scmp.eq.s32.totalorder %s29, 1
    %p94 = por %p92, %p93
    %p96 = scmp.ne.s32.totalorder %s81, %s95
    %p97 = scmp.eq.s32.totalorder %s29, 0
    %p98 = por %p96, %p97
    %s100 = sadd.s32 %s99, 1
    %p103 = scmp.eq.s32.totalorder %s23, 1
    %p104 = scmp.ne.s32.totalorder %s99, %s101
    %p105 = scmp.eq.s32.totalorder %s23, 0
    %p106 = por %p104, %p105
    %p107 = scmp.ne.s32.totalorder %s99, %s101
    %p108 = scmp.eq.s32.totalorder %s28, 1
    %p109 = por %p107, %p108
    %p110 = scmp.ne.s32.totalorder %s101, %s102
    %p111 = scmp.eq.s32.totalorder %s28, 0
    %p112 = por %p110, %p111
    %p113 = scmp.ne.s32.totalorder %s101, %s102
    %p114 = scmp.eq.s32.totalorder %s29, 1
    %p115 = por %p113, %p114
    %p117 = scmp.ne.s32.totalorder %s102, %s116
    %p118 = scmp.eq.s32.totalorder %s29, 0
    %p119 = por %p117, %p118
    %s121 = sadd.s32 %s120, 1
    %p124 = scmp.eq.s32.totalorder %s23, 1
    %p125 = scmp.ne.s32.totalorder %s120, %s122
    %p126 = scmp.eq.s32.totalorder %s23, 0
    %p127 = por %p125, %p126
    %p128 = scmp.ne.s32.totalorder %s120, %s122
    %p129 = scmp.eq.s32.totalorder %s28, 1
    %p130 = por %p128, %p129
    %p131 = scmp.ne.s32.totalorder %s122, %s123
    %p132 = scmp.eq.s32.totalorder %s28, 0
    %p133 = por %p131, %p132
    %p134 = scmp.ne.s32.totalorder %s122, %s123
    %p135 = scmp.eq.s32.totalorder %s29, 1
    %p136 = por %p134, %p135
    %p138 = scmp.ne.s32.totalorder %s123, %s137
    %p139 = scmp.eq.s32.totalorder %s29, 0
    %p140 = por %p138, %p139
    %s142 = sadd.s32 %s141, 1
    %p145 = scmp.eq.s32.totalorder %s23, 1
    %p146 = scmp.ne.s32.totalorder %s141, %s143
    %p147 = scmp.eq.s32.totalorder %s23, 0
    %p148 = por %p146, %p147
    %p149 = scmp.ne.s32.totalorder %s141, %s143
    %p150 = scmp.eq.s32.totalorder %s28, 1
    %p151 = por %p149, %p150
    %p152 = scmp.ne.s32.totalorder %s143, %s144
    %p153 = scmp.eq.s32.totalorder %s28, 0
    %p154 = por %p152, %p153
    %p155 = scmp.ne.s32.totalorder %s143, %s144
    %p156 = scmp.eq.s32.totalorder %s29, 1
    %p157 = por %p155, %p156
    %p159 = scmp.ne.s32.totalorder %s144, %s158
    %p160 = scmp.eq.s32.totalorder %s29, 0
    %p161 = por %p159, %p160
    %s163 = sadd.s32 %s162, 1
    %p166 = scmp.eq.s32.totalorder %s23, 1
    %p167 = scmp.ne.s32.totalorder %s162, %s164
    %p168 = scmp.eq.s32.totalorder %s23, 0
    %p169 = por %p167, %p168
    %p170 = scmp.ne.s32.totalorder %s162, %s164
    %p171 = scmp.eq.s32.totalorder %s28, 1
    %p172 = por %p170, %p171
    %p173 = scmp.ne.s32.totalorder %s164, %s165
    %p174 = scmp.eq.s32.totalorder %s28, 0
    %p175 = por %p173, %p174
    %p176 = scmp.ne.s32.totalorder %s164, %s165
    %p177 = scmp.eq.s32.totalorder %s29, 1
    %p178 = por %p176, %p177
    %p180 = scmp.ne.s32.totalorder %s165, %s179
    %p181 = scmp.eq.s32.totalorder %s29, 0
    %p182 = por %p180, %p181
    %s184 = sadd.s32 %s183, 1
    %p187 = scmp.eq.s32.totalorder %s23, 1
    %p188 = scmp.ne.s32.totalorder %s183, %s185
    %p189 = scmp.eq.s32.totalorder %s23, 0
    %p190 = por %p188, %p189
    %p191 = scmp.ne.s32.totalorder %s183, %s185
    %p192 = scmp.eq.s32.totalorder %s28, 1
    %p193 = por %p191, %p192
    %p194 = scmp.ne.s32.totalorder %s185, %s186
    %p195 = scmp.eq.s32.totalorder %s28, 0
    %p196 = por %p194, %p195
    %p197 = scmp.ne.s32.totalorder %s185, %s186
    %p198 = scmp.eq.s32.totalorder %s29, 1
    %p199 = por %p197, %p198
    %p201 = scmp.ne.s32.totalorder %s186, %s200
    %p202 = scmp.eq.s32.totalorder %s29, 0
    %p203 = por %p201, %p202
    %s205 = sadd.s32 %s204, 1
    %p208 = scmp.eq.s32.totalorder %s23, 1
    %p209 = scmp.ne.s32.totalorder %s204, %s206
    %p210 = scmp.eq.s32.totalorder %s23, 0
    %p211 = por %p209, %p210
    %p212 = scmp.ne.s32.totalorder %s204, %s206
    %p213 = scmp.eq.s32.totalorder %s28, 1
    %p214 = por %p212, %p213
    %p215 = scmp.ne.s32.totalorder %s206, %s207
    %p216 = scmp.eq.s32.totalorder %s28, 0
    %p217 = por %p215, %p216
    %p218 = scmp.ne.s32.totalorder %s206, %s207
    %p219 = scmp.eq.s32.totalorder %s29, 1
    %p220 = por %p218, %p219
    %p222 = scmp.ne.s32.totalorder %s207, %s221
    %p223 = scmp.eq.s32.totalorder %s29, 0
    %p224 = por %p222, %p223
    %s226 = sadd.s32 %s225, 1
    %p229 = scmp.eq.s32.totalorder %s23, 1
    %p230 = scmp.ne.s32.totalorder %s225, %s227
    %p231 = scmp.eq.s32.totalorder %s23, 0
    %p232 = por %p230, %p231
    %p233 = scmp.ne.s32.totalorder %s225, %s227
    %p234 = scmp.eq.s32.totalorder %s28, 1
    %p235 = por %p233, %p234
    %p236 = scmp.ne.s32.totalorder %s227, %s228
    %p237 = scmp.eq.s32.totalorder %s28, 0
    %p238 = por %p236, %p237
    %p239 = scmp.ne.s32.totalorder %s227, %s228
    %p240 = scmp.eq.s32.totalorder %s29, 1
    %p241 = por %p239, %p240
    %p243 = scmp.ne.s32.totalorder %s228, %s242
    %p244 = scmp.eq.s32.totalorder %s29, 0
    %p245 = por %p243, %p244
    %s247 = sadd.s32 %s246, 1
    %p250 = scmp.eq.s32.totalorder %s23, 1
    %p251 = scmp.ne.s32.totalorder %s246, %s248
    %p252 = scmp.eq.s32.totalorder %s23, 0
    %p253 = por %p251, %p252
    %p254 = scmp.ne.s32.totalorder %s246, %s248
    %p255 = scmp.eq.s32.totalorder %s28, 1
    %p256 = por %p254, %p255
    %p257 = scmp.ne.s32.totalorder %s248, %s249
    %p258 = scmp.eq.s32.totalorder %s28, 0
    %p259 = por %p257, %p258
    %p260 = scmp.ne.s32.totalorder %s248, %s249
    %p261 = scmp.eq.s32.totalorder %s29, 1
    %p262 = por %p260, %p261
    %p264 = scmp.ne.s32.totalorder %s249, %s263
    %p265 = scmp.eq.s32.totalorder %s29, 0
    %p266 = por %p264, %p265
    %s268 = sadd.s32 %s267, 1
    %p271 = scmp.eq.s32.totalorder %s23, 1
    %p272 = scmp.ne.s32.totalorder %s267, %s269
    %p273 = scmp.eq.s32.totalorder %s23, 0
    %p274 = por %p272, %p273
    %p275 = scmp.ne.s32.totalorder %s267, %s269
    %p276 = scmp.eq.s32.totalorder %s28, 1
    %p277 = por %p275, %p276
    %p278 = scmp.ne.s32.totalorder %s269, %s270
    %p279 = scmp.eq.s32.totalorder %s28, 0
    %p280 = por %p278, %p279
    %p281 = scmp.ne.s32.totalorder %s269, %s270
    %p282 = scmp.eq.s32.totalorder %s29, 1
    %p283 = por %p281, %p282
    %p285 = scmp.ne.s32.totalorder %s270, %s284
    %p286 = scmp.eq.s32.totalorder %s29, 0
    %p287 = por %p285, %p286
    %s289 = sadd.s32 %s288, 1
    %p292 = scmp.eq.s32.totalorder %s23, 1
    %p293 = scmp.ne.s32.totalorder %s288, %s290
    %p294 = scmp.eq.s32.totalorder %s23, 0
    %p295 = por %p293, %p294
    %p296 = scmp.ne.s32.totalorder %s288, %s290
    %p297 = scmp.eq.s32.totalorder %s28, 1
    %p298 = por %p296, %p297
    %p299 = scmp.ne.s32.totalorder %s290, %s291
    %p300 = scmp.eq.s32.totalorder %s28, 0
    %p301 = por %p299, %p300
    %p302 = scmp.ne.s32.totalorder %s290, %s291
    %p303 = scmp.eq.s32.totalorder %s29, 1
    %p304 = por %p302, %p303
    %p306 = scmp.ne.s32.totalorder %s291, %s305
    %p307 = scmp.eq.s32.totalorder %s29, 0
    %p308 = por %p306, %p307
    %s310 = sadd.s32 %s309, 1
    %p313 = scmp.eq.s32.totalorder %s23, 1
    %p314 = scmp.ne.s32.totalorder %s309, %s311
    %p315 = scmp.eq.s32.totalorder %s23, 0
    %p316 = por %p314, %p315
    %p317 = scmp.ne.s32.totalorder %s309, %s311
    %p318 = scmp.eq.s32.totalorder %s28, 1
    %p319 = por %p317, %p318
    %p320 = scmp.ne.s32.totalorder %s311, %s312
    %p321 = scmp.eq.s32.totalorder %s28, 0
    %p322 = por %p320, %p321
    %p323 = scmp.ne.s32.totalorder %s311, %s312
    %p324 = scmp.eq.s32.totalorder %s29, 1
    %p325 = por %p323, %p324
    %p327 = scmp.ne.s32.totalorder %s312, %s326
    %p328 = scmp.eq.s32.totalorder %s29, 0
    %p329 = por %p327, %p328
    %s331 = sadd.s32 %s330, 1
    %p334 = scmp.eq.s32.totalorder %s23, 1
    %p335 = scmp.ne.s32.totalorder %s330, %s332
    %p336 = scmp.eq.s32.totalorder %s23, 0
    %p337 = por %p335, %p336
    %p338 = scmp.ne.s32.totalorder %s330, %s332
    %p339 = scmp.eq.s32.totalorder %s28, 1
    %p340 = por %p338, %p339
    %p341 = scmp.ne.s32.totalorder %s332, %s333
    %p342 = scmp.eq.s32.totalorder %s28, 0
    %p343 = por %p341, %p342
    %p344 = scmp.ne.s32.totalorder %s332, %s333
    %p345 = scmp.eq.s32.totalorder %s29, 1
    %p346 = por %p344, %p345
    %p348 = scmp.ne.s32.totalorder %s333, %s347
    %p349 = scmp.eq.s32.totalorder %s29, 0
    %p350 = por %p348, %p349
    %s352 = sadd.s32 %s351, 1
    %p355 = scmp.eq.s32.totalorder %s23, 1
    %p356 = scmp.ne.s32.totalorder %s351, %s353
    %p357 = scmp.eq.s32.totalorder %s23, 0
    %p358 = por %p356, %p357
    %p359 = scmp.ne.s32.totalorder %s351, %s353
    %p360 = scmp.eq.s32.totalorder %s28, 1
    %p361 = por %p359, %p360
    %p362 = scmp.ne.s32.totalorder %s353, %s354
    %p363 = scmp.eq.s32.totalorder %s28, 0
    %p364 = por %p362, %p363
    %p365 = scmp.ne.s32.totalorder %s353, %s354
    %p366 = scmp.eq.s32.totalorder %s29, 1
    %p367 = por %p365, %p366
    %p369 = scmp.ne.s32.totalorder %s354, %s368
    %p370 = scmp.eq.s32.totalorder %s29, 0
    %p371 = por %p369, %p370
    %s373 = sadd.s32 %s372, 1
    %p376 = scmp.eq.s32.totalorder %s23, 1
    %p377 = scmp.ne.s32.totalorder %s372, %s374
    %p378 = scmp.eq.s32.totalorder %s23, 0
    %p379 = por %p377, %p378
    %p380 = scmp.ne.s32.totalorder %s372, %s374
    %p381 = scmp.eq.s32.totalorder %s28, 1
    %p382 = por %p380, %p381
    %p383 = scmp.ne.s32.totalorder %s374, %s375
    %p384 = scmp.eq.s32.totalorder %s28, 0
    %p385 = por %p383, %p384
    %p386 = scmp.ne.s32.totalorder %s374, %s375
    %p387 = scmp.eq.s32.totalorder %s29, 1
    %p388 = por %p386, %p387
    %p390 = scmp.ne.s32.totalorder %s375, %s389
    %p391 = scmp.eq.s32.totalorder %s29, 0
    %p392 = por %p390, %p391
    %s393 = ssub.s32 %s23, %s30
    %p394 = scmp.eq.s32.totalorder %s393, 0
    %s396 = sadd.s32 %s395, 1
    %s397 = scalar_select %p394, %s395, %s396
    %p400 = pneg %p394
    %p401 = scmp.eq.s32.totalorder %s23, 1
    %p402 = por %p400, %p401
    %p403 = scmp.ne.s32.totalorder %s395, %s398
    %p404 = scmp.eq.s32.totalorder %s23, 0
    %p405 = por %p403, %p404
    %p406 = scmp.ne.s32.totalorder %s395, %s398
    %p407 = scmp.eq.s32.totalorder %s28, 1
    %p408 = por %p406, %p407
    %p409 = scmp.ne.s32.totalorder %s398, %s399
    %p410 = scmp.eq.s32.totalorder %s28, 0
    %p411 = por %p409, %p410
    %p412 = scmp.ne.s32.totalorder %s398, %s399
    %p413 = scmp.eq.s32.totalorder %s29, 1
    %p414 = por %p412, %p413
    %p416 = scmp.ne.s32.totalorder %s399, %s415
    %p417 = scmp.eq.s32.totalorder %s29, 0
    %p418 = por %p416, %p417
    %p419 = scmp.le.s32.totalorder 1, %s23
    %p420 = scmp.lt.s32.totalorder %s23, 3
    %p421 = pnand %p419, %p420
    %p422 = pneg %p421
    // Predicated region
    $region9: #{encoder_forward.1} parent=5 // pred_check
      _
    $region10: #{encoder_forward.1} parent=5 // pred_check_branch
      %424 = sbr.rel (%p421) target = $region12
    $region11: #{encoder_forward.1} parent=5 // pred_region
      %s425 = ssub.s32 %s23, 1
      // Predicated region
      $region13: #{encoder_forward.1} parent=11 // pred_check
        %p426 = pneg %p70
      $region14: #{encoder_forward.1} parent=11 // pred_check_branch
        %428 = sbr.rel (%p426) target = $region16
      $region15: #{encoder_forward.1} parent=11 // pred_region
        _
      $region16: #{encoder_forward.1} parent=11 // pred_fallthru
        _
      // Predicated region
      $region17: #{encoder_forward.1} parent=11 // pred_check
        %p429 = pneg %p91
      $region18: #{encoder_forward.1} parent=11 // pred_check_branch
        %431 = sbr.rel (%p429) target = $region20
      $region19: #{encoder_forward.1} parent=11 // pred_region
        _
      $region20: #{encoder_forward.1} parent=11 // pred_fallthru
        _
      // Predicated region
      $region21: #{encoder_forward.1} parent=11 // pred_check
        %p432 = pneg %p112
      $region22: #{encoder_forward.1} parent=11 // pred_check_branch
        %434 = sbr.rel (%p432) target = $region24
      $region23: #{encoder_forward.1} parent=11 // pred_region
        _
      $region24: #{encoder_forward.1} parent=11 // pred_fallthru
        _
      // Predicated region
      $region25: #{encoder_forward.1} parent=11 // pred_check
        %p435 = pneg %p133
      $region26: #{encoder_forward.1} parent=11 // pred_check_branch
        %437 = sbr.rel (%p435) target = $region28
      $region27: #{encoder_forward.1} parent=11 // pred_region
        _
      $region28: #{encoder_forward.1} parent=11 // pred_fallthru
        _
      // Predicated region
      $region29: #{encoder_forward.1} parent=11 // pred_check
        %p438 = pneg %p154
      $region30: #{encoder_forward.1} parent=11 // pred_check_branch
        %440 = sbr.rel (%p438) target = $region32
      $region31: #{encoder_forward.1} parent=11 // pred_region
        _
      $region32: #{encoder_forward.1} parent=11 // pred_fallthru
        _
      // Predicated region
      $region33: #{encoder_forward.1} parent=11 // pred_check
        %p441 = pneg %p175
      $region34: #{encoder_forward.1} parent=11 // pred_check_branch
        %443 = sbr.rel (%p441) target = $region36
      $region35: #{encoder_forward.1} parent=11 // pred_region
        _
      $region36: #{encoder_forward.1} parent=11 // pred_fallthru
        _
      // Predicated region
      $region37: #{encoder_forward.1} parent=11 // pred_check
        %p444 = pneg %p196
      $region38: #{encoder_forward.1} parent=11 // pred_check_branch
        %446 = sbr.rel (%p444) target = $region40
      $region39: #{encoder_forward.1} parent=11 // pred_region
        _
      $region40: #{encoder_forward.1} parent=11 // pred_fallthru
        _
      // Predicated region
      $region41: #{encoder_forward.1} parent=11 // pred_check
        %p447 = pneg %p217
      $region42: #{encoder_forward.1} parent=11 // pred_check_branch
        %449 = sbr.rel (%p447) target = $region44
      $region43: #{encoder_forward.1} parent=11 // pred_region
        _
      $region44: #{encoder_forward.1} parent=11 // pred_fallthru
        _
      // Predicated region
      $region45: #{encoder_forward.1} parent=11 // pred_check
        %p450 = pneg %p238
      $region46: #{encoder_forward.1} parent=11 // pred_check_branch
        %452 = sbr.rel (%p450) target = $region48
      $region47: #{encoder_forward.1} parent=11 // pred_region
        _
      $region48: #{encoder_forward.1} parent=11 // pred_fallthru
        _
      // Predicated region
      $region49: #{encoder_forward.1} parent=11 // pred_check
        %p453 = pneg %p259
      $region50: #{encoder_forward.1} parent=11 // pred_check_branch
        %455 = sbr.rel (%p453) target = $region52
      $region51: #{encoder_forward.1} parent=11 // pred_region
        _
      $region52: #{encoder_forward.1} parent=11 // pred_fallthru
        _
      // Predicated region
      $region53: #{encoder_forward.1} parent=11 // pred_check
        %p456 = pneg %p280
      $region54: #{encoder_forward.1} parent=11 // pred_check_branch
        %458 = sbr.rel (%p456) target = $region56
      $region55: #{encoder_forward.1} parent=11 // pred_region
        _
      $region56: #{encoder_forward.1} parent=11 // pred_fallthru
        _
      // Predicated region
      $region57: #{encoder_forward.1} parent=11 // pred_check
        %p459 = pneg %p301
      $region58: #{encoder_forward.1} parent=11 // pred_check_branch
        %461 = sbr.rel (%p459) target = $region60
      $region59: #{encoder_forward.1} parent=11 // pred_region
        _
      $region60: #{encoder_forward.1} parent=11 // pred_fallthru
        _
      // Predicated region
      $region61: #{encoder_forward.1} parent=11 // pred_check
        %p462 = pneg %p322
      $region62: #{encoder_forward.1} parent=11 // pred_check_branch
        %464 = sbr.rel (%p462) target = $region64
      $region63: #{encoder_forward.1} parent=11 // pred_region
        _
      $region64: #{encoder_forward.1} parent=11 // pred_fallthru
        _
      // Predicated region
      $region65: #{encoder_forward.1} parent=11 // pred_check
        %p465 = pneg %p343
      $region66: #{encoder_forward.1} parent=11 // pred_check_branch
        %467 = sbr.rel (%p465) target = $region68
      $region67: #{encoder_forward.1} parent=11 // pred_region
        _
      $region68: #{encoder_forward.1} parent=11 // pred_fallthru
        _
      // Predicated region
      $region69: #{encoder_forward.1} parent=11 // pred_check
        %p468 = pneg %p364
      $region70: #{encoder_forward.1} parent=11 // pred_check_branch
        %470 = sbr.rel (%p468) target = $region72
      $region71: #{encoder_forward.1} parent=11 // pred_region
        _
      $region72: #{encoder_forward.1} parent=11 // pred_fallthru
        _
      // Predicated region
      $region73: #{encoder_forward.1} parent=11 // pred_check
        %p471 = pneg %p385
      $region74: #{encoder_forward.1} parent=11 // pred_check_branch
        %473 = sbr.rel (%p471) target = $region76
      $region75: #{encoder_forward.1} parent=11 // pred_region
        _
      $region76: #{encoder_forward.1} parent=11 // pred_fallthru
        _
    $region12: #{encoder_forward.1} parent=5 // pred_fallthru
      _
    %p474 = scmp.lt.s32.totalorder %s23, 2
    // Predicated region
    $region77: #{encoder_forward.1} parent=5 // pred_check
      %p475 = pneg %p474
    $region78: #{encoder_forward.1} parent=5 // pred_check_branch
      %477 = sbr.rel (%p475) target = $region80
    $region79: #{encoder_forward.1} parent=5 // pred_region
      // Predicated region
      $region81: #{encoder_forward.1} parent=79 // pred_check
        %p478 = pneg %p43
      $region82: #{encoder_forward.1} parent=79 // pred_check_branch
        %480 = sbr.rel (%p478) target = $region84
      $region83: #{encoder_forward.1} parent=79 // pred_region
        %s481 = smul.u32 8, %s23
        %p482 = scmp.lt.s32.totalorder %s481, 15
        %s483 = scalar_select %p482, %s481, 15
        %s484 = smul.addr %s483, 8
        %s485 = scalar_lea.vmem %s0, %s484
        %s486 = smul.u32 8, %s23
      $region84: #{encoder_forward.1} parent=79 // pred_fallthru
        _
    $region80: #{encoder_forward.1} parent=5 // pred_fallthru
      _
    %p487 = scmp.le.s32.totalorder 1, %s23
    %p488 = scmp.lt.s32.totalorder %s23, 3
    %p489 = pnand %p487, %p488
    %p490 = pneg %p489
    // Predicated region
    $region85: #{encoder_forward.1} parent=5 // pred_check
      _
    $region86: #{encoder_forward.1} parent=5 // pred_check_branch
      %492 = sbr.rel (%p489) target = $region88
    $region87: #{encoder_forward.1} parent=5 // pred_region
      %s493 = ssub.s32 %s23, 1
      %s494 = smul.u32 8, %s28
      %p495 = scmp.lt.s32.totalorder %s494, 15
      %s496 = scalar_select %p495, %s494, 15
      %s497 = smul.addr %s496, 8
      %s498 = scalar_lea.vmem %s0, %s497
      %p499 = pneg %p49
      %p500 = pneg %p46
      %p501 = pneg %p70
      %p502 = pneg %p67
      %p503 = pneg %p91
      %p504 = pneg %p88
      %p505 = pneg %p112
      %p506 = pneg %p109
      %p507 = pneg %p133
      %p508 = pneg %p130
      %p509 = pneg %p154
      %p510 = pneg %p151
      %p511 = pneg %p175
      %p512 = pneg %p172
      %p513 = pneg %p196
      %p514 = pneg %p193
      %p515 = pneg %p217
      %p516 = pneg %p214
      %p517 = pneg %p238
      %p518 = pneg %p235
      %p519 = pneg %p259
      %p520 = pneg %p256
      %p521 = pneg %p280
      %p522 = pneg %p277
      %p523 = pneg %p301
      %p524 = pneg %p298
      %p525 = pneg %p322
      %p526 = pneg %p319
      %p527 = pneg %p343
      %p528 = pneg %p340
      %p529 = pneg %p364
      %p530 = pneg %p361
      %p531 = pneg %p385
      %p532 = pneg %p382
      %p533 = pneg %p411
      %p534 = pneg %p408
      %s535 = smul.u32 8, %s28
      %p536 = scmp.lt.s32.totalorder %s535, 15
      %s537 = scalar_select %p536, %s535, 15
      %s538 = smul.addr %s537, 8
      %s539 = scalar_lea.vmem %s17, %s538
      %s540 = smul.u32 8, %s28
      %p541 = scmp.lt.s32.totalorder %s540, 15
      %s542 = scalar_select %p541, %s540, 15
      %s543 = smul.addr %s542, 8
      %s544 = scalar_lea.vmem %s0, %s543
      %s545 = smul.u32 8, %s28
      %s546 = smul.u32 8, %s28
      %p547 = scmp.lt.s32.totalorder %s546, 15
      %s548 = scalar_select %p547, %s546, 15
      %s549 = smul.addr %s548, 8
      %s550 = scalar_lea.vmem %s17, %s549
      %s551 = smul.u32 8, %s28
      %v553 = vld [vmem:[%s544] sm:$0xff]
      %v554 = vld [vmem:[%s544 + $0x8] sm:$0xff]
      %v555 = vld [vmem:[%s544 + $0x10] sm:$0xff]
      %v556 = vld [vmem:[%s544 + $0x18] sm:$0xff]
      %v557 = vld [vmem:[%s544 + $0x20] sm:$0xff]
      %v558 = vld [vmem:[%s544 + $0x28] sm:$0xff]
      %v559 = vld [vmem:[%s544 + $0x30] sm:$0xff]
      %v560 = vld [vmem:[%s544 + $0x38] sm:$0xff]
      %v561 = vld [vmem:[%s1] sm:$0x7]
      %vm562 = vcmp.eq.s32.totalorder %v553, 0
      %vm563 = vcmp.eq.s32.totalorder %v554, 0
      %vm564 = vcmp.eq.s32.totalorder %v555, 0
      %vm565 = vcmp.eq.s32.totalorder %v556, 0
      %vm566 = vcmp.eq.s32.totalorder %v557, 0
      %vm567 = vcmp.eq.s32.totalorder %v558, 0
      %vm568 = vcmp.eq.s32.totalorder %v559, 0
      %vm569 = vcmp.eq.s32.totalorder %v560, 0
      %v570 = vsel %vm562, 1, 0
      %v571 = vsel %vm563, 1, 0
      %v572 = vsel %vm564, 1, 0
      %v573 = vsel %vm565, 1, 0
      %v574 = vsel %vm566, 1, 0
      %v575 = vsel %vm567, 1, 0
      %v576 = vsel %vm568, 1, 0
      %v577 = vsel %vm569, 1, 0
      %578 = vset.pattern.permute.xlu0 0
      %579 = vperm.xlu0 %578, %v570
      %v580 = vpop.permute.xlu0 %579
      %581 = vset.pattern.permute.xlu0 0
      %582 = vperm.xlu0 %581, %v571
      %v583 = vpop.permute.xlu0 %582
      %584 = vset.pattern.permute.xlu0 0
      %585 = vperm.xlu0 %584, %v572
      %v586 = vpop.permute.xlu0 %585
      %587 = vset.pattern.permute.xlu0 0
      %588 = vperm.xlu0 %587, %v573
      %v589 = vpop.permute.xlu0 %588
      %590 = vset.pattern.permute.xlu0 0
      %591 = vperm.xlu0 %590, %v574
      %v592 = vpop.permute.xlu0 %591
      %593 = vset.pattern.permute.xlu0 0
      %594 = vperm.xlu0 %593, %v575
      %v595 = vpop.permute.xlu0 %594
      %596 = vset.pattern.permute.xlu0 0
      %597 = vperm.xlu0 %596, %v576
      %v598 = vpop.permute.xlu0 %597
      %599 = vset.pattern.permute.xlu0 0
      %600 = vperm.xlu0 %599, %v577
      %v601 = vpop.permute.xlu0 %600
      %vm602 = vcmp.eq.s32.totalorder %v580, 1
      %vm603 = vcmp.eq.s32.totalorder %v583, 1
      %vm604 = vcmp.eq.s32.totalorder %v586, 1
      %vm605 = vcmp.eq.s32.totalorder %v589, 1
      %vm606 = vcmp.eq.s32.totalorder %v592, 1
      %vm607 = vcmp.eq.s32.totalorder %v595, 1
      %vm608 = vcmp.eq.s32.totalorder %v598, 1
      %vm609 = vcmp.eq.s32.totalorder %v601, 1
      %v610 = vlaneseq
      %v611 = vshrl.u32 %v610, 7
      %v612 = vsub.s32 0, %v611
      %v613 = vrot.slane %v561, %v612
      %v614 = vsel %vm602, %v613, 0.0
      %v615 = vsel %vm603, %v613, 0.0
      %v616 = vsel %vm604, %v613, 0.0
      %v617 = vsel %vm605, %v613, 0.0
      %v618 = vsel %vm606, %v613, 0.0
      %v619 = vsel %vm607, %v613, 0.0
      %v620 = vsel %vm608, %v613, 0.0
      %v621 = vsel %vm609, %v613, 0.0
      %v622 = vadd.f32 %v614, 0.0
      %v623 = vadd.f32 %v615, 0.0
      %v624 = vadd.f32 %v616, 0.0
      %v625 = vadd.f32 %v617, 0.0
      %v626 = vadd.f32 %v618, 0.0
      %v627 = vadd.f32 %v619, 0.0
      %v628 = vadd.f32 %v620, 0.0
      %v629 = vadd.f32 %v621, 0.0
      %vm630 = vcmp.eq.s32.totalorder %v553, 1
      %vm631 = vcmp.eq.s32.totalorder %v554, 1
      %vm632 = vcmp.eq.s32.totalorder %v555, 1
      %vm633 = vcmp.eq.s32.totalorder %v556, 1
      %vm634 = vcmp.eq.s32.totalorder %v557, 1
      %vm635 = vcmp.eq.s32.totalorder %v558, 1
      %vm636 = vcmp.eq.s32.totalorder %v559, 1
      %vm637 = vcmp.eq.s32.totalorder %v560, 1
      %v638 = vsel %vm630, 1, 0
      %v639 = vsel %vm631, 1, 0
      %v640 = vsel %vm632, 1, 0
      %v641 = vsel %vm633, 1, 0
      %v642 = vsel %vm634, 1, 0
      %v643 = vsel %vm635, 1, 0
      %v644 = vsel %vm636, 1, 0
      %v645 = vsel %vm637, 1, 0
      %646 = vset.pattern.permute.xlu0 0
      %647 = vperm.xlu0 %646, %v638
      %v648 = vpop.permute.xlu0 %647
      %649 = vset.pattern.permute.xlu0 0
      %650 = vperm.xlu0 %649, %v639
      %v651 = vpop.permute.xlu0 %650
      %652 = vset.pattern.permute.xlu0 0
      %653 = vperm.xlu0 %652, %v640
      %v654 = vpop.permute.xlu0 %653
      %655 = vset.pattern.permute.xlu0 0
      %656 = vperm.xlu0 %655, %v641
      %v657 = vpop.permute.xlu0 %656
      %658 = vset.pattern.permute.xlu0 0
      %659 = vperm.xlu0 %658, %v642
      %v660 = vpop.permute.xlu0 %659
      %661 = vset.pattern.permute.xlu0 0
      %662 = vperm.xlu0 %661, %v643
      %v663 = vpop.permute.xlu0 %662
      %664 = vset.pattern.permute.xlu0 0
      %665 = vperm.xlu0 %664, %v644
      %v666 = vpop.permute.xlu0 %665
      %667 = vset.pattern.permute.xlu0 0
      %668 = vperm.xlu0 %667, %v645
      %v669 = vpop.permute.xlu0 %668
      %vm670 = vcmp.eq.s32.totalorder %v648, 1
      %vm671 = vcmp.eq.s32.totalorder %v651, 1
      %vm672 = vcmp.eq.s32.totalorder %v654, 1
      %vm673 = vcmp.eq.s32.totalorder %v657, 1
      %vm674 = vcmp.eq.s32.totalorder %v660, 1
      %vm675 = vcmp.eq.s32.totalorder %v663, 1
      %vm676 = vcmp.eq.s32.totalorder %v666, 1
      %vm677 = vcmp.eq.s32.totalorder %v669, 1
      %v678 = vlaneseq
      %v679 = vshrl.u32 %v678, 7
      %v680 = vsub.s32 1, %v679
      %v681 = vrot.slane %v561, %v680
      %v682 = vsel %vm670, %v681, 0.0
      %v683 = vsel %vm671, %v681, 0.0
      %v684 = vsel %vm672, %v681, 0.0
      %v685 = vsel %vm673, %v681, 0.0
      %v686 = vsel %vm674, %v681, 0.0
      %v687 = vsel %vm675, %v681, 0.0
      %v688 = vsel %vm676, %v681, 0.0
      %v689 = vsel %vm677, %v681, 0.0
      %v690 = vadd.f32 %v622, %v682
      %v691 = vadd.f32 %v623, %v683
      %v692 = vadd.f32 %v624, %v684
      %v693 = vadd.f32 %v625, %v685
      %v694 = vadd.f32 %v626, %v686
      %v695 = vadd.f32 %v627, %v687
      %v696 = vadd.f32 %v628, %v688
      %v697 = vadd.f32 %v629, %v689
      %vm698 = vcmp.eq.s32.totalorder %v553, 2
      %vm699 = vcmp.eq.s32.totalorder %v554, 2
      %vm700 = vcmp.eq.s32.totalorder %v555, 2
      %vm701 = vcmp.eq.s32.totalorder %v556, 2
      %vm702 = vcmp.eq.s32.totalorder %v557, 2
      %vm703 = vcmp.eq.s32.totalorder %v558, 2
      %vm704 = vcmp.eq.s32.totalorder %v559, 2
      %vm705 = vcmp.eq.s32.totalorder %v560, 2
      %v706 = vsel %vm698, 1, 0
      %v707 = vsel %vm699, 1, 0
      %v708 = vsel %vm700, 1, 0
      %v709 = vsel %vm701, 1, 0
      %v710 = vsel %vm702, 1, 0
      %v711 = vsel %vm703, 1, 0
      %v712 = vsel %vm704, 1, 0
      %v713 = vsel %vm705, 1, 0
      %714 = vset.pattern.permute.xlu0 0
      %715 = vperm.xlu0 %714, %v706
      %v716 = vpop.permute.xlu0 %715
      %717 = vset.pattern.permute.xlu0 0
      %718 = vperm.xlu0 %717, %v707
      %v719 = vpop.permute.xlu0 %718
      %720 = vset.pattern.permute.xlu0 0
      %721 = vperm.xlu0 %720, %v708
      %v722 = vpop.permute.xlu0 %721
      %723 = vset.pattern.permute.xlu0 0
      %724 = vperm.xlu0 %723, %v709
      %v725 = vpop.permute.xlu0 %724
      %726 = vset.pattern.permute.xlu0 0
      %727 = vperm.xlu0 %726, %v710
      %v728 = vpop.permute.xlu0 %727
      %729 = vset.pattern.permute.xlu0 0
      %730 = vperm.xlu0 %729, %v711
      %v731 = vpop.permute.xlu0 %730
      %732 = vset.pattern.permute.xlu0 0
      %733 = vperm.xlu0 %732, %v712
      %v734 = vpop.permute.xlu0 %733
      %735 = vset.pattern.permute.xlu0 0
      %736 = vperm.xlu0 %735, %v713
      %v737 = vpop.permute.xlu0 %736
      %vm738 = vcmp.eq.s32.totalorder %v716, 1
      %vm739 = vcmp.eq.s32.totalorder %v719, 1
      %vm740 = vcmp.eq.s32.totalorder %v722, 1
      %vm741 = vcmp.eq.s32.totalorder %v725, 1
      %vm742 = vcmp.eq.s32.totalorder %v728, 1
      %vm743 = vcmp.eq.s32.totalorder %v731, 1
      %vm744 = vcmp.eq.s32.totalorder %v734, 1
      %vm745 = vcmp.eq.s32.totalorder %v737, 1
      %v746 = vlaneseq
      %v747 = vshrl.u32 %v746, 7
      %v748 = vsub.s32 2, %v747
      %v749 = vrot.slane %v561, %v748
      %v750 = vsel %vm738, %v749, 0.0
      %v751 = vsel %vm739, %v749, 0.0
      %v752 = vsel %vm740, %v749, 0.0
      %v753 = vsel %vm741, %v749, 0.0
      %v754 = vsel %vm742, %v749, 0.0
      %v755 = vsel %vm743, %v749, 0.0
      %v756 = vsel %vm744, %v749, 0.0
      %v757 = vsel %vm745, %v749, 0.0
      %v758 = vadd.f32 %v690, %v750
      %v759 = vadd.f32 %v691, %v751
      %v760 = vadd.f32 %v692, %v752
      %v761 = vadd.f32 %v693, %v753
      %v762 = vadd.f32 %v694, %v754
      %v763 = vadd.f32 %v695, %v755
      %v764 = vadd.f32 %v696, %v756
      %v765 = vadd.f32 %v697, %v757
      %v766 = vmul.f32 %v758, 5.656854
      %v767 = vmul.f32 %v759, 5.656854
      %v768 = vmul.f32 %v760, 5.656854
      %v769 = vmul.f32 %v761, 5.656854
      %v770 = vmul.f32 %v762, 5.656854
      %v771 = vmul.f32 %v763, 5.656854
      %v772 = vmul.f32 %v764, 5.656854
      %v773 = vmul.f32 %v765, 5.656854
      %v774 = vld [vmem:[%s2] sm:$0xff]
      %v775 = vld [vmem:[%s2 + $0x8] sm:$0xff]
      %v776 = vld [vmem:[%s2 + $0x10] sm:$0xff]
      %v777 = vld [vmem:[%s2 + $0x18] sm:$0xff]
      %v778 = vld [vmem:[%s2 + $0x20] sm:$0xff]
      %v779 = vld [vmem:[%s2 + $0x28] sm:$0xff]
      %v780 = vld [vmem:[%s2 + $0x30] sm:$0xff]
      %v781 = vld [vmem:[%s2 + $0x38] sm:$0xff]
      %v782 = vadd.f32 %v766, %v774
      %v783 = vadd.f32 %v767, %v775
      %v784 = vadd.f32 %v768, %v776
      %v785 = vadd.f32 %v769, %v777
      %v786 = vadd.f32 %v770, %v778
      %v787 = vadd.f32 %v771, %v779
      %v788 = vadd.f32 %v772, %v780
      %v789 = vadd.f32 %v773, %v781
      %v790 = vld [vmem:[%s3] sm:$0x1]
      %v791 = vld [vmem:[%s4] sm:$0x1]
      %vm792 = vcmask 261120
      %v793 = vsel %vm792, %v782, 0.0
      %794 = vadd.xlane.f32.xlu0 %v793
      %v795 = vpop.xlane.xlu0 %794
      %v796 = vsel %vm792, %v783, 0.0
      %797 = vadd.xlane.f32.xlu0 %v796
      %v798 = vpop.xlane.xlu0 %797
      %v799 = vsel %vm792, %v784, 0.0
      %800 = vadd.xlane.f32.xlu0 %v799
      %v801 = vpop.xlane.xlu0 %800
      %v802 = vsel %vm792, %v785, 0.0
      %803 = vadd.xlane.f32.xlu0 %v802
      %v804 = vpop.xlane.xlu0 %803
      %v805 = vsel %vm792, %v786, 0.0
      %806 = vadd.xlane.f32.xlu0 %v805
      %v807 = vpop.xlane.xlu0 %806
      %v808 = vsel %vm792, %v787, 0.0
      %809 = vadd.xlane.f32.xlu0 %v808
      %v810 = vpop.xlane.xlu0 %809
      %v811 = vsel %vm792, %v788, 0.0
      %812 = vadd.xlane.f32.xlu0 %v811
      %v813 = vpop.xlane.xlu0 %812
      %v814 = vsel %vm792, %v789, 0.0
      %815 = vadd.xlane.f32.xlu0 %v814
      %v816 = vpop.xlane.xlu0 %815
      %v817 = vrcp.pop 32.0
      %v818 = vmul.f32 %v795, %v817
      %v819 = vmul.f32 %v798, %v817
      %v820 = vmul.f32 %v801, %v817
      %v821 = vmul.f32 %v804, %v817
      %v822 = vmul.f32 %v807, %v817
      %v823 = vmul.f32 %v810, %v817
      %v824 = vmul.f32 %v813, %v817
      %v825 = vmul.f32 %v816, %v817
      %v826 = vsub.f32 %v782, %v818
      %v827 = vsub.f32 %v783, %v819
      %v828 = vsub.f32 %v784, %v820
      %v829 = vsub.f32 %v785, %v821
      %v830 = vsub.f32 %v786, %v822
      %v831 = vsub.f32 %v787, %v823
      %v832 = vsub.f32 %v788, %v824
      %v833 = vsub.f32 %v789, %v825
      %v834 = vmul.f32 %v826, %v826
      %v835 = vmul.f32 %v827, %v827
      %v836 = vmul.f32 %v828, %v828
      %v837 = vmul.f32 %v829, %v829
      %v838 = vmul.f32 %v830, %v830
      %v839 = vmul.f32 %v831, %v831
      %v840 = vmul.f32 %v832, %v832
      %v841 = vmul.f32 %v833, %v833
      %v842 = vsel %vm792, %v834, 0.0
      %843 = vadd.xlane.f32.xlu0 %v842
      %v844 = vpop.xlane.xlu0 %843
      %v845 = vsel %vm792, %v835, 0.0
      %846 = vadd.xlane.f32.xlu0 %v845
      %v847 = vpop.xlane.xlu0 %846
      %v848 = vsel %vm792, %v836, 0.0
      %849 = vadd.xlane.f32.xlu0 %v848
      %v850 = vpop.xlane.xlu0 %849
      %v851 = vsel %vm792, %v837, 0.0
      %852 = vadd.xlane.f32.xlu0 %v851
      %v853 = vpop.xlane.xlu0 %852
      %v854 = vsel %vm792, %v838, 0.0
      %855 = vadd.xlane.f32.xlu0 %v854
      %v856 = vpop.xlane.xlu0 %855
      %v857 = vsel %vm792, %v839, 0.0
      %858 = vadd.xlane.f32.xlu0 %v857
      %v859 = vpop.xlane.xlu0 %858
      %v860 = vsel %vm792, %v840, 0.0
      %861 = vadd.xlane.f32.xlu0 %v860
      %v862 = vpop.xlane.xlu0 %861
      %v863 = vsel %vm792, %v841, 0.0
      %864 = vadd.xlane.f32.xlu0 %v863
      %v865 = vpop.xlane.xlu0 %864
      %v866 = vrcp.pop 31.0
      %v867 = vmul.f32 %v844, %v866
      %v868 = vmul.f32 %v847, %v866
      %v869 = vmul.f32 %v850, %v866
      %v870 = vmul.f32 %v853, %v866
      %v871 = vmul.f32 %v856, %v866
      %v872 = vmul.f32 %v859, %v866
      %v873 = vmul.f32 %v862, %v866
      %v874 = vmul.f32 %v865, %v866
      %v875 = vrsqrt.pop %v867
      %v876 = vmul.f32 %v867, %v875
      %vm877 = vcmp.eq.f32.partialorder %v867, inf
      %v878 = vsel %vm877, %v867, %v876
      %vm879 = vcmp.eq.f32.partialorder %v867, 0.0
      %v880 = vand.u32 %v867, 2147483648
      %v881 = vsel %vm879, %v880, %v878
      %v882 = vrsqrt.pop %v868
      %v883 = vmul.f32 %v868, %v882
      %vm884 = vcmp.eq.f32.partialorder %v868, inf
      %v885 = vsel %vm884, %v868, %v883
      %vm886 = vcmp.eq.f32.partialorder %v868, 0.0
      %v887 = vand.u32 %v868, 2147483648
      %v888 = vsel %vm886, %v887, %v885
      %v889 = vrsqrt.pop %v869
      %v890 = vmul.f32 %v869, %v889
      %vm891 = vcmp.eq.f32.partialorder %v869, inf
      %v892 = vsel %vm891, %v869, %v890
      %vm893 = vcmp.eq.f32.partialorder %v869, 0.0
      %v894 = vand.u32 %v869, 2147483648
      %v895 = vsel %vm893, %v894, %v892
      %v896 = vrsqrt.pop %v870
      %v897 = vmul.f32 %v870, %v896
      %vm898 = vcmp.eq.f32.partialorder %v870, inf
      %v899 = vsel %vm898, %v870, %v897
      %vm900 = vcmp.eq.f32.partialorder %v870, 0.0
      %v901 = vand.u32 %v870, 2147483648
      %v902 = vsel %vm900, %v901, %v899
      %v903 = vrsqrt.pop %v871
      %v904 = vmul.f32 %v871, %v903
      %vm905 = vcmp.eq.f32.partialorder %v871, inf
      %v906 = vsel %vm905, %v871, %v904
      %vm907 = vcmp.eq.f32.partialorder %v871, 0.0
      %v908 = vand.u32 %v871, 2147483648
      %v909 = vsel %vm907, %v908, %v906
      %v910 = vrsqrt.pop %v872
      %v911 = vmul.f32 %v872, %v910
      %vm912 = vcmp.eq.f32.partialorder %v872, inf
      %v913 = vsel %vm912, %v872, %v911
      %vm914 = vcmp.eq.f32.partialorder %v872, 0.0
      %v915 = vand.u32 %v872, 2147483648
      %v916 = vsel %vm914, %v915, %v913
      %v917 = vrsqrt.pop %v873
      %v918 = vmul.f32 %v873, %v917
      %vm919 = vcmp.eq.f32.partialorder %v873, inf
      %v920 = vsel %vm919, %v873, %v918
      %vm921 = vcmp.eq.f32.partialorder %v873, 0.0
      %v922 = vand.u32 %v873, 2147483648
      %v923 = vsel %vm921, %v922, %v920
      %v924 = vrsqrt.pop %v874
      %v925 = vmul.f32 %v874, %v924
      %vm926 = vcmp.eq.f32.partialorder %v874, inf
      %v927 = vsel %vm926, %v874, %v925
      %vm928 = vcmp.eq.f32.partialorder %v874, 0.0
      %v929 = vand.u32 %v874, 2147483648
      %v930 = vsel %vm928, %v929, %v927
      %v931 = vadd.f32 %v881, 1e-06
      %v932 = vadd.f32 %v888, 1e-06
      %v933 = vadd.f32 %v895, 1e-06
      %v934 = vadd.f32 %v902, 1e-06
      %v935 = vadd.f32 %v909, 1e-06
      %v936 = vadd.f32 %v916, 1e-06
      %v937 = vadd.f32 %v923, 1e-06
      %v938 = vadd.f32 %v930, 1e-06
      %v940 = vlaneseq
      %v941 = vshrl.u32 %v940, 7
      %v942 = vsub.s32 0, %v941
      %v943 = vrot.slane %v790, %v942
      %v945 = vmul.f32 %v943, %v826
      %v946 = vmul.f32 %v943, %v827
      %v947 = vmul.f32 %v943, %v828
      %v948 = vmul.f32 %v943, %v829
      %v949 = vmul.f32 %v943, %v830
      %v950 = vmul.f32 %v943, %v831
      %v951 = vmul.f32 %v943, %v832
      %v952 = vmul.f32 %v943, %v833
      %v953 = vrcp.pop %v931
      %v954 = vrcp.pop %v932
      %v955 = vrcp.pop %v933
      %v956 = vrcp.pop %v934
      %v957 = vrcp.pop %v935
      %v958 = vrcp.pop %v936
      %v959 = vrcp.pop %v937
      %v960 = vrcp.pop %v938
      %v961 = vmul.f32 %v945, %v953
      %v962 = vmul.f32 %v946, %v954
      %v963 = vmul.f32 %v947, %v955
      %v964 = vmul.f32 %v948, %v956
      %v965 = vmul.f32 %v949, %v957
      %v966 = vmul.f32 %v950, %v958
      %v967 = vmul.f32 %v951, %v959
      %v968 = vmul.f32 %v952, %v960
      %v970 = vlaneseq
      %v971 = vshrl.u32 %v970, 7
      %v972 = vsub.s32 0, %v971
      %v973 = vrot.slane %v791, %v972
      %v975 = vadd.f32 %v961, %v973
      %v976 = vadd.f32 %v962, %v973
      %v977 = vadd.f32 %v963, %v973
      %v978 = vadd.f32 %v964, %v973
      %v979 = vadd.f32 %v965, %v973
      %v980 = vadd.f32 %v966, %v973
      %v981 = vadd.f32 %v967, %v973
      %v982 = vadd.f32 %v968, %v973
      %v983 = vpack.c.bf16 %v976, %v975
      %v984 = vpack.c.bf16 %v978, %v977
      %v985 = vpack.c.bf16 %v980, %v979
      %v986 = vpack.c.bf16 %v982, %v981
      %v987 = vld [vmem:[%s5] sm:$0xf]
      %v988 = vld [vmem:[%s5 + $0x4] sm:$0xf]
      %v989 = vld [vmem:[%s5 + $0x8] sm:$0xf]
      %v990 = vld [vmem:[%s5 + $0xc] sm:$0xf]
      %v991 = vld [vmem:[%s6] sm:$0x1]
      %v993 = vlaneseq
      %v994 = vshrl.u32 %v993, 7
      %v995 = vsub.s32 0, %v994
      %v996 = vrot.slane %v991, %v995
      %v1002 = vunpack.c.l.b16 %v987
      %v1003 = vunpack.c.l.b16 %v988
      %v1004 = vunpack.c.l.b16 %v989
      %v1005 = vunpack.c.l.b16 %v990
      %v1006 = vpack.c.b16 %v1003, %v1002
      %v1007 = vpack.c.b16 %v1005, %v1004
      %v1011 = vsel %vm792, %v983, 0
      %v1014 = vsel %vm792, %v984, 0
      %v1017 = vsel %vm792, %v985, 0
      %v1020 = vsel %vm792, %v986, 0
      %1022 = vmatprep.subr.bf16.mxu0 0
      %1023 = vmatpush1.bf16.msra.mxu0 %v1006
      %1024 = vmatprep.subr.bf16.mxu0 0
      %1025 = vmatpush1.bf16.msra.mxu0 %v1007
      %1026 = vmatprep.subr.bf16.mxu0 0
      %1027 = vmatpush1.bf16.msra.mxu0 0
      %1028 = vmatprep.subr.bf16.mxu0 0
      %1029 = vmatpush1.bf16.msra.mxu0 0
      %1030 = vmatprep.subr.bf16.mxu0 0
      %1031 = vmatpush1.bf16.msra.mxu0 0
      %1032 = vmatprep.subr.bf16.mxu0 0
      %1033 = vmatpush1.bf16.msra.mxu0 0
      %1034 = vmatprep.subr.bf16.mxu0 0
      %1035 = vmatpush1.bf16.msra.mxu0 0
      %1036 = vmatprep.subr.bf16.mxu0 0
      %1037 = vmatpush1.bf16.msra.mxu0 0
      %1038 = vmatprep.subr.bf16.mxu0 0
      %1039 = vmatpush1.bf16.msra.mxu0 0
      %1040 = vmatprep.subr.bf16.mxu0 0
      %1041 = vmatpush1.bf16.msra.mxu0 0
      %1042 = vmatprep.subr.bf16.mxu0 0
      %1043 = vmatpush1.bf16.msra.mxu0 0
      %1044 = vmatprep.subr.bf16.mxu0 0
      %1045 = vmatpush1.bf16.msra.mxu0 0
      %1046 = vmatprep.subr.bf16.mxu0 0
      %1047 = vmatpush1.bf16.msra.mxu0 0
      %1048 = vmatprep.subr.bf16.mxu0 0
      %1049 = vmatpush1.bf16.msra.mxu0 0
      %1050 = vmatprep.subr.bf16.mxu0 0
      %1051 = vmatpush1.bf16.msra.mxu0 0
      %1052 = vmatprep.subr.bf16.mxu0 0
      %1053 = vmatpush1.bf16.msra.mxu0 0
      %1054 = vmatprep.mubr.bf16.mxu0 0
      %1055 = vmatmul.mubr.bf16.gmra.mrb[0].mxu0 %v1011
      %v1056 = vpop.f32.mrb[0].mxu0
      %v1057 = vadd.f32 %v996, %v1056
      %v1058 = vpop.f32.mrb[0].mxu0
      %v1059 = vpop.f32.mrb[0].mxu0
      %v1060 = vadd.f32 %v996, %v1059
      %v1061 = vpop.f32.mrb[0].mxu0
      %1062 = vmatprep.mubr.bf16.mxu0 0
      %1063 = vmatmul.mubr.bf16.gmra.mrb[0].mxu0 %v1014
      %v1064 = vpop.f32.mrb[0].mxu0
      %v1065 = vadd.f32 %v996, %v1064
      %v1066 = vpop.f32.mrb[0].mxu0
      %v1067 = vpop.f32.mrb[0].mxu0
      %v1068 = vadd.f32 %v996, %v1067
      %v1069 = vpop.f32.mrb[0].mxu0
      %1070 = vmatprep.mubr.bf16.mxu0 0
      %1071 = vmatmul.mubr.bf16.gmra.mrb[0].mxu0 %v1017
      %v1072 = vpop.f32.mrb[0].mxu0
      %v1073 = vadd.f32 %v996, %v1072
      %v1074 = vpop.f32.mrb[0].mxu0
      %v1075 = vpop.f32.mrb[0].mxu0
      %v1076 = vadd.f32 %v996, %v1075
      %v1077 = vpop.f32.mrb[0].mxu0
      %1078 = vmatprep.mubr.bf16.mxu0 0
      %1079 = vmatmul.mubr.bf16.gmra.mrb[0].mxu0 %v1020
      %v1080 = vpop.f32.mrb[0].mxu0
      %v1081 = vadd.f32 %v996, %v1080
      %v1082 = vpop.f32.mrb[0].mxu0
      %v1083 = vpop.f32.mrb[0].mxu0
      %v1084 = vadd.f32 %v996, %v1083
      %v1085 = vpop.f32.mrb[0].mxu0
      %1086 = vdwg.mxu0
      %1095 = vrot.lane.b32.xlu0 %v1057, 120
      %v1096 = vpop.permute.xlu0 %1095
      %1097 = vrot.lane.b32.xlu0 %v1060, 120
      %v1098 = vpop.permute.xlu0 %1097
      %1099 = vrot.lane.b32.xlu0 %v1065, 120
      %v1100 = vpop.permute.xlu0 %1099
      %1101 = vrot.lane.b32.xlu0 %v1068, 120
      %v1102 = vpop.permute.xlu0 %1101
      %1103 = vrot.lane.b32.xlu0 %v1073, 120
      %v1104 = vpop.permute.xlu0 %1103
      %1105 = vrot.lane.b32.xlu0 %v1076, 120
      %v1106 = vpop.permute.xlu0 %1105
      %1107 = vrot.lane.b32.xlu0 %v1081, 120
      %v1108 = vpop.permute.xlu0 %1107
      %1109 = vrot.lane.b32.xlu0 %v1084, 120
      %v1110 = vpop.permute.xlu0 %1109
      %1119 = vrot.lane.b32.xlu0 %v1057, 112
      %v1120 = vpop.permute.xlu0 %1119
      %1121 = vrot.lane.b32.xlu0 %v1060, 112
      %v1122 = vpop.permute.xlu0 %1121
      %1123 = vrot.lane.b32.xlu0 %v1065, 112
      %v1124 = vpop.permute.xlu0 %1123
      %1125 = vrot.lane.b32.xlu0 %v1068, 112
      %v1126 = vpop.permute.xlu0 %1125
      %1127 = vrot.lane.b32.xlu0 %v1073, 112
      %v1128 = vpop.permute.xlu0 %1127
      %1129 = vrot.lane.b32.xlu0 %v1076, 112
      %v1130 = vpop.permute.xlu0 %1129
      %1131 = vrot.lane.b32.xlu0 %v1081, 112
      %v1132 = vpop.permute.xlu0 %1131
      %1133 = vrot.lane.b32.xlu0 %v1084, 112
      %v1134 = vpop.permute.xlu0 %1133
      %1143 = vrot.lane.b32.xlu0 %v1057, 104
      %v1144 = vpop.permute.xlu0 %1143
      %1145 = vrot.lane.b32.xlu0 %v1060, 104
      %v1146 = vpop.permute.xlu0 %1145
      %1147 = vrot.lane.b32.xlu0 %v1065, 104
      %v1148 = vpop.permute.xlu0 %1147
      %1149 = vrot.lane.b32.xlu0 %v1068, 104
      %v1150 = vpop.permute.xlu0 %1149
      %1151 = vrot.lane.b32.xlu0 %v1073, 104
      %v1152 = vpop.permute.xlu0 %1151
      %1153 = vrot.lane.b32.xlu0 %v1076, 104
      %v1154 = vpop.permute.xlu0 %1153
      %1155 = vrot.lane.b32.xlu0 %v1081, 104
      %v1156 = vpop.permute.xlu0 %1155
      %1157 = vrot.lane.b32.xlu0 %v1084, 104
      %v1158 = vpop.permute.xlu0 %1157
      %v1167 = vpack.c.bf16 %v1060, %v1057
      %v1168 = vpack.c.bf16 %v1068, %v1065
      %v1169 = vpack.c.bf16 %v1076, %v1073
      %v1170 = vpack.c.bf16 %v1084, %v1081
      %v1171 = vpack.c.bf16 %v1098, %v1096
      %v1172 = vpack.c.bf16 %v1102, %v1100
      %v1173 = vpack.c.bf16 %v1106, %v1104
      %v1174 = vpack.c.bf16 %v1110, %v1108
      %v1175 = vpack.c.bf16 %v1122, %v1120
      %v1176 = vpack.c.bf16 %v1126, %v1124
      %v1177 = vpack.c.bf16 %v1130, %v1128
      %v1178 = vpack.c.bf16 %v1134, %v1132
      %v1179 = vpack.c.bf16 %v1146, %v1144
      %v1180 = vpack.c.bf16 %v1150, %v1148
      %v1181 = vpack.c.bf16 %v1154, %v1152
      %v1182 = vpack.c.bf16 %v1158, %v1156
      %1187 = vrot.lane.b32.xlu0 %v1167, 96
      %v1188 = vpop.permute.xlu0 %1187
      %1189 = vrot.lane.b32.xlu0 %v1168, 96
      %v1190 = vpop.permute.xlu0 %1189
      %1191 = vrot.lane.b32.xlu0 %v1169, 96
      %v1192 = vpop.permute.xlu0 %1191
      %1193 = vrot.lane.b32.xlu0 %v1170, 96
      %v1194 = vpop.permute.xlu0 %1193
      %vm1195 = vcmask 64512
      %v1197 = vsel %vm1195, %v1167, 0
      %v1200 = vsel %vm1195, %v1168, 0
      %v1203 = vsel %vm1195, %v1169, 0
      %v1206 = vsel %vm1195, %v1170, 0
      %v1209 = vsel %vm1195, %v1188, 0
      %v1212 = vsel %vm1195, %v1190, 0
      %v1215 = vsel %vm1195, %v1192, 0
      %v1218 = vsel %vm1195, %v1194, 0
      %1220 = vmatprep.subr.bf16.mxu0 0
      %1221 = vmatpush1.bf16.xpose.msra.mxu0 %v1209
      %1222 = vmatprep.subr.bf16.mxu0 0
      %1223 = vmatpush1.bf16.xpose.msra.mxu0 %v1212
      %1224 = vmatprep.subr.bf16.mxu0 0
      %1225 = vmatpush1.bf16.xpose.msra.mxu0 %v1215
      %1226 = vmatprep.subr.bf16.mxu0 0
      %1227 = vmatpush1.bf16.xpose.msra.mxu0 %v1218
      %1228 = vmatprep.subr.bf16.mxu0 0
      %1229 = vmatpush1.bf16.xpose.msra.mxu0 0
      %1230 = vmatprep.subr.bf16.mxu0 0
      %1231 = vmatpush1.bf16.xpose.msra.mxu0 0
      %1232 = vmatprep.subr.bf16.mxu0 0
      %1233 = vmatpush1.bf16.xpose.msra.mxu0 0
      %1234 = vmatprep.subr.bf16.mxu0 0
      %1235 = vmatpush1.bf16.xpose.msra.mxu0 0
      %1236 = vmatprep.subr.bf16.mxu0 0
      %1237 = vmatpush1.bf16.xpose.msra.mxu0 0
      %1238 = vmatprep.subr.bf16.mxu0 0
      %1239 = vmatpush1.bf16.xpose.msra.mxu0 0
      %1240 = vmatprep.subr.bf16.mxu0 0
      %1241 = vmatpush1.bf16.xpose.msra.mxu0 0
      %1242 = vmatprep.subr.bf16.mxu0 0
      %1243 = vmatpush1.bf16.xpose.msra.mxu0 0
      %1244 = vmatprep.subr.bf16.mxu0 0
      %1245 = vmatpush1.bf16.xpose.msra.mxu0 0
      %1246 = vmatprep.subr.bf16.mxu0 0
      %1247 = vmatpush1.bf16.xpose.msra.mxu0 0
      %1248 = vmatprep.subr.bf16.mxu0 0
      %1249 = vmatpush1.bf16.xpose.msra.mxu0 0
      %1250 = vmatprep.subr.bf16.mxu0 0
      %1251 = vmatpush1.bf16.xpose.msra.mxu0 0
      %1252 = vmatprep.mubr.bf16.mxu0 0
      %1253 = vmatmul.mubr.bf16.gmra.mrb[0].mxu0 %v1197
      %v1254 = vpop.f32.mrb[0].mxu0
      %v1255 = vadd.f32 0.0, %v1254
      %v1256 = vpop.f32.mrb[0].mxu0
      %v1257 = vpop.f32.mrb[0].mxu0
      %v1258 = vadd.f32 0.0, %v1257
      %v1259 = vpop.f32.mrb[0].mxu0
      %1260 = vmatprep.mubr.bf16.mxu0 0
      %1261 = vmatmul.mubr.bf16.gmra.mrb[0].mxu0 %v1200
      %v1262 = vpop.f32.mrb[0].mxu0
      %v1263 = vadd.f32 0.0, %v1262
      %v1264 = vpop.f32.mrb[0].mxu0
      %v1265 = vpop.f32.mrb[0].mxu0
      %v1266 = vadd.f32 0.0, %v1265
      %v1267 = vpop.f32.mrb[0].mxu0
      %1268 = vmatprep.mubr.bf16.mxu0 0
      %1269 = vmatmul.mubr.bf16.gmra.mrb[0].mxu0 %v1203
      %v1270 = vpop.f32.mrb[0].mxu0
      %v1271 = vadd.f32 0.0, %v1270
      %v1272 = vpop.f32.mrb[0].mxu0
      %v1273 = vpop.f32.mrb[0].mxu0
      %v1274 = vadd.f32 0.0, %v1273
      %v1275 = vpop.f32.mrb[0].mxu0
      %1276 = vmatprep.mubr.bf16.mxu0 0
      %1277 = vmatmul.mubr.bf16.gmra.mrb[0].mxu0 %v1206
      %v1278 = vpop.f32.mrb[0].mxu0
      %v1279 = vadd.f32 0.0, %v1278
      %v1280 = vpop.f32.mrb[0].mxu0
      %v1281 = vpop.f32.mrb[0].mxu0
      %v1282 = vadd.f32 0.0, %v1281
      %v1283 = vpop.f32.mrb[0].mxu0
      %1284 = vdwg.mxu0
      %1289 = vrot.lane.b32.xlu0 %v1171, 96
      %v1290 = vpop.permute.xlu0 %1289
      %1291 = vrot.lane.b32.xlu0 %v1172, 96
      %v1292 = vpop.permute.xlu0 %1291
      %1293 = vrot.lane.b32.xlu0 %v1173, 96
      %v1294 = vpop.permute.xlu0 %1293
      %1295 = vrot.lane.b32.xlu0 %v1174, 96
      %v1296 = vpop.permute.xlu0 %1295
      %v1298 = vsel %vm1195, %v1171, 0
      %v1301 = vsel %vm1195, %v1172, 0
      %v1304 = vsel %vm1195, %v1173, 0
      %v1307 = vsel %vm1195, %v1174, 0
      %v1310 = vsel %vm1195, %v1290, 0
      %v1313 = vsel %vm1195, %v1292, 0
      %v1316 = vsel %vm1195, %v1294, 0
      %v1319 = vsel %vm1195, %v1296, 0
      %1321 = vmatprep.subr.bf16.mxu0 0
      %1322 = vmatpush1.bf16.xpose.msra.mxu0 %v1310
      %1323 = vmatprep.subr.bf16.mxu0 0
      %1324 = vmatpush1.bf16.xpose.msra.mxu0 %v1313
      %1325 = vmatprep.subr.bf16.mxu0 0
      %1326 = vmatpush1.bf16.xpose.msra.mxu0 %v1316
      %1327 = vmatprep.subr.bf16.mxu0 0
      %1328 = vmatpush1.bf16.xpose.msra.mxu0 %v1319
      %1329 = vmatprep.subr.bf16.mxu0 0
      %1330 = vmatpush1.bf16.xpose.msra.mxu0 0
      %1331 = vmatprep.subr.bf16.mxu0 0
      %1332 = vmatpush1.bf16.xpose.msra.mxu0 0
      %1333 = vmatprep.subr.bf16.mxu0 0
      %1334 = vmatpush1.bf16.xpose.msra.mxu0 0
      %1335 = vmatprep.subr.bf16.mxu0 0
      %1336 = vmatpush1.bf16.xpose.msra.mxu0 0
      %1337 = vmatprep.subr.bf16.mxu0 0
      %1338 = vmatpush1.bf16.xpose.msra.mxu0 0
      %1339 = vmatprep.subr.bf16.mxu0 0
      %1340 = vmatpush1.bf16.xpose.msra.mxu0 0
      %1341 = vmatprep.subr.bf16.mxu0 0
      %1342 = vmatpush1.bf16.xpose.msra.mxu0 0
      %1343 = vmatprep.subr.bf16.mxu0 0
      %1344 = vmatpush1.bf16.xpose.msra.mxu0 0
      %1345 = vmatprep.subr.bf16.mxu0 0
      %1346 = vmatpush1.bf16.xpose.msra.mxu0 0
      %1347 = vmatprep.subr.bf16.mxu0 0
      %1348 = vmatpush1.bf16.xpose.msra.mxu0 0
      %1349 = vmatprep.subr.bf16.mxu0 0
      %1350 = vmatpush1.bf16.xpose.msra.mxu0 0
      %1351 = vmatprep.subr.bf16.mxu0 0
      %1352 = vmatpush1.bf16.xpose.msra.mxu0 0
      %1353 = vmatprep.mubr.bf16.mxu0 0
      %1354 = vmatmul.mubr.bf16.gmra.mrb[0].mxu0 %v1298
      %v1355 = vpop.f32.mrb[0].mxu0
      %v1356 = vadd.f32 0.0, %v1355
      %v1357 = vpop.f32.mrb[0].mxu0
      %v1358 = vpop.f32.mrb[0].mxu0
      %v1359 = vadd.f32 0.0, %v1358
      %v1360 = vpop.f32.mrb[0].mxu0
      %1361 = vmatprep.mubr.bf16.mxu0 0
      %1362 = vmatmul.mubr.bf16.gmra.mrb[0].mxu0 %v1301
      %v1363 = vpop.f32.mrb[0].mxu0
      %v1364 = vadd.f32 0.0, %v1363
      %v1365 = vpop.f32.mrb[0].mxu0
      %v1366 = vpop.f32.mrb[0].mxu0
      %v1367 = vadd.f32 0.0, %v1366
      %v1368 = vpop.f32.mrb[0].mxu0
      %1369 = vmatprep.mubr.bf16.mxu0 0
      %1370 = vmatmul.mubr.bf16.gmra.mrb[0].mxu0 %v1304
      %v1371 = vpop.f32.mrb[0].mxu0
      %v1372 = vadd.f32 0.0, %v1371
      %v1373 = vpop.f32.mrb[0].mxu0
      %v1374 = vpop.f32.mrb[0].mxu0
      %v1375 = vadd.f32 0.0, %v1374
      %v1376 = vpop.f32.mrb[0].mxu0
      %1377 = vmatprep.mubr.bf16.mxu0 0
      %1378 = vmatmul.mubr.bf16.gmra.mrb[0].mxu0 %v1307
      %v1379 = vpop.f32.mrb[0].mxu0
      %v1380 = vadd.f32 0.0, %v1379
      %v1381 = vpop.f32.mrb[0].mxu0
      %v1382 = vpop.f32.mrb[0].mxu0
      %v1383 = vadd.f32 0.0, %v1382
      %v1384 = vpop.f32.mrb[0].mxu0
      %1385 = vdwg.mxu0
      %1390 = vrot.lane.b32.xlu0 %v1175, 96
      %v1391 = vpop.permute.xlu0 %1390
      %1392 = vrot.lane.b32.xlu0 %v1176, 96
      %v1393 = vpop.permute.xlu0 %1392
      %1394 = vrot.lane.b32.xlu0 %v1177, 96
      %v1395 = vpop.permute.xlu0 %1394
      %1396 = vrot.lane.b32.xlu0 %v1178, 96
      %v1397 = vpop.permute.xlu0 %1396
      %v1399 = vsel %vm1195, %v1175, 0
      %v1402 = vsel %vm1195, %v1176, 0
      %v1405 = vsel %vm1195, %v1177, 0
      %v1408 = vsel %vm1195, %v1178, 0
      %v1411 = vsel %vm1195, %v1391, 0
      %v1414 = vsel %vm1195, %v1393, 0
      %v1417 = vsel %vm1195, %v1395, 0
      %v1420 = vsel %vm1195, %v1397, 0
      %1422 = vmatprep.subr.bf16.mxu0 0
      %1423 = vmatpush1.bf16.xpose.msra.mxu0 %v1411
      %1424 = vmatprep.subr.bf16.mxu0 0
      %1425 = vmatpush1.bf16.xpose.msra.mxu0 %v1414
      %1426 = vmatprep.subr.bf16.mxu0 0
      %1427 = vmatpush1.bf16.xpose.msra.mxu0 %v1417
      %1428 = vmatprep.subr.bf16.mxu0 0
      %1429 = vmatpush1.bf16.xpose.msra.mxu0 %v1420
      %1430 = vmatprep.subr.bf16.mxu0 0
      %1431 = vmatpush1.bf16.xpose.msra.mxu0 0
      %1432 = vmatprep.subr.bf16.mxu0 0
      %1433 = vmatpush1.bf16.xpose.msra.mxu0 0
      %1434 = vmatprep.subr.bf16.mxu0 0
      %1435 = vmatpush1.bf16.xpose.msra.mxu0 0
      %1436 = vmatprep.subr.bf16.mxu0 0
      %1437 = vmatpush1.bf16.xpose.msra.mxu0 0
      %1438 = vmatprep.subr.bf16.mxu0 0
      %1439 = vmatpush1.bf16.xpose.msra.mxu0 0
      %1440 = vmatprep.subr.bf16.mxu0 0
      %1441 = vmatpush1.bf16.xpose.msra.mxu0 0
      %1442 = vmatprep.subr.bf16.mxu0 0
      %1443 = vmatpush1.bf16.xpose.msra.mxu0 0
      %1444 = vmatprep.subr.bf16.mxu0 0
      %1445 = vmatpush1.bf16.xpose.msra.mxu0 0
      %1446 = vmatprep.subr.bf16.mxu0 0
      %1447 = vmatpush1.bf16.xpose.msra.mxu0 0
      %1448 = vmatprep.subr.bf16.mxu0 0
      %1449 = vmatpush1.bf16.xpose.msra.mxu0 0
      %1450 = vmatprep.subr.bf16.mxu0 0
      %1451 = vmatpush1.bf16.xpose.msra.mxu0 0
      %1452 = vmatprep.subr.bf16.mxu0 0
      %1453 = vmatpush1.bf16.xpose.msra.mxu0 0
      %1454 = vmatprep.mubr.bf16.mxu0 0
      %1455 = vmatmul.mubr.bf16.gmra.mrb[0].mxu0 %v1399
      %v1456 = vpop.f32.mrb[0].mxu0
      %v1457 = vadd.f32 0.0, %v1456
      %v1458 = vpop.f32.mrb[0].mxu0
      %v1459 = vpop.f32.mrb[0].mxu0
      %v1460 = vadd.f32 0.0, %v1459
      %v1461 = vpop.f32.mrb[0].mxu0
      %1462 = vmatprep.mubr.bf16.mxu0 0
      %1463 = vmatmul.mubr.bf16.gmra.mrb[0].mxu0 %v1402
      %v1464 = vpop.f32.mrb[0].mxu0
      %v1465 = vadd.f32 0.0, %v1464
      %v1466 = vpop.f32.mrb[0].mxu0
      %v1467 = vpop.f32.mrb[0].mxu0
      %v1468 = vadd.f32 0.0, %v1467
      %v1469 = vpop.f32.mrb[0].mxu0
      %1470 = vmatprep.mubr.bf16.mxu0 0
      %1471 = vmatmul.mubr.bf16.gmra.mrb[0].mxu0 %v1405
      %v1472 = vpop.f32.mrb[0].mxu0
      %v1473 = vadd.f32 0.0, %v1472
      %v1474 = vpop.f32.mrb[0].mxu0
      %v1475 = vpop.f32.mrb[0].mxu0
      %v1476 = vadd.f32 0.0, %v1475
      %v1477 = vpop.f32.mrb[0].mxu0
      %1478 = vmatprep.mubr.bf16.mxu0 0
      %1479 = vmatmul.mubr.bf16.gmra.mrb[0].mxu0 %v1408
      %v1480 = vpop.f32.mrb[0].mxu0
      %v1481 = vadd.f32 0.0, %v1480
      %v1482 = vpop.f32.mrb[0].mxu0
      %v1483 = vpop.f32.mrb[0].mxu0
      %v1484 = vadd.f32 0.0, %v1483
      %v1485 = vpop.f32.mrb[0].mxu0
      %1486 = vdwg.mxu0
      %1491 = vrot.lane.b32.xlu0 %v1179, 96
      %v1492 = vpop.permute.xlu0 %1491
      %1493 = vrot.lane.b32.xlu0 %v1180, 96
      %v1494 = vpop.permute.xlu0 %1493
      %1495 = vrot.lane.b32.xlu0 %v1181, 96
      %v1496 = vpop.permute.xlu0 %1495
      %1497 = vrot.lane.b32.xlu0 %v1182, 96
      %v1498 = vpop.permute.xlu0 %1497
      %v1500 = vsel %vm1195, %v1179, 0
      %v1503 = vsel %vm1195, %v1180, 0
      %v1506 = vsel %vm1195, %v1181, 0
      %v1509 = vsel %vm1195, %v1182, 0
      %v1512 = vsel %vm1195, %v1492, 0
      %v1515 = vsel %vm1195, %v1494, 0
      %v1518 = vsel %vm1195, %v1496, 0
      %v1521 = vsel %vm1195, %v1498, 0
      %1523 = vmatprep.subr.bf16.mxu0 0
      %1524 = vmatpush1.bf16.xpose.msra.mxu0 %v1512
      %1525 = vmatprep.subr.bf16.mxu0 0
      %1526 = vmatpush1.bf16.xpose.msra.mxu0 %v1515
      %1527 = vmatprep.subr.bf16.mxu0 0
      %1528 = vmatpush1.bf16.xpose.msra.mxu0 %v1518
      %1529 = vmatprep.subr.bf16.mxu0 0
      %1530 = vmatpush1.bf16.xpose.msra.mxu0 %v1521
      %1531 = vmatprep.subr.bf16.mxu0 0
      %1532 = vmatpush1.bf16.xpose.msra.mxu0 0
      %1533 = vmatprep.subr.bf16.mxu0 0
      %1534 = vmatpush1.bf16.xpose.msra.mxu0 0
      %1535 = vmatprep.subr.bf16.mxu0 0
      %1536 = vmatpush1.bf16.xpose.msra.mxu0 0
      %1537 = vmatprep.subr.bf16.mxu0 0
      %1538 = vmatpush1.bf16.xpose.msra.mxu0 0
      %1539 = vmatprep.subr.bf16.mxu0 0
      %1540 = vmatpush1.bf16.xpose.msra.mxu0 0
      %1541 = vmatprep.subr.bf16.mxu0 0
      %1542 = vmatpush1.bf16.xpose.msra.mxu0 0
      %1543 = vmatprep.subr.bf16.mxu0 0
      %1544 = vmatpush1.bf16.xpose.msra.mxu0 0
      %1545 = vmatprep.subr.bf16.mxu0 0
      %1546 = vmatpush1.bf16.xpose.msra.mxu0 0
      %1547 = vmatprep.subr.bf16.mxu0 0
      %1548 = vmatpush1.bf16.xpose.msra.mxu0 0
      %1549 = vmatprep.subr.bf16.mxu0 0
      %1550 = vmatpush1.bf16.xpose.msra.mxu0 0
      %1551 = vmatprep.subr.bf16.mxu0 0
      %1552 = vmatpush1.bf16.xpose.msra.mxu0 0
      %1553 = vmatprep.subr.bf16.mxu0 0
      %1554 = vmatpush1.bf16.xpose.msra.mxu0 0
      %1555 = vmatprep.mubr.bf16.mxu0 0
      %1556 = vmatmul.mubr.bf16.gmra.mrb[0].mxu0 %v1500
      %v1557 = vpop.f32.mrb[0].mxu0
      %v1558 = vadd.f32 0.0, %v1557
      %v1559 = vpop.f32.mrb[0].mxu0
      %v1560 = vpop.f32.mrb[0].mxu0
      %v1561 = vadd.f32 0.0, %v1560
      %v1562 = vpop.f32.mrb[0].mxu0
      %1563 = vmatprep.mubr.bf16.mxu0 0
      %1564 = vmatmul.mubr.bf16.gmra.mrb[0].mxu0 %v1503
      %v1565 = vpop.f32.mrb[0].mxu0
      %v1566 = vadd.f32 0.0, %v1565
      %v1567 = vpop.f32.mrb[0].mxu0
      %v1568 = vpop.f32.mrb[0].mxu0
      %v1569 = vadd.f32 0.0, %v1568
      %v1570 = vpop.f32.mrb[0].mxu0
      %1571 = vmatprep.mubr.bf16.mxu0 0
      %1572 = vmatmul.mubr.bf16.gmra.mrb[0].mxu0 %v1506
      %v1573 = vpop.f32.mrb[0].mxu0
      %v1574 = vadd.f32 0.0, %v1573
      %v1575 = vpop.f32.mrb[0].mxu0
      %v1576 = vpop.f32.mrb[0].mxu0
      %v1577 = vadd.f32 0.0, %v1576
      %v1578 = vpop.f32.mrb[0].mxu0
      %1579 = vmatprep.mubr.bf16.mxu0 0
      %1580 = vmatmul.mubr.bf16.gmra.mrb[0].mxu0 %v1509
      %v1581 = vpop.f32.mrb[0].mxu0
      %v1582 = vadd.f32 0.0, %v1581
      %v1583 = vpop.f32.mrb[0].mxu0
      %v1584 = vpop.f32.mrb[0].mxu0
      %v1585 = vadd.f32 0.0, %v1584
      %v1586 = vpop.f32.mrb[0].mxu0
      %1587 = vdwg.mxu0
      %vm1588 = vcmask 523264
      %v1589 = vsel %vm1588, %v1255, -inf
      %1590 = vmax.xlane.f32.xlu0 %v1589
      %v1591 = vpop.xlane.xlu0 %1590
      %v1592 = vsel %vm1588, %v1258, -inf
      %1593 = vmax.xlane.f32.xlu0 %v1592
      %v1594 = vpop.xlane.xlu0 %1593
      %v1595 = vsel %vm1588, %v1263, -inf
      %1596 = vmax.xlane.f32.xlu0 %v1595
      %v1597 = vpop.xlane.xlu0 %1596
      %v1598 = vsel %vm1588, %v1266, -inf
      %1599 = vmax.xlane.f32.xlu0 %v1598
      %v1600 = vpop.xlane.xlu0 %1599
      %v1601 = vsel %vm1588, %v1271, -inf
      %1602 = vmax.xlane.f32.xlu0 %v1601
      %v1603 = vpop.xlane.xlu0 %1602
      %v1604 = vsel %vm1588, %v1274, -inf
      %1605 = vmax.xlane.f32.xlu0 %v1604
      %v1606 = vpop.xlane.xlu0 %1605
      %v1607 = vsel %vm1588, %v1279, -inf
      %1608 = vmax.xlane.f32.xlu0 %v1607
      %v1609 = vpop.xlane.xlu0 %1608
      %v1610 = vsel %vm1588, %v1282, -inf
      %1611 = vmax.xlane.f32.xlu0 %v1610
      %v1612 = vpop.xlane.xlu0 %1611
      %v1613 = vsel %vm1588, %v1356, -inf
      %1614 = vmax.xlane.f32.xlu0 %v1613
      %v1615 = vpop.xlane.xlu0 %1614
      %v1616 = vsel %vm1588, %v1359, -inf
      %1617 = vmax.xlane.f32.xlu0 %v1616
      %v1618 = vpop.xlane.xlu0 %1617
      %v1619 = vsel %vm1588, %v1364, -inf
      %1620 = vmax.xlane.f32.xlu0 %v1619
      %v1621 = vpop.xlane.xlu0 %1620
      %v1622 = vsel %vm1588, %v1367, -inf
      %1623 = vmax.xlane.f32.xlu0 %v1622
      %v1624 = vpop.xlane.xlu0 %1623
      %v1625 = vsel %vm1588, %v1372, -inf
      %1626 = vmax.xlane.f32.xlu0 %v1625
      %v1627 = vpop.xlane.xlu0 %1626
      %v1628 = vsel %vm1588, %v1375, -inf
      %1629 = vmax.xlane.f32.xlu0 %v1628
      %v1630 = vpop.xlane.xlu0 %1629
      %v1631 = vsel %vm1588, %v1380, -inf
      %1632 = vmax.xlane.f32.xlu0 %v1631
      %v1633 = vpop.xlane.xlu0 %1632
      %v1634 = vsel %vm1588, %v1383, -inf
      %1635 = vmax.xlane.f32.xlu0 %v1634
      %v1636 = vpop.xlane.xlu0 %1635
      %v1637 = vsel %vm1588, %v1457, -inf
      %1638 = vmax.xlane.f32.xlu0 %v1637
      %v1639 = vpop.xlane.xlu0 %1638
      %v1640 = vsel %vm1588, %v1460, -inf
      %1641 = vmax.xlane.f32.xlu0 %v1640
      %v1642 = vpop.xlane.xlu0 %1641
      %v1643 = vsel %vm1588, %v1465, -inf
      %1644 = vmax.xlane.f32.xlu0 %v1643
      %v1645 = vpop.xlane.xlu0 %1644
      %v1646 = vsel %vm1588, %v1468, -inf
      %1647 = vmax.xlane.f32.xlu0 %v1646
      %v1648 = vpop.xlane.xlu0 %1647
      %v1649 = vsel %vm1588, %v1473, -inf
      %1650 = vmax.xlane.f32.xlu0 %v1649
      %v1651 = vpop.xlane.xlu0 %1650
      %v1652 = vsel %vm1588, %v1476, -inf
      %1653 = vmax.xlane.f32.xlu0 %v1652
      %v1654 = vpop.xlane.xlu0 %1653
      %v1655 = vsel %vm1588, %v1481, -inf
      %1656 = vmax.xlane.f32.xlu0 %v1655
      %v1657 = vpop.xlane.xlu0 %1656
      %v1658 = vsel %vm1588, %v1484, -inf
      %1659 = vmax.xlane.f32.xlu0 %v1658
      %v1660 = vpop.xlane.xlu0 %1659
      %v1661 = vsel %vm1588, %v1558, -inf
      %1662 = vmax.xlane.f32.xlu0 %v1661
      %v1663 = vpop.xlane.xlu0 %1662
      %v1664 = vsel %vm1588, %v1561, -inf
      %1665 = vmax.xlane.f32.xlu0 %v1664
      %v1666 = vpop.xlane.xlu0 %1665
      %v1667 = vsel %vm1588, %v1566, -inf
      %1668 = vmax.xlane.f32.xlu0 %v1667
      %v1669 = vpop.xlane.xlu0 %1668
      %v1670 = vsel %vm1588, %v1569, -inf
      %1671 = vmax.xlane.f32.xlu0 %v1670
      %v1672 = vpop.xlane.xlu0 %1671
      %v1673 = vsel %vm1588, %v1574, -inf
      %1674 = vmax.xlane.f32.xlu0 %v1673
      %v1675 = vpop.xlane.xlu0 %1674
      %v1676 = vsel %vm1588, %v1577, -inf
      %1677 = vmax.xlane.f32.xlu0 %v1676
      %v1678 = vpop.xlane.xlu0 %1677
      %v1679 = vsel %vm1588, %v1582, -inf
      %1680 = vmax.xlane.f32.xlu0 %v1679
      %v1681 = vpop.xlane.xlu0 %1680
      %v1682 = vsel %vm1588, %v1585, -inf
      %1683 = vmax.xlane.f32.xlu0 %v1682
      %v1684 = vpop.xlane.xlu0 %1683
      %v1685 = vsub.f32 %v1255, %v1591
      %v1686 = vsub.f32 %v1258, %v1594
      %v1687 = vsub.f32 %v1263, %v1597
      %v1688 = vsub.f32 %v1266, %v1600
      %v1689 = vsub.f32 %v1271, %v1603
      %v1690 = vsub.f32 %v1274, %v1606
      %v1691 = vsub.f32 %v1279, %v1609
      %v1692 = vsub.f32 %v1282, %v1612
      %v1693 = vsub.f32 %v1356, %v1615
      %v1694 = vsub.f32 %v1359, %v1618
      %v1695 = vsub.f32 %v1364, %v1621
      %v1696 = vsub.f32 %v1367, %v1624
      %v1697 = vsub.f32 %v1372, %v1627
      %v1698 = vsub.f32 %v1375, %v1630
      %v1699 = vsub.f32 %v1380, %v1633
      %v1700 = vsub.f32 %v1383, %v1636
      %v1701 = vsub.f32 %v1457, %v1639
      %v1702 = vsub.f32 %v1460, %v1642
      %v1703 = vsub.f32 %v1465, %v1645
      %v1704 = vsub.f32 %v1468, %v1648
      %v1705 = vsub.f32 %v1473, %v1651
      %v1706 = vsub.f32 %v1476, %v1654
      %v1707 = vsub.f32 %v1481, %v1657
      %v1708 = vsub.f32 %v1484, %v1660
      %v1709 = vsub.f32 %v1558, %v1663
      %v1710 = vsub.f32 %v1561, %v1666
      %v1711 = vsub.f32 %v1566, %v1669
      %v1712 = vsub.f32 %v1569, %v1672
      %v1713 = vsub.f32 %v1574, %v1675
      %v1714 = vsub.f32 %v1577, %v1678
      %v1715 = vsub.f32 %v1582, %v1681
      %v1716 = vsub.f32 %v1585, %v1684
      %v1717 = vmul.f32 %v1685, 1.442695
      %v1718 = vpow.pop %v1717
      %v1719 = vmul.f32 %v1686, 1.442695
      %v1720 = vpow.pop %v1719
      %v1721 = vmul.f32 %v1687, 1.442695
      %v1722 = vpow.pop %v1721
      %v1723 = vmul.f32 %v1688, 1.442695
      %v1724 = vpow.pop %v1723
      %v1725 = vmul.f32 %v1689, 1.442695
      %v1726 = vpow.pop %v1725
      %v1727 = vmul.f32 %v1690, 1.442695
      %v1728 = vpow.pop %v1727
      %v1729 = vmul.f32 %v1691, 1.442695
      %v1730 = vpow.pop %v1729
      %v1731 = vmul.f32 %v1692, 1.442695
      %v1732 = vpow.pop %v1731
      %v1733 = vmul.f32 %v1693, 1.442695
      %v1734 = vpow.pop %v1733
      %v1735 = vmul.f32 %v1694, 1.442695
      %v1736 = vpow.pop %v1735
      %v1737 = vmul.f32 %v1695, 1.442695
      %v1738 = vpow.pop %v1737
      %v1739 = vmul.f32 %v1696, 1.442695
      %v1740 = vpow.pop %v1739
      %v1741 = vmul.f32 %v1697, 1.442695
      %v1742 = vpow.pop %v1741
      %v1743 = vmul.f32 %v1698, 1.442695
      %v1744 = vpow.pop %v1743
      %v1745 = vmul.f32 %v1699, 1.442695
      %v1746 = vpow.pop %v1745
      %v1747 = vmul.f32 %v1700, 1.442695
      %v1748 = vpow.pop %v1747
      %v1749 = vmul.f32 %v1701, 1.442695
      %v1750 = vpow.pop %v1749
      %v1751 = vmul.f32 %v1702, 1.442695
      %v1752 = vpow.pop %v1751
      %v1753 = vmul.f32 %v1703, 1.442695
      %v1754 = vpow.pop %v1753
      %v1755 = vmul.f32 %v1704, 1.442695
      %v1756 = vpow.pop %v1755
      %v1757 = vmul.f32 %v1705, 1.442695
      %v1758 = vpow.pop %v1757
      %v1759 = vmul.f32 %v1706, 1.442695
      %v1760 = vpow.pop %v1759
      %v1761 = vmul.f32 %v1707, 1.442695
      %v1762 = vpow.pop %v1761
      %v1763 = vmul.f32 %v1708, 1.442695
      %v1764 = vpow.pop %v1763
      %v1765 = vmul.f32 %v1709, 1.442695
      %v1766 = vpow.pop %v1765
      %v1767 = vmul.f32 %v1710, 1.442695
      %v1768 = vpow.pop %v1767
      %v1769 = vmul.f32 %v1711, 1.442695
      %v1770 = vpow.pop %v1769
      %v1771 = vmul.f32 %v1712, 1.442695
      %v1772 = vpow.pop %v1771
      %v1773 = vmul.f32 %v1713, 1.442695
      %v1774 = vpow.pop %v1773
      %v1775 = vmul.f32 %v1714, 1.442695
      %v1776 = vpow.pop %v1775
      %v1777 = vmul.f32 %v1715, 1.442695
      %v1778 = vpow.pop %v1777
      %v1779 = vmul.f32 %v1716, 1.442695
      %v1780 = vpow.pop %v1779
      %v1781 = vsel %vm1588, %v1718, 0.0
      %1782 = vadd.xlane.f32.xlu0 %v1781
      %v1783 = vpop.xlane.xlu0 %1782
      %v1784 = vsel %vm1588, %v1720, 0.0
      %1785 = vadd.xlane.f32.xlu0 %v1784
      %v1786 = vpop.xlane.xlu0 %1785
      %v1787 = vsel %vm1588, %v1722, 0.0
      %1788 = vadd.xlane.f32.xlu0 %v1787
      %v1789 = vpop.xlane.xlu0 %1788
      %v1790 = vsel %vm1588, %v1724, 0.0
      %1791 = vadd.xlane.f32.xlu0 %v1790
      %v1792 = vpop.xlane.xlu0 %1791
      %v1793 = vsel %vm1588, %v1726, 0.0
      %1794 = vadd.xlane.f32.xlu0 %v1793
      %v1795 = vpop.xlane.xlu0 %1794
      %v1796 = vsel %vm1588, %v1728, 0.0
      %1797 = vadd.xlane.f32.xlu0 %v1796
      %v1798 = vpop.xlane.xlu0 %1797
      %v1799 = vsel %vm1588, %v1730, 0.0
      %1800 = vadd.xlane.f32.xlu0 %v1799
      %v1801 = vpop.xlane.xlu0 %1800
      %v1802 = vsel %vm1588, %v1732, 0.0
      %1803 = vadd.xlane.f32.xlu0 %v1802
      %v1804 = vpop.xlane.xlu0 %1803
      %v1805 = vsel %vm1588, %v1734, 0.0
      %1806 = vadd.xlane.f32.xlu0 %v1805
      %v1807 = vpop.xlane.xlu0 %1806
      %v1808 = vsel %vm1588, %v1736, 0.0
      %1809 = vadd.xlane.f32.xlu0 %v1808
      %v1810 = vpop.xlane.xlu0 %1809
      %v1811 = vsel %vm1588, %v1738, 0.0
      %1812 = vadd.xlane.f32.xlu0 %v1811
      %v1813 = vpop.xlane.xlu0 %1812
      %v1814 = vsel %vm1588, %v1740, 0.0
      %1815 = vadd.xlane.f32.xlu0 %v1814
      %v1816 = vpop.xlane.xlu0 %1815
      %v1817 = vsel %vm1588, %v1742, 0.0
      %1818 = vadd.xlane.f32.xlu0 %v1817
      %v1819 = vpop.xlane.xlu0 %1818
      %v1820 = vsel %vm1588, %v1744, 0.0
      %1821 = vadd.xlane.f32.xlu0 %v1820
      %v1822 = vpop.xlane.xlu0 %1821
      %v1823 = vsel %vm1588, %v1746, 0.0
      %1824 = vadd.xlane.f32.xlu0 %v1823
      %v1825 = vpop.xlane.xlu0 %1824
      %v1826 = vsel %vm1588, %v1748, 0.0
      %1827 = vadd.xlane.f32.xlu0 %v1826
      %v1828 = vpop.xlane.xlu0 %1827
      %v1829 = vsel %vm1588, %v1750, 0.0
      %1830 = vadd.xlane.f32.xlu0 %v1829
      %v1831 = vpop.xlane.xlu0 %1830
      %v1832 = vsel %vm1588, %v1752, 0.0
      %1833 = vadd.xlane.f32.xlu0 %v1832
      %v1834 = vpop.xlane.xlu0 %1833
      %v1835 = vsel %vm1588, %v1754, 0.0
      %1836 = vadd.xlane.f32.xlu0 %v1835
      %v1837 = vpop.xlane.xlu0 %1836
      %v1838 = vsel %vm1588, %v1756, 0.0
      %1839 = vadd.xlane.f32.xlu0 %v1838
      %v1840 = vpop.xlane.xlu0 %1839
      %v1841 = vsel %vm1588, %v1758, 0.0
      %1842 = vadd.xlane.f32.xlu0 %v1841
      %v1843 = vpop.xlane.xlu0 %1842
      %v1844 = vsel %vm1588, %v1760, 0.0
      %1845 = vadd.xlane.f32.xlu0 %v1844
      %v1846 = vpop.xlane.xlu0 %1845
      %v1847 = vsel %vm1588, %v1762, 0.0
      %1848 = vadd.xlane.f32.xlu0 %v1847
      %v1849 = vpop.xlane.xlu0 %1848
      %v1850 = vsel %vm1588, %v1764, 0.0
      %1851 = vadd.xlane.f32.xlu0 %v1850
      %v1852 = vpop.xlane.xlu0 %1851
      %v1853 = vsel %vm1588, %v1766, 0.0
      %1854 = vadd.xlane.f32.xlu0 %v1853
      %v1855 = vpop.xlane.xlu0 %1854
      %v1856 = vsel %vm1588, %v1768, 0.0
      %1857 = vadd.xlane.f32.xlu0 %v1856
      %v1858 = vpop.xlane.xlu0 %1857
      %v1859 = vsel %vm1588, %v1770, 0.0
      %1860 = vadd.xlane.f32.xlu0 %v1859
      %v1861 = vpop.xlane.xlu0 %1860
      %v1862 = vsel %vm1588, %v1772, 0.0
      %1863 = vadd.xlane.f32.xlu0 %v1862
      %v1864 = vpop.xlane.xlu0 %1863
      %v1865 = vsel %vm1588, %v1774, 0.0
      %1866 = vadd.xlane.f32.xlu0 %v1865
      %v1867 = vpop.xlane.xlu0 %1866
      %v1868 = vsel %vm1588, %v1776, 0.0
      %1869 = vadd.xlane.f32.xlu0 %v1868
      %v1870 = vpop.xlane.xlu0 %1869
      %v1871 = vsel %vm1588, %v1778, 0.0
      %1872 = vadd.xlane.f32.xlu0 %v1871
      %v1873 = vpop.xlane.xlu0 %1872
      %v1874 = vsel %vm1588, %v1780, 0.0
      %1875 = vadd.xlane.f32.xlu0 %v1874
      %v1876 = vpop.xlane.xlu0 %1875
      %v1877 = vrcp.pop %v1783
      %v1878 = vrcp.pop %v1786
      %v1879 = vrcp.pop %v1789
      %v1880 = vrcp.pop %v1792
      %v1881 = vrcp.pop %v1795
      %v1882 = vrcp.pop %v1798
      %v1883 = vrcp.pop %v1801
      %v1884 = vrcp.pop %v1804
      %v1885 = vrcp.pop %v1807
      %v1886 = vrcp.pop %v1810
      %v1887 = vrcp.pop %v1813
      %v1888 = vrcp.pop %v1816
      %v1889 = vrcp.pop %v1819
      %v1890 = vrcp.pop %v1822
      %v1891 = vrcp.pop %v1825
      %v1892 = vrcp.pop %v1828
      %v1893 = vrcp.pop %v1831
      %v1894 = vrcp.pop %v1834
      %v1895 = vrcp.pop %v1837
      %v1896 = vrcp.pop %v1840
      %v1897 = vrcp.pop %v1843
      %v1898 = vrcp.pop %v1846
      %v1899 = vrcp.pop %v1849
      %v1900 = vrcp.pop %v1852
      %v1901 = vrcp.pop %v1855
      %v1902 = vrcp.pop %v1858
      %v1903 = vrcp.pop %v1861
      %v1904 = vrcp.pop %v1864
      %v1905 = vrcp.pop %v1867
      %v1906 = vrcp.pop %v1870
      %v1907 = vrcp.pop %v1873
      %v1908 = vrcp.pop %v1876
      %v1909 = vmul.f32 %v1718, %v1877
      %v1910 = vmul.f32 %v1720, %v1878
      %v1911 = vmul.f32 %v1722, %v1879
      %v1912 = vmul.f32 %v1724, %v1880
      %v1913 = vmul.f32 %v1726, %v1881
      %v1914 = vmul.f32 %v1728, %v1882
      %v1915 = vmul.f32 %v1730, %v1883
      %v1916 = vmul.f32 %v1732, %v1884
      %v1917 = vmul.f32 %v1734, %v1885
      %v1918 = vmul.f32 %v1736, %v1886
      %v1919 = vmul.f32 %v1738, %v1887
      %v1920 = vmul.f32 %v1740, %v1888
      %v1921 = vmul.f32 %v1742, %v1889
      %v1922 = vmul.f32 %v1744, %v1890
      %v1923 = vmul.f32 %v1746, %v1891
      %v1924 = vmul.f32 %v1748, %v1892
      %v1925 = vmul.f32 %v1750, %v1893
      %v1926 = vmul.f32 %v1752, %v1894
      %v1927 = vmul.f32 %v1754, %v1895
      %v1928 = vmul.f32 %v1756, %v1896
      %v1929 = vmul.f32 %v1758, %v1897
      %v1930 = vmul.f32 %v1760, %v1898
      %v1931 = vmul.f32 %v1762, %v1899
      %v1932 = vmul.f32 %v1764, %v1900
      %v1933 = vmul.f32 %v1766, %v1901
      %v1934 = vmul.f32 %v1768, %v1902
      %v1935 = vmul.f32 %v1770, %v1903
      %v1936 = vmul.f32 %v1772, %v1904
      %v1937 = vmul.f32 %v1774, %v1905
      %v1938 = vmul.f32 %v1776, %v1906
      %v1939 = vmul.f32 %v1778, %v1907
      %v1940 = vmul.f32 %v1780, %v1908
      %v1941 = vpack.c.bf16 %v1910, %v1909
      %v1942 = vpack.c.bf16 %v1912, %v1911
      %v1943 = vpack.c.bf16 %v1914, %v1913
      %v1944 = vpack.c.bf16 %v1916, %v1915
      %v1945 = vpack.c.bf16 %v1918, %v1917
      %v1946 = vpack.c.bf16 %v1920, %v1919
      %v1947 = vpack.c.bf16 %v1922, %v1921
      %v1948 = vpack.c.bf16 %v1924, %v1923
      %v1949 = vpack.c.bf16 %v1926, %v1925
      %v1950 = vpack.c.bf16 %v1928, %v1927
      %v1951 = vpack.c.bf16 %v1930, %v1929
      %v1952 = vpack.c.bf16 %v1932, %v1931
      %v1953 = vpack.c.bf16 %v1934, %v1933
      %v1954 = vpack.c.bf16 %v1936, %v1935
      %v1955 = vpack.c.bf16 %v1938, %v1937
      %v1956 = vpack.c.bf16 %v1940, %v1939
      %1957 = vrot.lane.b32.xlu0 %v1167, 64
      %v1958 = vpop.permute.xlu0 %1957
      %1959 = vrot.lane.b32.xlu0 %v1168, 64
      %v1960 = vpop.permute.xlu0 %1959
      %1961 = vrot.lane.b32.xlu0 %v1169, 64
      %v1962 = vpop.permute.xlu0 %1961
      %1963 = vrot.lane.b32.xlu0 %v1170, 64
      %v1964 = vpop.permute.xlu0 %1963
      %v1970 = vsel %vm1588, %v1941, 0
      %v1973 = vsel %vm1588, %v1942, 0
      %v1976 = vsel %vm1588, %v1943, 0
      %v1979 = vsel %vm1588, %v1944, 0
      %1981 = vmatprep.subr.bf16.mxu0 0
      %1982 = vmatpush1.bf16.msra.mxu0 %v1958
      %1983 = vmatprep.subr.bf16.mxu0 0
      %1984 = vmatpush1.bf16.msra.mxu0 %v1960
      %1985 = vmatprep.subr.bf16.mxu0 0
      %1986 = vmatpush1.bf16.msra.mxu0 %v1962
      %1987 = vmatprep.subr.bf16.mxu0 0
      %1988 = vmatpush1.bf16.msra.mxu0 %v1964
      %1989 = vmatprep.subr.bf16.mxu0 0
      %1990 = vmatpush1.bf16.msra.mxu0 0
      %1991 = vmatprep.subr.bf16.mxu0 0
      %1992 = vmatpush1.bf16.msra.mxu0 0
      %1993 = vmatprep.subr.bf16.mxu0 0
      %1994 = vmatpush1.bf16.msra.mxu0 0
      %1995 = vmatprep.subr.bf16.mxu0 0
      %1996 = vmatpush1.bf16.msra.mxu0 0
      %1997 = vmatprep.subr.bf16.mxu0 0
      %1998 = vmatpush1.bf16.msra.mxu0 0
      %1999 = vmatprep.subr.bf16.mxu0 0
      %2000 = vmatpush1.bf16.msra.mxu0 0
      %2001 = vmatprep.subr.bf16.mxu0 0
      %2002 = vmatpush1.bf16.msra.mxu0 0
      %2003 = vmatprep.subr.bf16.mxu0 0
      %2004 = vmatpush1.bf16.msra.mxu0 0
      %2005 = vmatprep.subr.bf16.mxu0 0
      %2006 = vmatpush1.bf16.msra.mxu0 0
      %2007 = vmatprep.subr.bf16.mxu0 0
      %2008 = vmatpush1.bf16.msra.mxu0 0
      %2009 = vmatprep.subr.bf16.mxu0 0
      %2010 = vmatpush1.bf16.msra.mxu0 0
      %2011 = vmatprep.subr.bf16.mxu0 0
      %2012 = vmatpush1.bf16.msra.mxu0 0
      %2013 = vmatprep.mubr.bf16.mxu0 0
      %2014 = vmatmul.mubr.bf16.gmra.mrb[0].mxu0 %v1970
      %v2015 = vpop.f32.mrb[0].mxu0
      %v2016 = vadd.f32 0.0, %v2015
      %v2017 = vpop.f32.mrb[0].mxu0
      %v2018 = vpop.f32.mrb[0].mxu0
      %v2019 = vadd.f32 0.0, %v2018
      %v2020 = vpop.f32.mrb[0].mxu0
      %2021 = vmatprep.mubr.bf16.mxu0 0
      %2022 = vmatmul.mubr.bf16.gmra.mrb[0].mxu0 %v1973
      %v2023 = vpop.f32.mrb[0].mxu0
      %v2024 = vadd.f32 0.0, %v2023
      %v2025 = vpop.f32.mrb[0].mxu0
      %v2026 = vpop.f32.mrb[0].mxu0
      %v2027 = vadd.f32 0.0, %v2026
      %v2028 = vpop.f32.mrb[0].mxu0
      %2029 = vmatprep.mubr.bf16.mxu0 0
      %2030 = vmatmul.mubr.bf16.gmra.mrb[0].mxu0 %v1976
      %v2031 = vpop.f32.mrb[0].mxu0
      %v2032 = vadd.f32 0.0, %v2031
      %v2033 = vpop.f32.mrb[0].mxu0
      %v2034 = vpop.f32.mrb[0].mxu0
      %v2035 = vadd.f32 0.0, %v2034
      %v2036 = vpop.f32.mrb[0].mxu0
      %2037 = vmatprep.mubr.bf16.mxu0 0
      %2038 = vmatmul.mubr.bf16.gmra.mrb[0].mxu0 %v1979
      %v2039 = vpop.f32.mrb[0].mxu0
      %v2040 = vadd.f32 0.0, %v2039
      %v2041 = vpop.f32.mrb[0].mxu0
      %v2042 = vpop.f32.mrb[0].mxu0
      %v2043 = vadd.f32 0.0, %v2042
      %v2044 = vpop.f32.mrb[0].mxu0
      %2045 = vdwg.mxu0
      %2046 = vrot.lane.b32.xlu0 %v1171, 64
      %v2047 = vpop.permute.xlu0 %2046
      %2048 = vrot.lane.b32.xlu0 %v1172, 64
      %v2049 = vpop.permute.xlu0 %2048
      %2050 = vrot.lane.b32.xlu0 %v1173, 64
      %v2051 = vpop.permute.xlu0 %2050
      %2052 = vrot.lane.b32.xlu0 %v1174, 64
      %v2053 = vpop.permute.xlu0 %2052
      %v2059 = vsel %vm1588, %v1945, 0
      %v2062 = vsel %vm1588, %v1946, 0
      %v2065 = vsel %vm1588, %v1947, 0
      %v2068 = vsel %vm1588, %v1948, 0
      %2070 = vmatprep.subr.bf16.mxu0 0
      %2071 = vmatpush1.bf16.msra.mxu0 %v2047
      %2072 = vmatprep.subr.bf16.mxu0 0
      %2073 = vmatpush1.bf16.msra.mxu0 %v2049
      %2074 = vmatprep.subr.bf16.mxu0 0
      %2075 = vmatpush1.bf16.msra.mxu0 %v2051
      %2076 = vmatprep.subr.bf16.mxu0 0
      %2077 = vmatpush1.bf16.msra.mxu0 %v2053
      %2078 = vmatprep.subr.bf16.mxu0 0
      %2079 = vmatpush1.bf16.msra.mxu0 0
      %2080 = vmatprep.subr.bf16.mxu0 0
      %2081 = vmatpush1.bf16.msra.mxu0 0
      %2082 = vmatprep.subr.bf16.mxu0 0
      %2083 = vmatpush1.bf16.msra.mxu0 0
      %2084 = vmatprep.subr.bf16.mxu0 0
      %2085 = vmatpush1.bf16.msra.mxu0 0
      %2086 = vmatprep.subr.bf16.mxu0 0
      %2087 = vmatpush1.bf16.msra.mxu0 0
      %2088 = vmatprep.subr.bf16.mxu0 0
      %2089 = vmatpush1.bf16.msra.mxu0 0
      %2090 = vmatprep.subr.bf16.mxu0 0
      %2091 = vmatpush1.bf16.msra.mxu0 0
      %2092 = vmatprep.subr.bf16.mxu0 0
      %2093 = vmatpush1.bf16.msra.mxu0 0
      %2094 = vmatprep.subr.bf16.mxu0 0
      %2095 = vmatpush1.bf16.msra.mxu0 0
      %2096 = vmatprep.subr.bf16.mxu0 0
      %2097 = vmatpush1.bf16.msra.mxu0 0
      %2098 = vmatprep.subr.bf16.mxu0 0
      %2099 = vmatpush1.bf16.msra.mxu0 0
      %2100 = vmatprep.subr.bf16.mxu0 0
      %2101 = vmatpush1.bf16.msra.mxu0 0
      %2102 = vmatprep.mubr.bf16.mxu0 0
      %2103 = vmatmul.mubr.bf16.gmra.mrb[0].mxu0 %v2059
      %v2104 = vpop.f32.mrb[0].mxu0
      %v2105 = vadd.f32 0.0, %v2104
      %v2106 = vpop.f32.mrb[0].mxu0
      %v2107 = vpop.f32.mrb[0].mxu0
      %v2108 = vadd.f32 0.0, %v2107
      %v2109 = vpop.f32.mrb[0].mxu0
      %2110 = vmatprep.mubr.bf16.mxu0 0
      %2111 = vmatmul.mubr.bf16.gmra.mrb[0].mxu0 %v2062
      %v2112 = vpop.f32.mrb[0].mxu0
      %v2113 = vadd.f32 0.0, %v2112
      %v2114 = vpop.f32.mrb[0].mxu0
      %v2115 = vpop.f32.mrb[0].mxu0
      %v2116 = vadd.f32 0.0, %v2115
      %v2117 = vpop.f32.mrb[0].mxu0
      %2118 = vmatprep.mubr.bf16.mxu0 0
      %2119 = vmatmul.mubr.bf16.gmra.mrb[0].mxu0 %v2065
      %v2120 = vpop.f32.mrb[0].mxu0
      %v2121 = vadd.f32 0.0, %v2120
      %v2122 = vpop.f32.mrb[0].mxu0
      %v2123 = vpop.f32.mrb[0].mxu0
      %v2124 = vadd.f32 0.0, %v2123
      %v2125 = vpop.f32.mrb[0].mxu0
      %2126 = vmatprep.mubr.bf16.mxu0 0
      %2127 = vmatmul.mubr.bf16.gmra.mrb[0].mxu0 %v2068
      %v2128 = vpop.f32.mrb[0].mxu0
      %v2129 = vadd.f32 0.0, %v2128
      %v2130 = vpop.f32.mrb[0].mxu0
      %v2131 = vpop.f32.mrb[0].mxu0
      %v2132 = vadd.f32 0.0, %v2131
      %v2133 = vpop.f32.mrb[0].mxu0
      %2134 = vdwg.mxu0
      %2135 = vrot.lane.b32.xlu0 %v1175, 64
      %v2136 = vpop.permute.xlu0 %2135
      %2137 = vrot.lane.b32.xlu0 %v1176, 64
      %v2138 = vpop.permute.xlu0 %2137
      %2139 = vrot.lane.b32.xlu0 %v1177, 64
      %v2140 = vpop.permute.xlu0 %2139
      %2141 = vrot.lane.b32.xlu0 %v1178, 64
      %v2142 = vpop.permute.xlu0 %2141
      %v2148 = vsel %vm1588, %v1949, 0
      %v2151 = vsel %vm1588, %v1950, 0
      %v2154 = vsel %vm1588, %v1951, 0
      %v2157 = vsel %vm1588, %v1952, 0
      %2159 = vmatprep.subr.bf16.mxu0 0
      %2160 = vmatpush1.bf16.msra.mxu0 %v2136
      %2161 = vmatprep.subr.bf16.mxu0 0
      %2162 = vmatpush1.bf16.msra.mxu0 %v2138
      %2163 = vmatprep.subr.bf16.mxu0 0
      %2164 = vmatpush1.bf16.msra.mxu0 %v2140
      %2165 = vmatprep.subr.bf16.mxu0 0
      %2166 = vmatpush1.bf16.msra.mxu0 %v2142
      %2167 = vmatprep.subr.bf16.mxu0 0
      %2168 = vmatpush1.bf16.msra.mxu0 0
      %2169 = vmatprep.subr.bf16.mxu0 0
      %2170 = vmatpush1.bf16.msra.mxu0 0
      %2171 = vmatprep.subr.bf16.mxu0 0
      %2172 = vmatpush1.bf16.msra.mxu0 0
      %2173 = vmatprep.subr.bf16.mxu0 0
      %2174 = vmatpush1.bf16.msra.mxu0 0
      %2175 = vmatprep.subr.bf16.mxu0 0
      %2176 = vmatpush1.bf16.msra.mxu0 0
      %2177 = vmatprep.subr.bf16.mxu0 0
      %2178 = vmatpush1.bf16.msra.mxu0 0
      %2179 = vmatprep.subr.bf16.mxu0 0
      %2180 = vmatpush1.bf16.msra.mxu0 0
      %2181 = vmatprep.subr.bf16.mxu0 0
      %2182 = vmatpush1.bf16.msra.mxu0 0
      %2183 = vmatprep.subr.bf16.mxu0 0
      %2184 = vmatpush1.bf16.msra.mxu0 0
      %2185 = vmatprep.subr.bf16.mxu0 0
      %2186 = vmatpush1.bf16.msra.mxu0 0
      %2187 = vmatprep.subr.bf16.mxu0 0
      %2188 = vmatpush1.bf16.msra.mxu0 0
      %2189 = vmatprep.subr.bf16.mxu0 0
      %2190 = vmatpush1.bf16.msra.mxu0 0
      %2191 = vmatprep.mubr.bf16.mxu0 0
      %2192 = vmatmul.mubr.bf16.gmra.mrb[0].mxu0 %v2148
      %v2193 = vpop.f32.mrb[0].mxu0
      %v2194 = vadd.f32 0.0, %v2193
      %v2195 = vpop.f32.mrb[0].mxu0
      %v2196 = vpop.f32.mrb[0].mxu0
      %v2197 = vadd.f32 0.0, %v2196
      %v2198 = vpop.f32.mrb[0].mxu0
      %2199 = vmatprep.mubr.bf16.mxu0 0
      %2200 = vmatmul.mubr.bf16.gmra.mrb[0].mxu0 %v2151
      %v2201 = vpop.f32.mrb[0].mxu0
      %v2202 = vadd.f32 0.0, %v2201
      %v2203 = vpop.f32.mrb[0].mxu0
      %v2204 = vpop.f32.mrb[0].mxu0
      %v2205 = vadd.f32 0.0, %v2204
      %v2206 = vpop.f32.mrb[0].mxu0
      %2207 = vmatprep.mubr.bf16.mxu0 0
      %2208 = vmatmul.mubr.bf16.gmra.mrb[0].mxu0 %v2154
      %v2209 = vpop.f32.mrb[0].mxu0
      %v2210 = vadd.f32 0.0, %v2209
      %v2211 = vpop.f32.mrb[0].mxu0
      %v2212 = vpop.f32.mrb[0].mxu0
      %v2213 = vadd.f32 0.0, %v2212
      %v2214 = vpop.f32.mrb[0].mxu0
      %2215 = vmatprep.mubr.bf16.mxu0 0
      %2216 = vmatmul.mubr.bf16.gmra.mrb[0].mxu0 %v2157
      %v2217 = vpop.f32.mrb[0].mxu0
      %v2218 = vadd.f32 0.0, %v2217
      %v2219 = vpop.f32.mrb[0].mxu0
      %v2220 = vpop.f32.mrb[0].mxu0
      %v2221 = vadd.f32 0.0, %v2220
      %v2222 = vpop.f32.mrb[0].mxu0
      %2223 = vdwg.mxu0
      %2224 = vrot.lane.b32.xlu0 %v1179, 64
      %v2225 = vpop.permute.xlu0 %2224
      %2226 = vrot.lane.b32.xlu0 %v1180, 64
      %v2227 = vpop.permute.xlu0 %2226
      %2228 = vrot.lane.b32.xlu0 %v1181, 64
      %v2229 = vpop.permute.xlu0 %2228
      %2230 = vrot.lane.b32.xlu0 %v1182, 64
      %v2231 = vpop.permute.xlu0 %2230
      %v2237 = vsel %vm1588, %v1953, 0
      %v2240 = vsel %vm1588, %v1954, 0
      %v2243 = vsel %vm1588, %v1955, 0
      %v2246 = vsel %vm1588, %v1956, 0
      %2248 = vmatprep.subr.bf16.mxu0 0
      %2249 = vmatpush1.bf16.msra.mxu0 %v2225
      %2250 = vmatprep.subr.bf16.mxu0 0
      %2251 = vmatpush1.bf16.msra.mxu0 %v2227
      %2252 = vmatprep.subr.bf16.mxu0 0
      %2253 = vmatpush1.bf16.msra.mxu0 %v2229
      %2254 = vmatprep.subr.bf16.mxu0 0
      %2255 = vmatpush1.bf16.msra.mxu0 %v2231
      %2256 = vmatprep.subr.bf16.mxu0 0
      %2257 = vmatpush1.bf16.msra.mxu0 0
      %2258 = vmatprep.subr.bf16.mxu0 0
      %2259 = vmatpush1.bf16.msra.mxu0 0
      %2260 = vmatprep.subr.bf16.mxu0 0
      %2261 = vmatpush1.bf16.msra.mxu0 0
      %2262 = vmatprep.subr.bf16.mxu0 0
      %2263 = vmatpush1.bf16.msra.mxu0 0
      %2264 = vmatprep.subr.bf16.mxu0 0
      %2265 = vmatpush1.bf16.msra.mxu0 0
      %2266 = vmatprep.subr.bf16.mxu0 0
      %2267 = vmatpush1.bf16.msra.mxu0 0
      %2268 = vmatprep.subr.bf16.mxu0 0
      %2269 = vmatpush1.bf16.msra.mxu0 0
      %2270 = vmatprep.subr.bf16.mxu0 0
      %2271 = vmatpush1.bf16.msra.mxu0 0
      %2272 = vmatprep.subr.bf16.mxu0 0
      %2273 = vmatpush1.bf16.msra.mxu0 0
      %2274 = vmatprep.subr.bf16.mxu0 0
      %2275 = vmatpush1.bf16.msra.mxu0 0
      %2276 = vmatprep.subr.bf16.mxu0 0
      %2277 = vmatpush1.bf16.msra.mxu0 0
      %2278 = vmatprep.subr.bf16.mxu0 0
      %2279 = vmatpush1.bf16.msra.mxu0 0
      %2280 = vmatprep.mubr.bf16.mxu0 0
      %2281 = vmatmul.mubr.bf16.gmra.mrb[0].mxu0 %v2237
      %v2282 = vpop.f32.mrb[0].mxu0
      %v2283 = vadd.f32 0.0, %v2282
      %v2284 = vpop.f32.mrb[0].mxu0
      %v2285 = vpop.f32.mrb[0].mxu0
      %v2286 = vadd.f32 0.0, %v2285
      %v2287 = vpop.f32.mrb[0].mxu0
      %2288 = vmatprep.mubr.bf16.mxu0 0
      %2289 = vmatmul.mubr.bf16.gmra.mrb[0].mxu0 %v2240
      %v2290 = vpop.f32.mrb[0].mxu0
      %v2291 = vadd.f32 0.0, %v2290
      %v2292 = vpop.f32.mrb[0].mxu0
      %v2293 = vpop.f32.mrb[0].mxu0
      %v2294 = vadd.f32 0.0, %v2293
      %v2295 = vpop.f32.mrb[0].mxu0
      %2296 = vmatprep.mubr.bf16.mxu0 0
      %2297 = vmatmul.mubr.bf16.gmra.mrb[0].mxu0 %v2243
      %v2298 = vpop.f32.mrb[0].mxu0
      %v2299 = vadd.f32 0.0, %v2298
      %v2300 = vpop.f32.mrb[0].mxu0
      %v2301 = vpop.f32.mrb[0].mxu0
      %v2302 = vadd.f32 0.0, %v2301
      %v2303 = vpop.f32.mrb[0].mxu0
      %2304 = vmatprep.mubr.bf16.mxu0 0
      %2305 = vmatmul.mubr.bf16.gmra.mrb[0].mxu0 %v2246
      %v2306 = vpop.f32.mrb[0].mxu0
      %v2307 = vadd.f32 0.0, %v2306
      %v2308 = vpop.f32.mrb[0].mxu0
      %v2309 = vpop.f32.mrb[0].mxu0
      %v2310 = vadd.f32 0.0, %v2309
      %v2311 = vpop.f32.mrb[0].mxu0
      %2312 = vdwg.mxu0
      %2321 = vrot.lane.b32.xlu0 %v2105, 8
      %v2322 = vpop.permute.xlu0 %2321
      %2323 = vrot.lane.b32.xlu0 %v2108, 8
      %v2324 = vpop.permute.xlu0 %2323
      %2325 = vrot.lane.b32.xlu0 %v2113, 8
      %v2326 = vpop.permute.xlu0 %2325
      %2327 = vrot.lane.b32.xlu0 %v2116, 8
      %v2328 = vpop.permute.xlu0 %2327
      %2329 = vrot.lane.b32.xlu0 %v2121, 8
      %v2330 = vpop.permute.xlu0 %2329
      %2331 = vrot.lane.b32.xlu0 %v2124, 8
      %v2332 = vpop.permute.xlu0 %2331
      %2333 = vrot.lane.b32.xlu0 %v2129, 8
      %v2334 = vpop.permute.xlu0 %2333
      %2335 = vrot.lane.b32.xlu0 %v2132, 8
      %v2336 = vpop.permute.xlu0 %2335
      %2353 = vrot.lane.b32.xlu0 %v2194, 16
      %v2354 = vpop.permute.xlu0 %2353
      %2355 = vrot.lane.b32.xlu0 %v2197, 16
      %v2356 = vpop.permute.xlu0 %2355
      %2357 = vrot.lane.b32.xlu0 %v2202, 16
      %v2358 = vpop.permute.xlu0 %2357
      %2359 = vrot.lane.b32.xlu0 %v2205, 16
      %v2360 = vpop.permute.xlu0 %2359
      %2361 = vrot.lane.b32.xlu0 %v2210, 16
      %v2362 = vpop.permute.xlu0 %2361
      %2363 = vrot.lane.b32.xlu0 %v2213, 16
      %v2364 = vpop.permute.xlu0 %2363
      %2365 = vrot.lane.b32.xlu0 %v2218, 16
      %v2366 = vpop.permute.xlu0 %2365
      %2367 = vrot.lane.b32.xlu0 %v2221, 16
      %v2368 = vpop.permute.xlu0 %2367
      %2385 = vrot.lane.b32.xlu0 %v2283, 24
      %v2386 = vpop.permute.xlu0 %2385
      %2387 = vrot.lane.b32.xlu0 %v2286, 24
      %v2388 = vpop.permute.xlu0 %2387
      %2389 = vrot.lane.b32.xlu0 %v2291, 24
      %v2390 = vpop.permute.xlu0 %2389
      %2391 = vrot.lane.b32.xlu0 %v2294, 24
      %v2392 = vpop.permute.xlu0 %2391
      %2393 = vrot.lane.b32.xlu0 %v2299, 24
      %v2394 = vpop.permute.xlu0 %2393
      %2395 = vrot.lane.b32.xlu0 %v2302, 24
      %v2396 = vpop.permute.xlu0 %2395
      %2397 = vrot.lane.b32.xlu0 %v2307, 24
      %v2398 = vpop.permute.xlu0 %2397
      %2399 = vrot.lane.b32.xlu0 %v2310, 24
      %v2400 = vpop.permute.xlu0 %2399
      %v2409 = vsel %vm1195, %v2016, %v2322
      %v2410 = vsel %vm1195, %v2019, %v2324
      %v2411 = vsel %vm1195, %v2024, %v2326
      %v2412 = vsel %vm1195, %v2027, %v2328
      %v2413 = vsel %vm1195, %v2032, %v2330
      %v2414 = vsel %vm1195, %v2035, %v2332
      %v2415 = vsel %vm1195, %v2040, %v2334
      %v2416 = vsel %vm1195, %v2043, %v2336
      %vm2417 = vcmask 130048
      %v2418 = vsel %vm2417, %v2409, %v2354
      %v2419 = vsel %vm2417, %v2410, %v2356
      %v2420 = vsel %vm2417, %v2411, %v2358
      %v2421 = vsel %vm2417, %v2412, %v2360
      %v2422 = vsel %vm2417, %v2413, %v2362
      %v2423 = vsel %vm2417, %v2414, %v2364
      %v2424 = vsel %vm2417, %v2415, %v2366
      %v2425 = vsel %vm2417, %v2416, %v2368
      %vm2426 = vcmask 195584
      %v2427 = vsel %vm2426, %v2418, %v2386
      %v2428 = vsel %vm2426, %v2419, %v2388
      %v2429 = vsel %vm2426, %v2420, %v2390
      %v2430 = vsel %vm2426, %v2421, %v2392
      %v2431 = vsel %vm2426, %v2422, %v2394
      %v2432 = vsel %vm2426, %v2423, %v2396
      %v2433 = vsel %vm2426, %v2424, %v2398
      %v2434 = vsel %vm2426, %v2425, %v2400
      %v2435 = vpack.c.bf16 %v2428, %v2427
      %v2436 = vpack.c.bf16 %v2430, %v2429
      %v2437 = vpack.c.bf16 %v2432, %v2431
      %v2438 = vpack.c.bf16 %v2434, %v2433
      %v2439 = vld [vmem:[%s7] sm:$0xf]
      %v2440 = vld [vmem:[%s7 + $0x4] sm:$0xf]
      %v2441 = vld [vmem:[%s7 + $0x8] sm:$0xf]
      %v2442 = vld [vmem:[%s7 + $0xc] sm:$0xf]
      %v2443 = vld [vmem:[%s8] sm:$0x1]
      %v2445 = vlaneseq
      %v2446 = vshrl.u32 %v2445, 7
      %v2447 = vsub.s32 0, %v2446
      %v2448 = vrot.slane %v2443, %v2447
      %v2454 = vunpack.c.l.b16 %v2439
      %v2455 = vunpack.c.l.b16 %v2440
      %v2456 = vunpack.c.l.b16 %v2441
      %v2457 = vunpack.c.l.b16 %v2442
      %v2458 = vpack.c.b16 %v2455, %v2454
      %v2459 = vpack.c.b16 %v2457, %v2456
      %v2463 = vsel %vm792, %v2435, 0
      %v2466 = vsel %vm792, %v2436, 0
      %v2469 = vsel %vm792, %v2437, 0
      %v2472 = vsel %vm792, %v2438, 0
      %2474 = vmatprep.subr.bf16.mxu0 0
      %2475 = vmatpush1.bf16.msra.mxu0 %v2458
      %2476 = vmatprep.subr.bf16.mxu0 0
      %2477 = vmatpush1.bf16.msra.mxu0 %v2459
      %2478 = vmatprep.subr.bf16.mxu0 0
      %2479 = vmatpush1.bf16.msra.mxu0 0
      %2480 = vmatprep.subr.bf16.mxu0 0
      %2481 = vmatpush1.bf16.msra.mxu0 0
      %2482 = vmatprep.subr.bf16.mxu0 0
      %2483 = vmatpush1.bf16.msra.mxu0 0
      %2484 = vmatprep.subr.bf16.mxu0 0
      %2485 = vmatpush1.bf16.msra.mxu0 0
      %2486 = vmatprep.subr.bf16.mxu0 0
      %2487 = vmatpush1.bf16.msra.mxu0 0
      %2488 = vmatprep.subr.bf16.mxu0 0
      %2489 = vmatpush1.bf16.msra.mxu0 0
      %2490 = vmatprep.subr.bf16.mxu0 0
      %2491 = vmatpush1.bf16.msra.mxu0 0
      %2492 = vmatprep.subr.bf16.mxu0 0
      %2493 = vmatpush1.bf16.msra.mxu0 0
      %2494 = vmatprep.subr.bf16.mxu0 0
      %2495 = vmatpush1.bf16.msra.mxu0 0
      %2496 = vmatprep.subr.bf16.mxu0 0
      %2497 = vmatpush1.bf16.msra.mxu0 0
      %2498 = vmatprep.subr.bf16.mxu0 0
      %2499 = vmatpush1.bf16.msra.mxu0 0
      %2500 = vmatprep.subr.bf16.mxu0 0
      %2501 = vmatpush1.bf16.msra.mxu0 0
      %2502 = vmatprep.subr.bf16.mxu0 0
      %2503 = vmatpush1.bf16.msra.mxu0 0
      %2504 = vmatprep.subr.bf16.mxu0 0
      %2505 = vmatpush1.bf16.msra.mxu0 0
      %2506 = vmatprep.mubr.bf16.mxu0 0
      %2507 = vmatmul.mubr.bf16.gmra.mrb[0].mxu0 %v2463
      %v2508 = vpop.f32.mrb[0].mxu0
      %v2509 = vadd.f32 %v2448, %v2508
      %v2510 = vpop.f32.mrb[0].mxu0
      %v2511 = vpop.f32.mrb[0].mxu0
      %v2512 = vadd.f32 %v2448, %v2511
      %v2513 = vpop.f32.mrb[0].mxu0
      %2514 = vmatprep.mubr.bf16.mxu0 0
      %2515 = vmatmul.mubr.bf16.gmra.mrb[0].mxu0 %v2466
      %v2516 = vpop.f32.mrb[0].mxu0
      %v2517 = vadd.f32 %v2448, %v2516
      %v2518 = vpop.f32.mrb[0].mxu0
      %v2519 = vpop.f32.mrb[0].mxu0
      %v2520 = vadd.f32 %v2448, %v2519
      %v2521 = vpop.f32.mrb[0].mxu0
      %2522 = vmatprep.mubr.bf16.mxu0 0
      %2523 = vmatmul.mubr.bf16.gmra.mrb[0].mxu0 %v2469
      %v2524 = vpop.f32.mrb[0].mxu0
      %v2525 = vadd.f32 %v2448, %v2524
      %v2526 = vpop.f32.mrb[0].mxu0
      %v2527 = vpop.f32.mrb[0].mxu0
      %v2528 = vadd.f32 %v2448, %v2527
      %v2529 = vpop.f32.mrb[0].mxu0
      %2530 = vmatprep.mubr.bf16.mxu0 0
      %2531 = vmatmul.mubr.bf16.gmra.mrb[0].mxu0 %v2472
      %v2532 = vpop.f32.mrb[0].mxu0
      %v2533 = vadd.f32 %v2448, %v2532
      %v2534 = vpop.f32.mrb[0].mxu0
      %v2535 = vpop.f32.mrb[0].mxu0
      %v2536 = vadd.f32 %v2448, %v2535
      %v2537 = vpop.f32.mrb[0].mxu0
      %2538 = vdwg.mxu0
      %v2539 = vadd.f32 %v782, %v2509
      %v2540 = vadd.f32 %v783, %v2512
      %v2541 = vadd.f32 %v784, %v2517
      %v2542 = vadd.f32 %v785, %v2520
      %v2543 = vadd.f32 %v786, %v2525
      %v2544 = vadd.f32 %v787, %v2528
      %v2545 = vadd.f32 %v788, %v2533
      %v2546 = vadd.f32 %v789, %v2536
      %v2547 = vld [vmem:[%s9] sm:$0x1]
      %v2548 = vld [vmem:[%s10] sm:$0x1]
      %v2549 = vsel %vm792, %v2539, 0.0
      %2550 = vadd.xlane.f32.xlu0 %v2549
      %v2551 = vpop.xlane.xlu0 %2550
      %v2552 = vsel %vm792, %v2540, 0.0
      %2553 = vadd.xlane.f32.xlu0 %v2552
      %v2554 = vpop.xlane.xlu0 %2553
      %v2555 = vsel %vm792, %v2541, 0.0
      %2556 = vadd.xlane.f32.xlu0 %v2555
      %v2557 = vpop.xlane.xlu0 %2556
      %v2558 = vsel %vm792, %v2542, 0.0
      %2559 = vadd.xlane.f32.xlu0 %v2558
      %v2560 = vpop.xlane.xlu0 %2559
      %v2561 = vsel %vm792, %v2543, 0.0
      %2562 = vadd.xlane.f32.xlu0 %v2561
      %v2563 = vpop.xlane.xlu0 %2562
      %v2564 = vsel %vm792, %v2544, 0.0
      %2565 = vadd.xlane.f32.xlu0 %v2564
      %v2566 = vpop.xlane.xlu0 %2565
      %v2567 = vsel %vm792, %v2545, 0.0
      %2568 = vadd.xlane.f32.xlu0 %v2567
      %v2569 = vpop.xlane.xlu0 %2568
      %v2570 = vsel %vm792, %v2546, 0.0
      %2571 = vadd.xlane.f32.xlu0 %v2570
      %v2572 = vpop.xlane.xlu0 %2571
      %v2573 = vmul.f32 %v2551, %v817
      %v2574 = vmul.f32 %v2554, %v817
      %v2575 = vmul.f32 %v2557, %v817
      %v2576 = vmul.f32 %v2560, %v817
      %v2577 = vmul.f32 %v2563, %v817
      %v2578 = vmul.f32 %v2566, %v817
      %v2579 = vmul.f32 %v2569, %v817
      %v2580 = vmul.f32 %v2572, %v817
      %v2581 = vsub.f32 %v2539, %v2573
      %v2582 = vsub.f32 %v2540, %v2574
      %v2583 = vsub.f32 %v2541, %v2575
      %v2584 = vsub.f32 %v2542, %v2576
      %v2585 = vsub.f32 %v2543, %v2577
      %v2586 = vsub.f32 %v2544, %v2578
      %v2587 = vsub.f32 %v2545, %v2579
      %v2588 = vsub.f32 %v2546, %v2580
      %v2589 = vmul.f32 %v2581, %v2581
      %v2590 = vmul.f32 %v2582, %v2582
      %v2591 = vmul.f32 %v2583, %v2583
      %v2592 = vmul.f32 %v2584, %v2584
      %v2593 = vmul.f32 %v2585, %v2585
      %v2594 = vmul.f32 %v2586, %v2586
      %v2595 = vmul.f32 %v2587, %v2587
      %v2596 = vmul.f32 %v2588, %v2588
      %v2597 = vsel %vm792, %v2589, 0.0
      %2598 = vadd.xlane.f32.xlu0 %v2597
      %v2599 = vpop.xlane.xlu0 %2598
      %v2600 = vsel %vm792, %v2590, 0.0
      %2601 = vadd.xlane.f32.xlu0 %v2600
      %v2602 = vpop.xlane.xlu0 %2601
      %v2603 = vsel %vm792, %v2591, 0.0
      %2604 = vadd.xlane.f32.xlu0 %v2603
      %v2605 = vpop.xlane.xlu0 %2604
      %v2606 = vsel %vm792, %v2592, 0.0
      %2607 = vadd.xlane.f32.xlu0 %v2606
      %v2608 = vpop.xlane.xlu0 %2607
      %v2609 = vsel %vm792, %v2593, 0.0
      %2610 = vadd.xlane.f32.xlu0 %v2609
      %v2611 = vpop.xlane.xlu0 %2610
      %v2612 = vsel %vm792, %v2594, 0.0
      %2613 = vadd.xlane.f32.xlu0 %v2612
      %v2614 = vpop.xlane.xlu0 %2613
      %v2615 = vsel %vm792, %v2595, 0.0
      %2616 = vadd.xlane.f32.xlu0 %v2615
      %v2617 = vpop.xlane.xlu0 %2616
      %v2618 = vsel %vm792, %v2596, 0.0
      %2619 = vadd.xlane.f32.xlu0 %v2618
      %v2620 = vpop.xlane.xlu0 %2619
      %v2621 = vmul.f32 %v2599, %v866
      %v2622 = vmul.f32 %v2602, %v866
      %v2623 = vmul.f32 %v2605, %v866
      %v2624 = vmul.f32 %v2608, %v866
      %v2625 = vmul.f32 %v2611, %v866
      %v2626 = vmul.f32 %v2614, %v866
      %v2627 = vmul.f32 %v2617, %v866
      %v2628 = vmul.f32 %v2620, %v866
      %v2629 = vrsqrt.pop %v2621
      %v2630 = vmul.f32 %v2621, %v2629
      %vm2631 = vcmp.eq.f32.partialorder %v2621, inf
      %v2632 = vsel %vm2631, %v2621, %v2630
      %vm2633 = vcmp.eq.f32.partialorder %v2621, 0.0
      %v2634 = vand.u32 %v2621, 2147483648
      %v2635 = vsel %vm2633, %v2634, %v2632
      %v2636 = vrsqrt.pop %v2622
      %v2637 = vmul.f32 %v2622, %v2636
      %vm2638 = vcmp.eq.f32.partialorder %v2622, inf
      %v2639 = vsel %vm2638, %v2622, %v2637
      %vm2640 = vcmp.eq.f32.partialorder %v2622, 0.0
      %v2641 = vand.u32 %v2622, 2147483648
      %v2642 = vsel %vm2640, %v2641, %v2639
      %v2643 = vrsqrt.pop %v2623
      %v2644 = vmul.f32 %v2623, %v2643
      %vm2645 = vcmp.eq.f32.partialorder %v2623, inf
      %v2646 = vsel %vm2645, %v2623, %v2644
      %vm2647 = vcmp.eq.f32.partialorder %v2623, 0.0
      %v2648 = vand.u32 %v2623, 2147483648
      %v2649 = vsel %vm2647, %v2648, %v2646
      %v2650 = vrsqrt.pop %v2624
      %v2651 = vmul.f32 %v2624, %v2650
      %vm2652 = vcmp.eq.f32.partialorder %v2624, inf
      %v2653 = vsel %vm2652, %v2624, %v2651
      %vm2654 = vcmp.eq.f32.partialorder %v2624, 0.0
      %v2655 = vand.u32 %v2624, 2147483648
      %v2656 = vsel %vm2654, %v2655, %v2653
      %v2657 = vrsqrt.pop %v2625
      %v2658 = vmul.f32 %v2625, %v2657
      %vm2659 = vcmp.eq.f32.partialorder %v2625, inf
      %v2660 = vsel %vm2659, %v2625, %v2658
      %vm2661 = vcmp.eq.f32.partialorder %v2625, 0.0
      %v2662 = vand.u32 %v2625, 2147483648
      %v2663 = vsel %vm2661, %v2662, %v2660
      %v2664 = vrsqrt.pop %v2626
      %v2665 = vmul.f32 %v2626, %v2664
      %vm2666 = vcmp.eq.f32.partialorder %v2626, inf
      %v2667 = vsel %vm2666, %v2626, %v2665
      %vm2668 = vcmp.eq.f32.partialorder %v2626, 0.0
      %v2669 = vand.u32 %v2626, 2147483648
      %v2670 = vsel %vm2668, %v2669, %v2667
      %v2671 = vrsqrt.pop %v2627
      %v2672 = vmul.f32 %v2627, %v2671
      %vm2673 = vcmp.eq.f32.partialorder %v2627, inf
      %v2674 = vsel %vm2673, %v2627, %v2672
      %vm2675 = vcmp.eq.f32.partialorder %v2627, 0.0
      %v2676 = vand.u32 %v2627, 2147483648
      %v2677 = vsel %vm2675, %v2676, %v2674
      %v2678 = vrsqrt.pop %v2628
      %v2679 = vmul.f32 %v2628, %v2678
      %vm2680 = vcmp.eq.f32.partialorder %v2628, inf
      %v2681 = vsel %vm2680, %v2628, %v2679
      %vm2682 = vcmp.eq.f32.partialorder %v2628, 0.0
      %v2683 = vand.u32 %v2628, 2147483648
      %v2684 = vsel %vm2682, %v2683, %v2681
      %v2685 = vadd.f32 %v2635, 1e-06
      %v2686 = vadd.f32 %v2642, 1e-06
      %v2687 = vadd.f32 %v2649, 1e-06
      %v2688 = vadd.f32 %v2656, 1e-06
      %v2689 = vadd.f32 %v2663, 1e-06
      %v2690 = vadd.f32 %v2670, 1e-06
      %v2691 = vadd.f32 %v2677, 1e-06
      %v2692 = vadd.f32 %v2684, 1e-06
      %v2694 = vlaneseq
      %v2695 = vshrl.u32 %v2694, 7
      %v2696 = vsub.s32 0, %v2695
      %v2697 = vrot.slane %v2547, %v2696
      %v2699 = vmul.f32 %v2697, %v2581
      %v2700 = vmul.f32 %v2697, %v2582
      %v2701 = vmul.f32 %v2697, %v2583
      %v2702 = vmul.f32 %v2697, %v2584
      %v2703 = vmul.f32 %v2697, %v2585
      %v2704 = vmul.f32 %v2697, %v2586
      %v2705 = vmul.f32 %v2697, %v2587
      %v2706 = vmul.f32 %v2697, %v2588
      %v2707 = vrcp.pop %v2685
      %v2708 = vrcp.pop %v2686
      %v2709 = vrcp.pop %v2687
      %v2710 = vrcp.pop %v2688
      %v2711 = vrcp.pop %v2689
      %v2712 = vrcp.pop %v2690
      %v2713 = vrcp.pop %v2691
      %v2714 = vrcp.pop %v2692
      %v2715 = vmul.f32 %v2699, %v2707
      %v2716 = vmul.f32 %v2700, %v2708
      %v2717 = vmul.f32 %v2701, %v2709
      %v2718 = vmul.f32 %v2702, %v2710
      %v2719 = vmul.f32 %v2703, %v2711
      %v2720 = vmul.f32 %v2704, %v2712
      %v2721 = vmul.f32 %v2705, %v2713
      %v2722 = vmul.f32 %v2706, %v2714
      %v2724 = vlaneseq
      %v2725 = vshrl.u32 %v2724, 7
      %v2726 = vsub.s32 0, %v2725
      %v2727 = vrot.slane %v2548, %v2726
      %v2729 = vadd.f32 %v2715, %v2727
      %v2730 = vadd.f32 %v2716, %v2727
      %v2731 = vadd.f32 %v2717, %v2727
      %v2732 = vadd.f32 %v2718, %v2727
      %v2733 = vadd.f32 %v2719, %v2727
      %v2734 = vadd.f32 %v2720, %v2727
      %v2735 = vadd.f32 %v2721, %v2727
      %v2736 = vadd.f32 %v2722, %v2727
      %v2737 = vpack.c.bf16 %v2730, %v2729
      %v2738 = vpack.c.bf16 %v2732, %v2731
      %v2739 = vpack.c.bf16 %v2734, %v2733
      %v2740 = vpack.c.bf16 %v2736, %v2735
      %v2741 = vld [vmem:[%s11] sm:$0xf]
      %v2742 = vld [vmem:[%s11 + $0x4] sm:$0xf]
      %v2743 = vld [vmem:[%s11 + $0x8] sm:$0xf]
      %v2744 = vld [vmem:[%s11 + $0xc] sm:$0xf]
      %v2745 = vld [vmem:[%s12] sm:$0x1]
      %v2747 = vlaneseq
      %v2748 = vshrl.u32 %v2747, 7
      %v2749 = vsub.s32 0, %v2748
      %v2750 = vrot.slane %v2745, %v2749
      %v2756 = vunpack.c.l.b16 %v2741
      %v2757 = vunpack.c.l.b16 %v2742
      %v2758 = vunpack.c.l.b16 %v2743
      %v2759 = vunpack.c.l.b16 %v2744
      %v2760 = vpack.c.b16 %v2757, %v2756
      %v2761 = vpack.c.b16 %v2759, %v2758
      %v2765 = vsel %vm792, %v2737, 0
      %v2768 = vsel %vm792, %v2738, 0
      %v2771 = vsel %vm792, %v2739, 0
      %v2774 = vsel %vm792, %v2740, 0
      %2776 = vmatprep.subr.bf16.mxu0 0
      %2777 = vmatpush1.bf16.msra.mxu0 %v2760
      %2778 = vmatprep.subr.bf16.mxu0 0
      %2779 = vmatpush1.bf16.msra.mxu0 %v2761
      %2780 = vmatprep.subr.bf16.mxu0 0
      %2781 = vmatpush1.bf16.msra.mxu0 0
      %2782 = vmatprep.subr.bf16.mxu0 0
      %2783 = vmatpush1.bf16.msra.mxu0 0
      %2784 = vmatprep.subr.bf16.mxu0 0
      %2785 = vmatpush1.bf16.msra.mxu0 0
      %2786 = vmatprep.subr.bf16.mxu0 0
      %2787 = vmatpush1.bf16.msra.mxu0 0
      %2788 = vmatprep.subr.bf16.mxu0 0
      %2789 = vmatpush1.bf16.msra.mxu0 0
      %2790 = vmatprep.subr.bf16.mxu0 0
      %2791 = vmatpush1.bf16.msra.mxu0 0
      %2792 = vmatprep.subr.bf16.mxu0 0
      %2793 = vmatpush1.bf16.msra.mxu0 0
      %2794 = vmatprep.subr.bf16.mxu0 0
      %2795 = vmatpush1.bf16.msra.mxu0 0
      %2796 = vmatprep.subr.bf16.mxu0 0
      %2797 = vmatpush1.bf16.msra.mxu0 0
      %2798 = vmatprep.subr.bf16.mxu0 0
      %2799 = vmatpush1.bf16.msra.mxu0 0
      %2800 = vmatprep.subr.bf16.mxu0 0
      %2801 = vmatpush1.bf16.msra.mxu0 0
      %2802 = vmatprep.subr.bf16.mxu0 0
      %2803 = vmatpush1.bf16.msra.mxu0 0
      %2804 = vmatprep.subr.bf16.mxu0 0
      %2805 = vmatpush1.bf16.msra.mxu0 0
      %2806 = vmatprep.subr.bf16.mxu0 0
      %2807 = vmatpush1.bf16.msra.mxu0 0
      %2808 = vmatprep.mubr.bf16.mxu0 0
      %2809 = vmatmul.mubr.bf16.gmra.mrb[0].mxu0 %v2765
      %v2810 = vpop.f32.mrb[0].mxu0
      %v2811 = vadd.f32 %v2750, %v2810
      %v2812 = vpop.f32.mrb[0].mxu0
      %v2813 = vpop.f32.mrb[0].mxu0
      %v2814 = vadd.f32 %v2750, %v2813
      %v2815 = vpop.f32.mrb[0].mxu0
      %2816 = vmatprep.mubr.bf16.mxu0 0
      %2817 = vmatmul.mubr.bf16.gmra.mrb[0].mxu0 %v2768
      %v2818 = vpop.f32.mrb[0].mxu0
      %v2819 = vadd.f32 %v2750, %v2818
      %v2820 = vpop.f32.mrb[0].mxu0
      %v2821 = vpop.f32.mrb[0].mxu0
      %v2822 = vadd.f32 %v2750, %v2821
      %v2823 = vpop.f32.mrb[0].mxu0
      %2824 = vmatprep.mubr.bf16.mxu0 0
      %2825 = vmatmul.mubr.bf16.gmra.mrb[0].mxu0 %v2771
      %v2826 = vpop.f32.mrb[0].mxu0
      %v2827 = vadd.f32 %v2750, %v2826
      %v2828 = vpop.f32.mrb[0].mxu0
      %v2829 = vpop.f32.mrb[0].mxu0
      %v2830 = vadd.f32 %v2750, %v2829
      %v2831 = vpop.f32.mrb[0].mxu0
      %2832 = vmatprep.mubr.bf16.mxu0 0
      %2833 = vmatmul.mubr.bf16.gmra.mrb[0].mxu0 %v2774
      %v2834 = vpop.f32.mrb[0].mxu0
      %v2835 = vadd.f32 %v2750, %v2834
      %v2836 = vpop.f32.mrb[0].mxu0
      %v2837 = vpop.f32.mrb[0].mxu0
      %v2838 = vadd.f32 %v2750, %v2837
      %v2839 = vpop.f32.mrb[0].mxu0
      %2840 = vdwg.mxu0
      %v2841 = vmax.f32 %v2811, 0.0
      %v2842 = vmax.f32 %v2814, 0.0
      %v2843 = vmax.f32 %v2819, 0.0
      %v2844 = vmax.f32 %v2822, 0.0
      %v2845 = vmax.f32 %v2827, 0.0
      %v2846 = vmax.f32 %v2830, 0.0
      %v2847 = vmax.f32 %v2835, 0.0
      %v2848 = vmax.f32 %v2838, 0.0
      %v2849 = vpack.c.bf16 %v2842, %v2841
      %v2850 = vpack.c.bf16 %v2844, %v2843
      %v2851 = vpack.c.bf16 %v2846, %v2845
      %v2852 = vpack.c.bf16 %v2848, %v2847
      %v2853 = vld [vmem:[%s13] sm:$0xf]
      %v2854 = vld [vmem:[%s13 + $0x4] sm:$0xf]
      %v2855 = vld [vmem:[%s13 + $0x8] sm:$0xf]
      %v2856 = vld [vmem:[%s13 + $0xc] sm:$0xf]
      %v2857 = vld [vmem:[%s13 + $0x10] sm:$0xf]
      %v2858 = vld [vmem:[%s13 + $0x14] sm:$0xf]
      %v2859 = vld [vmem:[%s13 + $0x18] sm:$0xf]
      %v2860 = vld [vmem:[%s13 + $0x1c] sm:$0xf]
      %v2861 = vld [vmem:[%s14] sm:$0x1]
      %v2863 = vlaneseq
      %v2864 = vshrl.u32 %v2863, 7
      %v2865 = vsub.s32 0, %v2864
      %v2866 = vrot.slane %v2861, %v2865
      %v2876 = vunpack.c.l.b16 %v2853
      %v2877 = vunpack.c.l.b16 %v2854
      %v2878 = vunpack.c.l.b16 %v2855
      %v2879 = vunpack.c.l.b16 %v2856
      %v2880 = vunpack.c.l.b16 %v2857
      %v2881 = vunpack.c.l.b16 %v2858
      %v2882 = vunpack.c.l.b16 %v2859
      %v2883 = vunpack.c.l.b16 %v2860
      %v2884 = vpack.c.b16 %v2877, %v2876
      %v2885 = vpack.c.b16 %v2879, %v2878
      %v2886 = vpack.c.b16 %v2881, %v2880
      %v2887 = vpack.c.b16 %v2883, %v2882
      %v2893 = vsel %vm1588, %v2849, 0
      %v2896 = vsel %vm1588, %v2850, 0
      %v2899 = vsel %vm1588, %v2851, 0
      %v2902 = vsel %vm1588, %v2852, 0
      %2904 = vmatprep.subr.bf16.mxu0 0
      %2905 = vmatpush1.bf16.msra.mxu0 %v2884
      %2906 = vmatprep.subr.bf16.mxu0 0
      %2907 = vmatpush1.bf16.msra.mxu0 %v2885
      %2908 = vmatprep.subr.bf16.mxu0 0
      %2909 = vmatpush1.bf16.msra.mxu0 %v2886
      %2910 = vmatprep.subr.bf16.mxu0 0
      %2911 = vmatpush1.bf16.msra.mxu0 %v2887
      %2912 = vmatprep.subr.bf16.mxu0 0
      %2913 = vmatpush1.bf16.msra.mxu0 0
      %2914 = vmatprep.subr.bf16.mxu0 0
      %2915 = vmatpush1.bf16.msra.mxu0 0
      %2916 = vmatprep.subr.bf16.mxu0 0
      %2917 = vmatpush1.bf16.msra.mxu0 0
      %2918 = vmatprep.subr.bf16.mxu0 0
      %2919 = vmatpush1.bf16.msra.mxu0 0
      %2920 = vmatprep.subr.bf16.mxu0 0
      %2921 = vmatpush1.bf16.msra.mxu0 0
      %2922 = vmatprep.subr.bf16.mxu0 0
      %2923 = vmatpush1.bf16.msra.mxu0 0
      %2924 = vmatprep.subr.bf16.mxu0 0
      %2925 = vmatpush1.bf16.msra.mxu0 0
      %2926 = vmatprep.subr.bf16.mxu0 0
      %2927 = vmatpush1.bf16.msra.mxu0 0
      %2928 = vmatprep.subr.bf16.mxu0 0
      %2929 = vmatpush1.bf16.msra.mxu0 0
      %2930 = vmatprep.subr.bf16.mxu0 0
      %2931 = vmatpush1.bf16.msra.mxu0 0
      %2932 = vmatprep.subr.bf16.mxu0 0
      %2933 = vmatpush1.bf16.msra.mxu0 0
      %2934 = vmatprep.subr.bf16.mxu0 0
      %2935 = vmatpush1.bf16.msra.mxu0 0
      %2936 = vmatprep.mubr.bf16.mxu0 0
      %2937 = vmatmul.mubr.bf16.gmra.mrb[0].mxu0 %v2893
      %v2938 = vpop.f32.mrb[0].mxu0
      %v2939 = vadd.f32 %v2866, %v2938
      %v2940 = vpop.f32.mrb[0].mxu0
      %v2941 = vpop.f32.mrb[0].mxu0
      %v2942 = vadd.f32 %v2866, %v2941
      %v2943 = vpop.f32.mrb[0].mxu0
      %2944 = vmatprep.mubr.bf16.mxu0 0
      %2945 = vmatmul.mubr.bf16.gmra.mrb[0].mxu0 %v2896
      %v2946 = vpop.f32.mrb[0].mxu0
      %v2947 = vadd.f32 %v2866, %v2946
      %v2948 = vpop.f32.mrb[0].mxu0
      %v2949 = vpop.f32.mrb[0].mxu0
      %v2950 = vadd.f32 %v2866, %v2949
      %v2951 = vpop.f32.mrb[0].mxu0
      %2952 = vmatprep.mubr.bf16.mxu0 0
      %2953 = vmatmul.mubr.bf16.gmra.mrb[0].mxu0 %v2899
      %v2954 = vpop.f32.mrb[0].mxu0
      %v2955 = vadd.f32 %v2866, %v2954
      %v2956 = vpop.f32.mrb[0].mxu0
      %v2957 = vpop.f32.mrb[0].mxu0
      %v2958 = vadd.f32 %v2866, %v2957
      %v2959 = vpop.f32.mrb[0].mxu0
      %2960 = vmatprep.mubr.bf16.mxu0 0
      %2961 = vmatmul.mubr.bf16.gmra.mrb[0].mxu0 %v2902
      %v2962 = vpop.f32.mrb[0].mxu0
      %v2963 = vadd.f32 %v2866, %v2962
      %v2964 = vpop.f32.mrb[0].mxu0
      %v2965 = vpop.f32.mrb[0].mxu0
      %v2966 = vadd.f32 %v2866, %v2965
      %v2967 = vpop.f32.mrb[0].mxu0
      %2968 = vdwg.mxu0
      %v2969 = vadd.f32 %v2539, %v2939
      %v2970 = vadd.f32 %v2540, %v2942
      %v2971 = vadd.f32 %v2541, %v2947
      %v2972 = vadd.f32 %v2542, %v2950
      %v2973 = vadd.f32 %v2543, %v2955
      %v2974 = vadd.f32 %v2544, %v2958
      %v2975 = vadd.f32 %v2545, %v2963
      %v2976 = vadd.f32 %v2546, %v2966
      %s2977 = scalar_lea.vmem %s3, 1
      %v2978 = vld [vmem:[%s2977] sm:$0x1]
      %s2979 = scalar_lea.vmem %s4, 1
      %v2980 = vld [vmem:[%s2979] sm:$0x1]
      %v2981 = vsel %vm792, %v2969, 0.0
      %2982 = vadd.xlane.f32.xlu0 %v2981
      %v2983 = vpop.xlane.xlu0 %2982
      %v2984 = vsel %vm792, %v2970, 0.0
      %2985 = vadd.xlane.f32.xlu0 %v2984
      %v2986 = vpop.xlane.xlu0 %2985
      %v2987 = vsel %vm792, %v2971, 0.0
      %2988 = vadd.xlane.f32.xlu0 %v2987
      %v2989 = vpop.xlane.xlu0 %2988
      %v2990 = vsel %vm792, %v2972, 0.0
      %2991 = vadd.xlane.f32.xlu0 %v2990
      %v2992 = vpop.xlane.xlu0 %2991
      %v2993 = vsel %vm792, %v2973, 0.0
      %2994 = vadd.xlane.f32.xlu0 %v2993
      %v2995 = vpop.xlane.xlu0 %2994
      %v2996 = vsel %vm792, %v2974, 0.0
      %2997 = vadd.xlane.f32.xlu0 %v2996
      %v2998 = vpop.xlane.xlu0 %2997
      %v2999 = vsel %vm792, %v2975, 0.0
      %3000 = vadd.xlane.f32.xlu0 %v2999
      %v3001 = vpop.xlane.xlu0 %3000
      %v3002 = vsel %vm792, %v2976, 0.0
      %3003 = vadd.xlane.f32.xlu0 %v3002
      %v3004 = vpop.xlane.xlu0 %3003
      %v3005 = vmul.f32 %v2983, %v817
      %v3006 = vmul.f32 %v2986, %v817
      %v3007 = vmul.f32 %v2989, %v817
      %v3008 = vmul.f32 %v2992, %v817
      %v3009 = vmul.f32 %v2995, %v817
      %v3010 = vmul.f32 %v2998, %v817
      %v3011 = vmul.f32 %v3001, %v817
      %v3012 = vmul.f32 %v3004, %v817
      %v3013 = vsub.f32 %v2969, %v3005
      %v3014 = vsub.f32 %v2970, %v3006
      %v3015 = vsub.f32 %v2971, %v3007
      %v3016 = vsub.f32 %v2972, %v3008
      %v3017 = vsub.f32 %v2973, %v3009
      %v3018 = vsub.f32 %v2974, %v3010
      %v3019 = vsub.f32 %v2975, %v3011
      %v3020 = vsub.f32 %v2976, %v3012
      %v3021 = vmul.f32 %v3013, %v3013
      %v3022 = vmul.f32 %v3014, %v3014
      %v3023 = vmul.f32 %v3015, %v3015
      %v3024 = vmul.f32 %v3016, %v3016
      %v3025 = vmul.f32 %v3017, %v3017
      %v3026 = vmul.f32 %v3018, %v3018
      %v3027 = vmul.f32 %v3019, %v3019
      %v3028 = vmul.f32 %v3020, %v3020
      %v3029 = vsel %vm792, %v3021, 0.0
      %3030 = vadd.xlane.f32.xlu0 %v3029
      %v3031 = vpop.xlane.xlu0 %3030
      %v3032 = vsel %vm792, %v3022, 0.0
      %3033 = vadd.xlane.f32.xlu0 %v3032
      %v3034 = vpop.xlane.xlu0 %3033
      %v3035 = vsel %vm792, %v3023, 0.0
      %3036 = vadd.xlane.f32.xlu0 %v3035
      %v3037 = vpop.xlane.xlu0 %3036
      %v3038 = vsel %vm792, %v3024, 0.0
      %3039 = vadd.xlane.f32.xlu0 %v3038
      %v3040 = vpop.xlane.xlu0 %3039
      %v3041 = vsel %vm792, %v3025, 0.0
      %3042 = vadd.xlane.f32.xlu0 %v3041
      %v3043 = vpop.xlane.xlu0 %3042
      %v3044 = vsel %vm792, %v3026, 0.0
      %3045 = vadd.xlane.f32.xlu0 %v3044
      %v3046 = vpop.xlane.xlu0 %3045
      %v3047 = vsel %vm792, %v3027, 0.0
      %3048 = vadd.xlane.f32.xlu0 %v3047
      %v3049 = vpop.xlane.xlu0 %3048
      %v3050 = vsel %vm792, %v3028, 0.0
      %3051 = vadd.xlane.f32.xlu0 %v3050
      %v3052 = vpop.xlane.xlu0 %3051
      %v3053 = vmul.f32 %v3031, %v866
      %v3054 = vmul.f32 %v3034, %v866
      %v3055 = vmul.f32 %v3037, %v866
      %v3056 = vmul.f32 %v3040, %v866
      %v3057 = vmul.f32 %v3043, %v866
      %v3058 = vmul.f32 %v3046, %v866
      %v3059 = vmul.f32 %v3049, %v866
      %v3060 = vmul.f32 %v3052, %v866
      %v3061 = vrsqrt.pop %v3053
      %v3062 = vmul.f32 %v3053, %v3061
      %vm3063 = vcmp.eq.f32.partialorder %v3053, inf
      %v3064 = vsel %vm3063, %v3053, %v3062
      %vm3065 = vcmp.eq.f32.partialorder %v3053, 0.0
      %v3066 = vand.u32 %v3053, 2147483648
      %v3067 = vsel %vm3065, %v3066, %v3064
      %v3068 = vrsqrt.pop %v3054
      %v3069 = vmul.f32 %v3054, %v3068
      %vm3070 = vcmp.eq.f32.partialorder %v3054, inf
      %v3071 = vsel %vm3070, %v3054, %v3069
      %vm3072 = vcmp.eq.f32.partialorder %v3054, 0.0
      %v3073 = vand.u32 %v3054, 2147483648
      %v3074 = vsel %vm3072, %v3073, %v3071
      %v3075 = vrsqrt.pop %v3055
      %v3076 = vmul.f32 %v3055, %v3075
      %vm3077 = vcmp.eq.f32.partialorder %v3055, inf
      %v3078 = vsel %vm3077, %v3055, %v3076
      %vm3079 = vcmp.eq.f32.partialorder %v3055, 0.0
      %v3080 = vand.u32 %v3055, 2147483648
      %v3081 = vsel %vm3079, %v3080, %v3078
      %v3082 = vrsqrt.pop %v3056
      %v3083 = vmul.f32 %v3056, %v3082
      %vm3084 = vcmp.eq.f32.partialorder %v3056, inf
      %v3085 = vsel %vm3084, %v3056, %v3083
      %vm3086 = vcmp.eq.f32.partialorder %v3056, 0.0
      %v3087 = vand.u32 %v3056, 2147483648
      %v3088 = vsel %vm3086, %v3087, %v3085
      %v3089 = vrsqrt.pop %v3057
      %v3090 = vmul.f32 %v3057, %v3089
      %vm3091 = vcmp.eq.f32.partialorder %v3057, inf
      %v3092 = vsel %vm3091, %v3057, %v3090
      %vm3093 = vcmp.eq.f32.partialorder %v3057, 0.0
      %v3094 = vand.u32 %v3057, 2147483648
      %v3095 = vsel %vm3093, %v3094, %v3092
      %v3096 = vrsqrt.pop %v3058
      %v3097 = vmul.f32 %v3058, %v3096
      %vm3098 = vcmp.eq.f32.partialorder %v3058, inf
      %v3099 = vsel %vm3098, %v3058, %v3097
      %vm3100 = vcmp.eq.f32.partialorder %v3058, 0.0
      %v3101 = vand.u32 %v3058, 2147483648
      %v3102 = vsel %vm3100, %v3101, %v3099
      %v3103 = vrsqrt.pop %v3059
      %v3104 = vmul.f32 %v3059, %v3103
      %vm3105 = vcmp.eq.f32.partialorder %v3059, inf
      %v3106 = vsel %vm3105, %v3059, %v3104
      %vm3107 = vcmp.eq.f32.partialorder %v3059, 0.0
      %v3108 = vand.u32 %v3059, 2147483648
      %v3109 = vsel %vm3107, %v3108, %v3106
      %v3110 = vrsqrt.pop %v3060
      %v3111 = vmul.f32 %v3060, %v3110
      %vm3112 = vcmp.eq.f32.partialorder %v3060, inf
      %v3113 = vsel %vm3112, %v3060, %v3111
      %vm3114 = vcmp.eq.f32.partialorder %v3060, 0.0
      %v3115 = vand.u32 %v3060, 2147483648
      %v3116 = vsel %vm3114, %v3115, %v3113
      %v3117 = vadd.f32 %v3067, 1e-06
      %v3118 = vadd.f32 %v3074, 1e-06
      %v3119 = vadd.f32 %v3081, 1e-06
      %v3120 = vadd.f32 %v3088, 1e-06
      %v3121 = vadd.f32 %v3095, 1e-06
      %v3122 = vadd.f32 %v3102, 1e-06
      %v3123 = vadd.f32 %v3109, 1e-06
      %v3124 = vadd.f32 %v3116, 1e-06
      %v3126 = vlaneseq
      %v3127 = vshrl.u32 %v3126, 7
      %v3128 = vsub.s32 0, %v3127
      %v3129 = vrot.slane %v2978, %v3128
      %v3131 = vmul.f32 %v3129, %v3013
      %v3132 = vmul.f32 %v3129, %v3014
      %v3133 = vmul.f32 %v3129, %v3015
      %v3134 = vmul.f32 %v3129, %v3016
      %v3135 = vmul.f32 %v3129, %v3017
      %v3136 = vmul.f32 %v3129, %v3018
      %v3137 = vmul.f32 %v3129, %v3019
      %v3138 = vmul.f32 %v3129, %v3020
      %v3139 = vrcp.pop %v3117
      %v3140 = vrcp.pop %v3118
      %v3141 = vrcp.pop %v3119
      %v3142 = vrcp.pop %v3120
      %v3143 = vrcp.pop %v3121
      %v3144 = vrcp.pop %v3122
      %v3145 = vrcp.pop %v3123
      %v3146 = vrcp.pop %v3124
      %v3147 = vmul.f32 %v3131, %v3139
      %v3148 = vmul.f32 %v3132, %v3140
      %v3149 = vmul.f32 %v3133, %v3141
      %v3150 = vmul.f32 %v3134, %v3142
      %v3151 = vmul.f32 %v3135, %v3143
      %v3152 = vmul.f32 %v3136, %v3144
      %v3153 = vmul.f32 %v3137, %v3145
      %v3154 = vmul.f32 %v3138, %v3146
      %v3156 = vlaneseq
      %v3157 = vshrl.u32 %v3156, 7
      %v3158 = vsub.s32 0, %v3157
      %v3159 = vrot.slane %v2980, %v3158
      %v3161 = vadd.f32 %v3147, %v3159
      %v3162 = vadd.f32 %v3148, %v3159
      %v3163 = vadd.f32 %v3149, %v3159
      %v3164 = vadd.f32 %v3150, %v3159
      %v3165 = vadd.f32 %v3151, %v3159
      %v3166 = vadd.f32 %v3152, %v3159
      %v3167 = vadd.f32 %v3153, %v3159
      %v3168 = vadd.f32 %v3154, %v3159
      %v3169 = vpack.c.bf16 %v3162, %v3161
      %v3170 = vpack.c.bf16 %v3164, %v3163
      %v3171 = vpack.c.bf16 %v3166, %v3165
      %v3172 = vpack.c.bf16 %v3168, %v3167
      %s3173 = scalar_lea.vmem %s5, 16
      %v3174 = vld [vmem:[%s3173] sm:$0xf]
      %v3175 = vld [vmem:[%s3173 + $0x4] sm:$0xf]
      %v3176 = vld [vmem:[%s3173 + $0x8] sm:$0xf]
      %v3177 = vld [vmem:[%s3173 + $0xc] sm:$0xf]
      %s3178 = scalar_lea.vmem %s6, 1
      %v3179 = vld [vmem:[%s3178] sm:$0x1]
      %v3181 = vlaneseq
      %v3182 = vshrl.u32 %v3181, 7
      %v3183 = vsub.s32 0, %v3182
      %v3184 = vrot.slane %v3179, %v3183
      %v3190 = vunpack.c.l.b16 %v3174
      %v3191 = vunpack.c.l.b16 %v3175
      %v3192 = vunpack.c.l.b16 %v3176
      %v3193 = vunpack.c.l.b16 %v3177
      %v3194 = vpack.c.b16 %v3191, %v3190
      %v3195 = vpack.c.b16 %v3193, %v3192
      %v3199 = vsel %vm792, %v3169, 0
      %v3202 = vsel %vm792, %v3170, 0
      %v3205 = vsel %vm792, %v3171, 0
      %v3208 = vsel %vm792, %v3172, 0
      %3210 = vmatprep.subr.bf16.mxu0 0
      %3211 = vmatpush1.bf16.msra.mxu0 %v3194
      %3212 = vmatprep.subr.bf16.mxu0 0
      %3213 = vmatpush1.bf16.msra.mxu0 %v3195
      %3214 = vmatprep.subr.bf16.mxu0 0
      %3215 = vmatpush1.bf16.msra.mxu0 0
      %3216 = vmatprep.subr.bf16.mxu0 0
      %3217 = vmatpush1.bf16.msra.mxu0 0
      %3218 = vmatprep.subr.bf16.mxu0 0
      %3219 = vmatpush1.bf16.msra.mxu0 0
      %3220 = vmatprep.subr.bf16.mxu0 0
      %3221 = vmatpush1.bf16.msra.mxu0 0
      %3222 = vmatprep.subr.bf16.mxu0 0
      %3223 = vmatpush1.bf16.msra.mxu0 0
      %3224 = vmatprep.subr.bf16.mxu0 0
      %3225 = vmatpush1.bf16.msra.mxu0 0
      %3226 = vmatprep.subr.bf16.mxu0 0
      %3227 = vmatpush1.bf16.msra.mxu0 0
      %3228 = vmatprep.subr.bf16.mxu0 0
      %3229 = vmatpush1.bf16.msra.mxu0 0
      %3230 = vmatprep.subr.bf16.mxu0 0
      %3231 = vmatpush1.bf16.msra.mxu0 0
      %3232 = vmatprep.subr.bf16.mxu0 0
      %3233 = vmatpush1.bf16.msra.mxu0 0
      %3234 = vmatprep.subr.bf16.mxu0 0
      %3235 = vmatpush1.bf16.msra.mxu0 0
      %3236 = vmatprep.subr.bf16.mxu0 0
      %3237 = vmatpush1.bf16.msra.mxu0 0
      %3238 = vmatprep.subr.bf16.mxu0 0
      %3239 = vmatpush1.bf16.msra.mxu0 0
      %3240 = vmatprep.subr.bf16.mxu0 0
      %3241 = vmatpush1.bf16.msra.mxu0 0
      %3242 = vmatprep.mubr.bf16.mxu0 0
      %3243 = vmatmul.mubr.bf16.gmra.mrb[0].mxu0 %v3199
      %v3244 = vpop.f32.mrb[0].mxu0
      %v3245 = vadd.f32 %v3184, %v3244
      %v3246 = vpop.f32.mrb[0].mxu0
      %v3247 = vpop.f32.mrb[0].mxu0
      %v3248 = vadd.f32 %v3184, %v3247
      %v3249 = vpop.f32.mrb[0].mxu0
      %3250 = vmatprep.mubr.bf16.mxu0 0
      %3251 = vmatmul.mubr.bf16.gmra.mrb[0].mxu0 %v3202
      %v3252 = vpop.f32.mrb[0].mxu0
      %v3253 = vadd.f32 %v3184, %v3252
      %v3254 = vpop.f32.mrb[0].mxu0
      %v3255 = vpop.f32.mrb[0].mxu0
      %v3256 = vadd.f32 %v3184, %v3255
      %v3257 = vpop.f32.mrb[0].mxu0
      %3258 = vmatprep.mubr.bf16.mxu0 0
      %3259 = vmatmul.mubr.bf16.gmra.mrb[0].mxu0 %v3205
      %v3260 = vpop.f32.mrb[0].mxu0
      %v3261 = vadd.f32 %v3184, %v3260
      %v3262 = vpop.f32.mrb[0].mxu0
      %v3263 = vpop.f32.mrb[0].mxu0
      %v3264 = vadd.f32 %v3184, %v3263
      %v3265 = vpop.f32.mrb[0].mxu0
      %3266 = vmatprep.mubr.bf16.mxu0 0
      %3267 = vmatmul.mubr.bf16.gmra.mrb[0].mxu0 %v3208
      %v3268 = vpop.f32.mrb[0].mxu0
      %v3269 = vadd.f32 %v3184, %v3268
      %v3270 = vpop.f32.mrb[0].mxu0
      %v3271 = vpop.f32.mrb[0].mxu0
      %v3272 = vadd.f32 %v3184, %v3271
      %v3273 = vpop.f32.mrb[0].mxu0
      %3274 = vdwg.mxu0
      %3283 = vrot.lane.b32.xlu0 %v3245, 120
      %v3284 = vpop.permute.xlu0 %3283
      %3285 = vrot.lane.b32.xlu0 %v3248, 120
      %v3286 = vpop.permute.xlu0 %3285
      %3287 = vrot.lane.b32.xlu0 %v3253, 120
      %v3288 = vpop.permute.xlu0 %3287
      %3289 = vrot.lane.b32.xlu0 %v3256, 120
      %v3290 = vpop.permute.xlu0 %3289
      %3291 = vrot.lane.b32.xlu0 %v3261, 120
      %v3292 = vpop.permute.xlu0 %3291
      %3293 = vrot.lane.b32.xlu0 %v3264, 120
      %v3294 = vpop.permute.xlu0 %3293
      %3295 = vrot.lane.b32.xlu0 %v3269, 120
      %v3296 = vpop.permute.xlu0 %3295
      %3297 = vrot.lane.b32.xlu0 %v3272, 120
      %v3298 = vpop.permute.xlu0 %3297
      %3307 = vrot.lane.b32.xlu0 %v3245, 112
      %v3308 = vpop.permute.xlu0 %3307
      %3309 = vrot.lane.b32.xlu0 %v3248, 112
      %v3310 = vpop.permute.xlu0 %3309
      %3311 = vrot.lane.b32.xlu0 %v3253, 112
      %v3312 = vpop.permute.xlu0 %3311
      %3313 = vrot.lane.b32.xlu0 %v3256, 112
      %v3314 = vpop.permute.xlu0 %3313
      %3315 = vrot.lane.b32.xlu0 %v3261, 112
      %v3316 = vpop.permute.xlu0 %3315
      %3317 = vrot.lane.b32.xlu0 %v3264, 112
      %v3318 = vpop.permute.xlu0 %3317
      %3319 = vrot.lane.b32.xlu0 %v3269, 112
      %v3320 = vpop.permute.xlu0 %3319
      %3321 = vrot.lane.b32.xlu0 %v3272, 112
      %v3322 = vpop.permute.xlu0 %3321
      %3331 = vrot.lane.b32.xlu0 %v3245, 104
      %v3332 = vpop.permute.xlu0 %3331
      %3333 = vrot.lane.b32.xlu0 %v3248, 104
      %v3334 = vpop.permute.xlu0 %3333
      %3335 = vrot.lane.b32.xlu0 %v3253, 104
      %v3336 = vpop.permute.xlu0 %3335
      %3337 = vrot.lane.b32.xlu0 %v3256, 104
      %v3338 = vpop.permute.xlu0 %3337
      %3339 = vrot.lane.b32.xlu0 %v3261, 104
      %v3340 = vpop.permute.xlu0 %3339
      %3341 = vrot.lane.b32.xlu0 %v3264, 104
      %v3342 = vpop.permute.xlu0 %3341
      %3343 = vrot.lane.b32.xlu0 %v3269, 104
      %v3344 = vpop.permute.xlu0 %3343
      %3345 = vrot.lane.b32.xlu0 %v3272, 104
      %v3346 = vpop.permute.xlu0 %3345
      %v3355 = vpack.c.bf16 %v3248, %v3245
      %v3356 = vpack.c.bf16 %v3256, %v3253
      %v3357 = vpack.c.bf16 %v3264, %v3261
      %v3358 = vpack.c.bf16 %v3272, %v3269
      %v3359 = vpack.c.bf16 %v3286, %v3284
      %v3360 = vpack.c.bf16 %v3290, %v3288
      %v3361 = vpack.c.bf16 %v3294, %v3292
      %v3362 = vpack.c.bf16 %v3298, %v3296
      %v3363 = vpack.c.bf16 %v3310, %v3308
      %v3364 = vpack.c.bf16 %v3314, %v3312
      %v3365 = vpack.c.bf16 %v3318, %v3316
      %v3366 = vpack.c.bf16 %v3322, %v3320
      %v3367 = vpack.c.bf16 %v3334, %v3332
      %v3368 = vpack.c.bf16 %v3338, %v3336
      %v3369 = vpack.c.bf16 %v3342, %v3340
      %v3370 = vpack.c.bf16 %v3346, %v3344
      %3375 = vrot.lane.b32.xlu0 %v3355, 96
      %v3376 = vpop.permute.xlu0 %3375
      %3377 = vrot.lane.b32.xlu0 %v3356, 96
      %v3378 = vpop.permute.xlu0 %3377
      %3379 = vrot.lane.b32.xlu0 %v3357, 96
      %v3380 = vpop.permute.xlu0 %3379
      %3381 = vrot.lane.b32.xlu0 %v3358, 96
      %v3382 = vpop.permute.xlu0 %3381
      %v3384 = vsel %vm1195, %v3355, 0
      %v3387 = vsel %vm1195, %v3356, 0
      %v3390 = vsel %vm1195, %v3357, 0
      %v3393 = vsel %vm1195, %v3358, 0
      %v3396 = vsel %vm1195, %v3376, 0
      %v3399 = vsel %vm1195, %v3378, 0
      %v3402 = vsel %vm1195, %v3380, 0
      %v3405 = vsel %vm1195, %v3382, 0
      %3407 = vmatprep.subr.bf16.mxu0 0
      %3408 = vmatpush1.bf16.xpose.msra.mxu0 %v3396
      %3409 = vmatprep.subr.bf16.mxu0 0
      %3410 = vmatpush1.bf16.xpose.msra.mxu0 %v3399
      %3411 = vmatprep.subr.bf16.mxu0 0
      %3412 = vmatpush1.bf16.xpose.msra.mxu0 %v3402
      %3413 = vmatprep.subr.bf16.mxu0 0
      %3414 = vmatpush1.bf16.xpose.msra.mxu0 %v3405
      %3415 = vmatprep.subr.bf16.mxu0 0
      %3416 = vmatpush1.bf16.xpose.msra.mxu0 0
      %3417 = vmatprep.subr.bf16.mxu0 0
      %3418 = vmatpush1.bf16.xpose.msra.mxu0 0
      %3419 = vmatprep.subr.bf16.mxu0 0
      %3420 = vmatpush1.bf16.xpose.msra.mxu0 0
      %3421 = vmatprep.subr.bf16.mxu0 0
      %3422 = vmatpush1.bf16.xpose.msra.mxu0 0
      %3423 = vmatprep.subr.bf16.mxu0 0
      %3424 = vmatpush1.bf16.xpose.msra.mxu0 0
      %3425 = vmatprep.subr.bf16.mxu0 0
      %3426 = vmatpush1.bf16.xpose.msra.mxu0 0
      %3427 = vmatprep.subr.bf16.mxu0 0
      %3428 = vmatpush1.bf16.xpose.msra.mxu0 0
      %3429 = vmatprep.subr.bf16.mxu0 0
      %3430 = vmatpush1.bf16.xpose.msra.mxu0 0
      %3431 = vmatprep.subr.bf16.mxu0 0
      %3432 = vmatpush1.bf16.xpose.msra.mxu0 0
      %3433 = vmatprep.subr.bf16.mxu0 0
      %3434 = vmatpush1.bf16.xpose.msra.mxu0 0
      %3435 = vmatprep.subr.bf16.mxu0 0
      %3436 = vmatpush1.bf16.xpose.msra.mxu0 0
      %3437 = vmatprep.subr.bf16.mxu0 0
      %3438 = vmatpush1.bf16.xpose.msra.mxu0 0
      %3439 = vmatprep.mubr.bf16.mxu0 0
      %3440 = vmatmul.mubr.bf16.gmra.mrb[0].mxu0 %v3384
      %v3441 = vpop.f32.mrb[0].mxu0
      %v3442 = vadd.f32 0.0, %v3441
      %v3443 = vpop.f32.mrb[0].mxu0
      %v3444 = vpop.f32.mrb[0].mxu0
      %v3445 = vadd.f32 0.0, %v3444
      %v3446 = vpop.f32.mrb[0].mxu0
      %3447 = vmatprep.mubr.bf16.mxu0 0
      %3448 = vmatmul.mubr.bf16.gmra.mrb[0].mxu0 %v3387
      %v3449 = vpop.f32.mrb[0].mxu0
      %v3450 = vadd.f32 0.0, %v3449
      %v3451 = vpop.f32.mrb[0].mxu0
      %v3452 = vpop.f32.mrb[0].mxu0
      %v3453 = vadd.f32 0.0, %v3452
      %v3454 = vpop.f32.mrb[0].mxu0
      %3455 = vmatprep.mubr.bf16.mxu0 0
      %3456 = vmatmul.mubr.bf16.gmra.mrb[0].mxu0 %v3390
      %v3457 = vpop.f32.mrb[0].mxu0
      %v3458 = vadd.f32 0.0, %v3457
      %v3459 = vpop.f32.mrb[0].mxu0
      %v3460 = vpop.f32.mrb[0].mxu0
      %v3461 = vadd.f32 0.0, %v3460
      %v3462 = vpop.f32.mrb[0].mxu0
      %3463 = vmatprep.mubr.bf16.mxu0 0
      %3464 = vmatmul.mubr.bf16.gmra.mrb[0].mxu0 %v3393
      %v3465 = vpop.f32.mrb[0].mxu0
      %v3466 = vadd.f32 0.0, %v3465
      %v3467 = vpop.f32.mrb[0].mxu0
      %v3468 = vpop.f32.mrb[0].mxu0
      %v3469 = vadd.f32 0.0, %v3468
      %v3470 = vpop.f32.mrb[0].mxu0
      %3471 = vdwg.mxu0
      %3476 = vrot.lane.b32.xlu0 %v3359, 96
      %v3477 = vpop.permute.xlu0 %3476
      %3478 = vrot.lane.b32.xlu0 %v3360, 96
      %v3479 = vpop.permute.xlu0 %3478
      %3480 = vrot.lane.b32.xlu0 %v3361, 96
      %v3481 = vpop.permute.xlu0 %3480
      %3482 = vrot.lane.b32.xlu0 %v3362, 96
      %v3483 = vpop.permute.xlu0 %3482
      %v3485 = vsel %vm1195, %v3359, 0
      %v3488 = vsel %vm1195, %v3360, 0
      %v3491 = vsel %vm1195, %v3361, 0
      %v3494 = vsel %vm1195, %v3362, 0
      %v3497 = vsel %vm1195, %v3477, 0
      %v3500 = vsel %vm1195, %v3479, 0
      %v3503 = vsel %vm1195, %v3481, 0
      %v3506 = vsel %vm1195, %v3483, 0
      %3508 = vmatprep.subr.bf16.mxu0 0
      %3509 = vmatpush1.bf16.xpose.msra.mxu0 %v3497
      %3510 = vmatprep.subr.bf16.mxu0 0
      %3511 = vmatpush1.bf16.xpose.msra.mxu0 %v3500
      %3512 = vmatprep.subr.bf16.mxu0 0
      %3513 = vmatpush1.bf16.xpose.msra.mxu0 %v3503
      %3514 = vmatprep.subr.bf16.mxu0 0
      %3515 = vmatpush1.bf16.xpose.msra.mxu0 %v3506
      %3516 = vmatprep.subr.bf16.mxu0 0
      %3517 = vmatpush1.bf16.xpose.msra.mxu0 0
      %3518 = vmatprep.subr.bf16.mxu0 0
      %3519 = vmatpush1.bf16.xpose.msra.mxu0 0
      %3520 = vmatprep.subr.bf16.mxu0 0
      %3521 = vmatpush1.bf16.xpose.msra.mxu0 0
      %3522 = vmatprep.subr.bf16.mxu0 0
      %3523 = vmatpush1.bf16.xpose.msra.mxu0 0
      %3524 = vmatprep.subr.bf16.mxu0 0
      %3525 = vmatpush1.bf16.xpose.msra.mxu0 0
      %3526 = vmatprep.subr.bf16.mxu0 0
      %3527 = vmatpush1.bf16.xpose.msra.mxu0 0
      %3528 = vmatprep.subr.bf16.mxu0 0
      %3529 = vmatpush1.bf16.xpose.msra.mxu0 0
      %3530 = vmatprep.subr.bf16.mxu0 0
      %3531 = vmatpush1.bf16.xpose.msra.mxu0 0
      %3532 = vmatprep.subr.bf16.mxu0 0
      %3533 = vmatpush1.bf16.xpose.msra.mxu0 0
      %3534 = vmatprep.subr.bf16.mxu0 0
      %3535 = vmatpush1.bf16.xpose.msra.mxu0 0
      %3536 = vmatprep.subr.bf16.mxu0 0
      %3537 = vmatpush1.bf16.xpose.msra.mxu0 0
      %3538 = vmatprep.subr.bf16.mxu0 0
      %3539 = vmatpush1.bf16.xpose.msra.mxu0 0
      %3540 = vmatprep.mubr.bf16.mxu0 0
      %3541 = vmatmul.mubr.bf16.gmra.mrb[0].mxu0 %v3485
      %v3542 = vpop.f32.mrb[0].mxu0
      %v3543 = vadd.f32 0.0, %v3542
      %v3544 = vpop.f32.mrb[0].mxu0
      %v3545 = vpop.f32.mrb[0].mxu0
      %v3546 = vadd.f32 0.0, %v3545
      %v3547 = vpop.f32.mrb[0].mxu0
      %3548 = vmatprep.mubr.bf16.mxu0 0
      %3549 = vmatmul.mubr.bf16.gmra.mrb[0].mxu0 %v3488
      %v3550 = vpop.f32.mrb[0].mxu0
      %v3551 = vadd.f32 0.0, %v3550
      %v3552 = vpop.f32.mrb[0].mxu0
      %v3553 = vpop.f32.mrb[0].mxu0
      %v3554 = vadd.f32 0.0, %v3553
      %v3555 = vpop.f32.mrb[0].mxu0
      %3556 = vmatprep.mubr.bf16.mxu0 0
      %3557 = vmatmul.mubr.bf16.gmra.mrb[0].mxu0 %v3491
      %v3558 = vpop.f32.mrb[0].mxu0
      %v3559 = vadd.f32 0.0, %v3558
      %v3560 = vpop.f32.mrb[0].mxu0
      %v3561 = vpop.f32.mrb[0].mxu0
      %v3562 = vadd.f32 0.0, %v3561
      %v3563 = vpop.f32.mrb[0].mxu0
      %3564 = vmatprep.mubr.bf16.mxu0 0
      %3565 = vmatmul.mubr.bf16.gmra.mrb[0].mxu0 %v3494
      %v3566 = vpop.f32.mrb[0].mxu0
      %v3567 = vadd.f32 0.0, %v3566
      %v3568 = vpop.f32.mrb[0].mxu0
      %v3569 = vpop.f32.mrb[0].mxu0
      %v3570 = vadd.f32 0.0, %v3569
      %v3571 = vpop.f32.mrb[0].mxu0
      %3572 = vdwg.mxu0
      %3577 = vrot.lane.b32.xlu0 %v3363, 96
      %v3578 = vpop.permute.xlu0 %3577
      %3579 = vrot.lane.b32.xlu0 %v3364, 96
      %v3580 = vpop.permute.xlu0 %3579
      %3581 = vrot.lane.b32.xlu0 %v3365, 96
      %v3582 = vpop.permute.xlu0 %3581
      %3583 = vrot.lane.b32.xlu0 %v3366, 96
      %v3584 = vpop.permute.xlu0 %3583
      %v3586 = vsel %vm1195, %v3363, 0
      %v3589 = vsel %vm1195, %v3364, 0
      %v3592 = vsel %vm1195, %v3365, 0
      %v3595 = vsel %vm1195, %v3366, 0
      %v3598 = vsel %vm1195, %v3578, 0
      %v3601 = vsel %vm1195, %v3580, 0
      %v3604 = vsel %vm1195, %v3582, 0
      %v3607 = vsel %vm1195, %v3584, 0
      %3609 = vmatprep.subr.bf16.mxu0 0
      %3610 = vmatpush1.bf16.xpose.msra.mxu0 %v3598
      %3611 = vmatprep.subr.bf16.mxu0 0
      %3612 = vmatpush1.bf16.xpose.msra.mxu0 %v3601
      %3613 = vmatprep.subr.bf16.mxu0 0
      %3614 = vmatpush1.bf16.xpose.msra.mxu0 %v3604
      %3615 = vmatprep.subr.bf16.mxu0 0
      %3616 = vmatpush1.bf16.xpose.msra.mxu0 %v3607
      %3617 = vmatprep.subr.bf16.mxu0 0
      %3618 = vmatpush1.bf16.xpose.msra.mxu0 0
      %3619 = vmatprep.subr.bf16.mxu0 0
      %3620 = vmatpush1.bf16.xpose.msra.mxu0 0
      %3621 = vmatprep.subr.bf16.mxu0 0
      %3622 = vmatpush1.bf16.xpose.msra.mxu0 0
      %3623 = vmatprep.subr.bf16.mxu0 0
      %3624 = vmatpush1.bf16.xpose.msra.mxu0 0
      %3625 = vmatprep.subr.bf16.mxu0 0
      %3626 = vmatpush1.bf16.xpose.msra.mxu0 0
      %3627 = vmatprep.subr.bf16.mxu0 0
      %3628 = vmatpush1.bf16.xpose.msra.mxu0 0
      %3629 = vmatprep.subr.bf16.mxu0 0
      %3630 = vmatpush1.bf16.xpose.msra.mxu0 0
      %3631 = vmatprep.subr.bf16.mxu0 0
      %3632 = vmatpush1.bf16.xpose.msra.mxu0 0
      %3633 = vmatprep.subr.bf16.mxu0 0
      %3634 = vmatpush1.bf16.xpose.msra.mxu0 0
      %3635 = vmatprep.subr.bf16.mxu0 0
      %3636 = vmatpush1.bf16.xpose.msra.mxu0 0
      %3637 = vmatprep.subr.bf16.mxu0 0
      %3638 = vmatpush1.bf16.xpose.msra.mxu0 0
      %3639 = vmatprep.subr.bf16.mxu0 0
      %3640 = vmatpush1.bf16.xpose.msra.mxu0 0
      %3641 = vmatprep.mubr.bf16.mxu0 0
      %3642 = vmatmul.mubr.bf16.gmra.mrb[0].mxu0 %v3586
      %v3643 = vpop.f32.mrb[0].mxu0
      %v3644 = vadd.f32 0.0, %v3643
      %v3645 = vpop.f32.mrb[0].mxu0
      %v3646 = vpop.f32.mrb[0].mxu0
      %v3647 = vadd.f32 0.0, %v3646
      %v3648 = vpop.f32.mrb[0].mxu0
      %3649 = vmatprep.mubr.bf16.mxu0 0
      %3650 = vmatmul.mubr.bf16.gmra.mrb[0].mxu0 %v3589
      %v3651 = vpop.f32.mrb[0].mxu0
      %v3652 = vadd.f32 0.0, %v3651
      %v3653 = vpop.f32.mrb[0].mxu0
      %v3654 = vpop.f32.mrb[0].mxu0
      %v3655 = vadd.f32 0.0, %v3654
      %v3656 = vpop.f32.mrb[0].mxu0
      %3657 = vmatprep.mubr.bf16.mxu0 0
      %3658 = vmatmul.mubr.bf16.gmra.mrb[0].mxu0 %v3592
      %v3659 = vpop.f32.mrb[0].mxu0
      %v3660 = vadd.f32 0.0, %v3659
      %v3661 = vpop.f32.mrb[0].mxu0
      %v3662 = vpop.f32.mrb[0].mxu0
      %v3663 = vadd.f32 0.0, %v3662
      %v3664 = vpop.f32.mrb[0].mxu0
      %3665 = vmatprep.mubr.bf16.mxu0 0
      %3666 = vmatmul.mubr.bf16.gmra.mrb[0].mxu0 %v3595
      %v3667 = vpop.f32.mrb[0].mxu0
      %v3668 = vadd.f32 0.0, %v3667
      %v3669 = vpop.f32.mrb[0].mxu0
      %v3670 = vpop.f32.mrb[0].mxu0
      %v3671 = vadd.f32 0.0, %v3670
      %v3672 = vpop.f32.mrb[0].mxu0
      %3673 = vdwg.mxu0
      %3678 = vrot.lane.b32.xlu0 %v3367, 96
      %v3679 = vpop.permute.xlu0 %3678
      %3680 = vrot.lane.b32.xlu0 %v3368, 96
      %v3681 = vpop.permute.xlu0 %3680
      %3682 = vrot.lane.b32.xlu0 %v3369, 96
      %v3683 = vpop.permute.xlu0 %3682
      %3684 = vrot.lane.b32.xlu0 %v3370, 96
      %v3685 = vpop.permute.xlu0 %3684
      %v3687 = vsel %vm1195, %v3367, 0
      %v3690 = vsel %vm1195, %v3368, 0
      %v3693 = vsel %vm1195, %v3369, 0
      %v3696 = vsel %vm1195, %v3370, 0
      %v3699 = vsel %vm1195, %v3679, 0
      %v3702 = vsel %vm1195, %v3681, 0
      %v3705 = vsel %vm1195, %v3683, 0
      %v3708 = vsel %vm1195, %v3685, 0
      %3710 = vmatprep.subr.bf16.mxu0 0
      %3711 = vmatpush1.bf16.xpose.msra.mxu0 %v3699
      %3712 = vmatprep.subr.bf16.mxu0 0
      %3713 = vmatpush1.bf16.xpose.msra.mxu0 %v3702
      %3714 = vmatprep.subr.bf16.mxu0 0
      %3715 = vmatpush1.bf16.xpose.msra.mxu0 %v3705
      %3716 = vmatprep.subr.bf16.mxu0 0
      %3717 = vmatpush1.bf16.xpose.msra.mxu0 %v3708
      %3718 = vmatprep.subr.bf16.mxu0 0
      %3719 = vmatpush1.bf16.xpose.msra.mxu0 0
      %3720 = vmatprep.subr.bf16.mxu0 0
      %3721 = vmatpush1.bf16.xpose.msra.mxu0 0
      %3722 = vmatprep.subr.bf16.mxu0 0
      %3723 = vmatpush1.bf16.xpose.msra.mxu0 0
      %3724 = vmatprep.subr.bf16.mxu0 0
      %3725 = vmatpush1.bf16.xpose.msra.mxu0 0
      %3726 = vmatprep.subr.bf16.mxu0 0
      %3727 = vmatpush1.bf16.xpose.msra.mxu0 0
      %3728 = vmatprep.subr.bf16.mxu0 0
      %3729 = vmatpush1.bf16.xpose.msra.mxu0 0
      %3730 = vmatprep.subr.bf16.mxu0 0
      %3731 = vmatpush1.bf16.xpose.msra.mxu0 0
      %3732 = vmatprep.subr.bf16.mxu0 0
      %3733 = vmatpush1.bf16.xpose.msra.mxu0 0
      %3734 = vmatprep.subr.bf16.mxu0 0
      %3735 = vmatpush1.bf16.xpose.msra.mxu0 0
      %3736 = vmatprep.subr.bf16.mxu0 0
      %3737 = vmatpush1.bf16.xpose.msra.mxu0 0
      %3738 = vmatprep.subr.bf16.mxu0 0
      %3739 = vmatpush1.bf16.xpose.msra.mxu0 0
      %3740 = vmatprep.subr.bf16.mxu0 0
      %3741 = vmatpush1.bf16.xpose.msra.mxu0 0
      %3742 = vmatprep.mubr.bf16.mxu0 0
      %3743 = vmatmul.mubr.bf16.gmra.mrb[0].mxu0 %v3687
      %v3744 = vpop.f32.mrb[0].mxu0
      %v3745 = vadd.f32 0.0, %v3744
      %v3746 = vpop.f32.mrb[0].mxu0
      %v3747 = vpop.f32.mrb[0].mxu0
      %v3748 = vadd.f32 0.0, %v3747
      %v3749 = vpop.f32.mrb[0].mxu0
      %3750 = vmatprep.mubr.bf16.mxu0 0
      %3751 = vmatmul.mubr.bf16.gmra.mrb[0].mxu0 %v3690
      %v3752 = vpop.f32.mrb[0].mxu0
      %v3753 = vadd.f32 0.0, %v3752
      %v3754 = vpop.f32.mrb[0].mxu0
      %v3755 = vpop.f32.mrb[0].mxu0
      %v3756 = vadd.f32 0.0, %v3755
      %v3757 = vpop.f32.mrb[0].mxu0
      %3758 = vmatprep.mubr.bf16.mxu0 0
      %3759 = vmatmul.mubr.bf16.gmra.mrb[0].mxu0 %v3693
      %v3760 = vpop.f32.mrb[0].mxu0
      %v3761 = vadd.f32 0.0, %v3760
      %v3762 = vpop.f32.mrb[0].mxu0
      %v3763 = vpop.f32.mrb[0].mxu0
      %v3764 = vadd.f32 0.0, %v3763
      %v3765 = vpop.f32.mrb[0].mxu0
      %3766 = vmatprep.mubr.bf16.mxu0 0
      %3767 = vmatmul.mubr.bf16.gmra.mrb[0].mxu0 %v3696
      %v3768 = vpop.f32.mrb[0].mxu0
      %v3769 = vadd.f32 0.0, %v3768
      %v3770 = vpop.f32.mrb[0].mxu0
      %v3771 = vpop.f32.mrb[0].mxu0
      %v3772 = vadd.f32 0.0, %v3771
      %v3773 = vpop.f32.mrb[0].mxu0
      %3774 = vdwg.mxu0
      %v3775 = vsel %vm1588, %v3442, -inf
      %3776 = vmax.xlane.f32.xlu0 %v3775
      %v3777 = vpop.xlane.xlu0 %3776
      %v3778 = vsel %vm1588, %v3445, -inf
      %3779 = vmax.xlane.f32.xlu0 %v3778
      %v3780 = vpop.xlane.xlu0 %3779
      %v3781 = vsel %vm1588, %v3450, -inf
      %3782 = vmax.xlane.f32.xlu0 %v3781
      %v3783 = vpop.xlane.xlu0 %3782
      %v3784 = vsel %vm1588, %v3453, -inf
      %3785 = vmax.xlane.f32.xlu0 %v3784
      %v3786 = vpop.xlane.xlu0 %3785
      %v3787 = vsel %vm1588, %v3458, -inf
      %3788 = vmax.xlane.f32.xlu0 %v3787
      %v3789 = vpop.xlane.xlu0 %3788
      %v3790 = vsel %vm1588, %v3461, -inf
      %3791 = vmax.xlane.f32.xlu0 %v3790
      %v3792 = vpop.xlane.xlu0 %3791
      %v3793 = vsel %vm1588, %v3466, -inf
      %3794 = vmax.xlane.f32.xlu0 %v3793
      %v3795 = vpop.xlane.xlu0 %3794
      %v3796 = vsel %vm1588, %v3469, -inf
      %3797 = vmax.xlane.f32.xlu0 %v3796
      %v3798 = vpop.xlane.xlu0 %3797
      %v3799 = vsel %vm1588, %v3543, -inf
      %3800 = vmax.xlane.f32.xlu0 %v3799
      %v3801 = vpop.xlane.xlu0 %3800
      %v3802 = vsel %vm1588, %v3546, -inf
      %3803 = vmax.xlane.f32.xlu0 %v3802
      %v3804 = vpop.xlane.xlu0 %3803
      %v3805 = vsel %vm1588, %v3551, -inf
      %3806 = vmax.xlane.f32.xlu0 %v3805
      %v3807 = vpop.xlane.xlu0 %3806
      %v3808 = vsel %vm1588, %v3554, -inf
      %3809 = vmax.xlane.f32.xlu0 %v3808
      %v3810 = vpop.xlane.xlu0 %3809
      %v3811 = vsel %vm1588, %v3559, -inf
      %3812 = vmax.xlane.f32.xlu0 %v3811
      %v3813 = vpop.xlane.xlu0 %3812
      %v3814 = vsel %vm1588, %v3562, -inf
      %3815 = vmax.xlane.f32.xlu0 %v3814
      %v3816 = vpop.xlane.xlu0 %3815
      %v3817 = vsel %vm1588, %v3567, -inf
      %3818 = vmax.xlane.f32.xlu0 %v3817
      %v3819 = vpop.xlane.xlu0 %3818
      %v3820 = vsel %vm1588, %v3570, -inf
      %3821 = vmax.xlane.f32.xlu0 %v3820
      %v3822 = vpop.xlane.xlu0 %3821
      %v3823 = vsel %vm1588, %v3644, -inf
      %3824 = vmax.xlane.f32.xlu0 %v3823
      %v3825 = vpop.xlane.xlu0 %3824
      %v3826 = vsel %vm1588, %v3647, -inf
      %3827 = vmax.xlane.f32.xlu0 %v3826
      %v3828 = vpop.xlane.xlu0 %3827
      %v3829 = vsel %vm1588, %v3652, -inf
      %3830 = vmax.xlane.f32.xlu0 %v3829
      %v3831 = vpop.xlane.xlu0 %3830
      %v3832 = vsel %vm1588, %v3655, -inf
      %3833 = vmax.xlane.f32.xlu0 %v3832
      %v3834 = vpop.xlane.xlu0 %3833
      %v3835 = vsel %vm1588, %v3660, -inf
      %3836 = vmax.xlane.f32.xlu0 %v3835
      %v3837 = vpop.xlane.xlu0 %3836
      %v3838 = vsel %vm1588, %v3663, -inf
      %3839 = vmax.xlane.f32.xlu0 %v3838
      %v3840 = vpop.xlane.xlu0 %3839
      %v3841 = vsel %vm1588, %v3668, -inf
      %3842 = vmax.xlane.f32.xlu0 %v3841
      %v3843 = vpop.xlane.xlu0 %3842
      %v3844 = vsel %vm1588, %v3671, -inf
      %3845 = vmax.xlane.f32.xlu0 %v3844
      %v3846 = vpop.xlane.xlu0 %3845
      %v3847 = vsel %vm1588, %v3745, -inf
      %3848 = vmax.xlane.f32.xlu0 %v3847
      %v3849 = vpop.xlane.xlu0 %3848
      %v3850 = vsel %vm1588, %v3748, -inf
      %3851 = vmax.xlane.f32.xlu0 %v3850
      %v3852 = vpop.xlane.xlu0 %3851
      %v3853 = vsel %vm1588, %v3753, -inf
      %3854 = vmax.xlane.f32.xlu0 %v3853
      %v3855 = vpop.xlane.xlu0 %3854
      %v3856 = vsel %vm1588, %v3756, -inf
      %3857 = vmax.xlane.f32.xlu0 %v3856
      %v3858 = vpop.xlane.xlu0 %3857
      %v3859 = vsel %vm1588, %v3761, -inf
      %3860 = vmax.xlane.f32.xlu0 %v3859
      %v3861 = vpop.xlane.xlu0 %3860
      %v3862 = vsel %vm1588, %v3764, -inf
      %3863 = vmax.xlane.f32.xlu0 %v3862
      %v3864 = vpop.xlane.xlu0 %3863
      %v3865 = vsel %vm1588, %v3769, -inf
      %3866 = vmax.xlane.f32.xlu0 %v3865
      %v3867 = vpop.xlane.xlu0 %3866
      %v3868 = vsel %vm1588, %v3772, -inf
      %3869 = vmax.xlane.f32.xlu0 %v3868
      %v3870 = vpop.xlane.xlu0 %3869
      %v3871 = vsub.f32 %v3442, %v3777
      %v3872 = vsub.f32 %v3445, %v3780
      %v3873 = vsub.f32 %v3450, %v3783
      %v3874 = vsub.f32 %v3453, %v3786
      %v3875 = vsub.f32 %v3458, %v3789
      %v3876 = vsub.f32 %v3461, %v3792
      %v3877 = vsub.f32 %v3466, %v3795
      %v3878 = vsub.f32 %v3469, %v3798
      %v3879 = vsub.f32 %v3543, %v3801
      %v3880 = vsub.f32 %v3546, %v3804
      %v3881 = vsub.f32 %v3551, %v3807
      %v3882 = vsub.f32 %v3554, %v3810
      %v3883 = vsub.f32 %v3559, %v3813
      %v3884 = vsub.f32 %v3562, %v3816
      %v3885 = vsub.f32 %v3567, %v3819
      %v3886 = vsub.f32 %v3570, %v3822
      %v3887 = vsub.f32 %v3644, %v3825
      %v3888 = vsub.f32 %v3647, %v3828
      %v3889 = vsub.f32 %v3652, %v3831
      %v3890 = vsub.f32 %v3655, %v3834
      %v3891 = vsub.f32 %v3660, %v3837
      %v3892 = vsub.f32 %v3663, %v3840
      %v3893 = vsub.f32 %v3668, %v3843
      %v3894 = vsub.f32 %v3671, %v3846
      %v3895 = vsub.f32 %v3745, %v3849
      %v3896 = vsub.f32 %v3748, %v3852
      %v3897 = vsub.f32 %v3753, %v3855
      %v3898 = vsub.f32 %v3756, %v3858
      %v3899 = vsub.f32 %v3761, %v3861
      %v3900 = vsub.f32 %v3764, %v3864
      %v3901 = vsub.f32 %v3769, %v3867
      %v3902 = vsub.f32 %v3772, %v3870
      %v3903 = vmul.f32 %v3871, 1.442695
      %v3904 = vpow.pop %v3903
      %v3905 = vmul.f32 %v3872, 1.442695
      %v3906 = vpow.pop %v3905
      %v3907 = vmul.f32 %v3873, 1.442695
      %v3908 = vpow.pop %v3907
      %v3909 = vmul.f32 %v3874, 1.442695
      %v3910 = vpow.pop %v3909
      %v3911 = vmul.f32 %v3875, 1.442695
      %v3912 = vpow.pop %v3911
      %v3913 = vmul.f32 %v3876, 1.442695
      %v3914 = vpow.pop %v3913
      %v3915 = vmul.f32 %v3877, 1.442695
      %v3916 = vpow.pop %v3915
      %v3917 = vmul.f32 %v3878, 1.442695
      %v3918 = vpow.pop %v3917
      %v3919 = vmul.f32 %v3879, 1.442695
      %v3920 = vpow.pop %v3919
      %v3921 = vmul.f32 %v3880, 1.442695
      %v3922 = vpow.pop %v3921
      %v3923 = vmul.f32 %v3881, 1.442695
      %v3924 = vpow.pop %v3923
      %v3925 = vmul.f32 %v3882, 1.442695
      %v3926 = vpow.pop %v3925
      %v3927 = vmul.f32 %v3883, 1.442695
      %v3928 = vpow.pop %v3927
      %v3929 = vmul.f32 %v3884, 1.442695
      %v3930 = vpow.pop %v3929
      %v3931 = vmul.f32 %v3885, 1.442695
      %v3932 = vpow.pop %v3931
      %v3933 = vmul.f32 %v3886, 1.442695
      %v3934 = vpow.pop %v3933
      %v3935 = vmul.f32 %v3887, 1.442695
      %v3936 = vpow.pop %v3935
      %v3937 = vmul.f32 %v3888, 1.442695
      %v3938 = vpow.pop %v3937
      %v3939 = vmul.f32 %v3889, 1.442695
      %v3940 = vpow.pop %v3939
      %v3941 = vmul.f32 %v3890, 1.442695
      %v3942 = vpow.pop %v3941
      %v3943 = vmul.f32 %v3891, 1.442695
      %v3944 = vpow.pop %v3943
      %v3945 = vmul.f32 %v3892, 1.442695
      %v3946 = vpow.pop %v3945
      %v3947 = vmul.f32 %v3893, 1.442695
      %v3948 = vpow.pop %v3947
      %v3949 = vmul.f32 %v3894, 1.442695
      %v3950 = vpow.pop %v3949
      %v3951 = vmul.f32 %v3895, 1.442695
      %v3952 = vpow.pop %v3951
      %v3953 = vmul.f32 %v3896, 1.442695
      %v3954 = vpow.pop %v3953
      %v3955 = vmul.f32 %v3897, 1.442695
      %v3956 = vpow.pop %v3955
      %v3957 = vmul.f32 %v3898, 1.442695
      %v3958 = vpow.pop %v3957
      %v3959 = vmul.f32 %v3899, 1.442695
      %v3960 = vpow.pop %v3959
      %v3961 = vmul.f32 %v3900, 1.442695
      %v3962 = vpow.pop %v3961
      %v3963 = vmul.f32 %v3901, 1.442695
      %v3964 = vpow.pop %v3963
      %v3965 = vmul.f32 %v3902, 1.442695
      %v3966 = vpow.pop %v3965
      %v3967 = vsel %vm1588, %v3904, 0.0
      %3968 = vadd.xlane.f32.xlu0 %v3967
      %v3969 = vpop.xlane.xlu0 %3968
      %v3970 = vsel %vm1588, %v3906, 0.0
      %3971 = vadd.xlane.f32.xlu0 %v3970
      %v3972 = vpop.xlane.xlu0 %3971
      %v3973 = vsel %vm1588, %v3908, 0.0
      %3974 = vadd.xlane.f32.xlu0 %v3973
      %v3975 = vpop.xlane.xlu0 %3974
      %v3976 = vsel %vm1588, %v3910, 0.0
      %3977 = vadd.xlane.f32.xlu0 %v3976
      %v3978 = vpop.xlane.xlu0 %3977
      %v3979 = vsel %vm1588, %v3912, 0.0
      %3980 = vadd.xlane.f32.xlu0 %v3979
      %v3981 = vpop.xlane.xlu0 %3980
      %v3982 = vsel %vm1588, %v3914, 0.0
      %3983 = vadd.xlane.f32.xlu0 %v3982
      %v3984 = vpop.xlane.xlu0 %3983
      %v3985 = vsel %vm1588, %v3916, 0.0
      %3986 = vadd.xlane.f32.xlu0 %v3985
      %v3987 = vpop.xlane.xlu0 %3986
      %v3988 = vsel %vm1588, %v3918, 0.0
      %3989 = vadd.xlane.f32.xlu0 %v3988
      %v3990 = vpop.xlane.xlu0 %3989
      %v3991 = vsel %vm1588, %v3920, 0.0
      %3992 = vadd.xlane.f32.xlu0 %v3991
      %v3993 = vpop.xlane.xlu0 %3992
      %v3994 = vsel %vm1588, %v3922, 0.0
      %3995 = vadd.xlane.f32.xlu0 %v3994
      %v3996 = vpop.xlane.xlu0 %3995
      %v3997 = vsel %vm1588, %v3924, 0.0
      %3998 = vadd.xlane.f32.xlu0 %v3997
      %v3999 = vpop.xlane.xlu0 %3998
      %v4000 = vsel %vm1588, %v3926, 0.0
      %4001 = vadd.xlane.f32.xlu0 %v4000
      %v4002 = vpop.xlane.xlu0 %4001
      %v4003 = vsel %vm1588, %v3928, 0.0
      %4004 = vadd.xlane.f32.xlu0 %v4003
      %v4005 = vpop.xlane.xlu0 %4004
      %v4006 = vsel %vm1588, %v3930, 0.0
      %4007 = vadd.xlane.f32.xlu0 %v4006
      %v4008 = vpop.xlane.xlu0 %4007
      %v4009 = vsel %vm1588, %v3932, 0.0
      %4010 = vadd.xlane.f32.xlu0 %v4009
      %v4011 = vpop.xlane.xlu0 %4010
      %v4012 = vsel %vm1588, %v3934, 0.0
      %4013 = vadd.xlane.f32.xlu0 %v4012
      %v4014 = vpop.xlane.xlu0 %4013
      %v4015 = vsel %vm1588, %v3936, 0.0
      %4016 = vadd.xlane.f32.xlu0 %v4015
      %v4017 = vpop.xlane.xlu0 %4016
      %v4018 = vsel %vm1588, %v3938, 0.0
      %4019 = vadd.xlane.f32.xlu0 %v4018
      %v4020 = vpop.xlane.xlu0 %4019
      %v4021 = vsel %vm1588, %v3940, 0.0
      %4022 = vadd.xlane.f32.xlu0 %v4021
      %v4023 = vpop.xlane.xlu0 %4022
      %v4024 = vsel %vm1588, %v3942, 0.0
      %4025 = vadd.xlane.f32.xlu0 %v4024
      %v4026 = vpop.xlane.xlu0 %4025
      %v4027 = vsel %vm1588, %v3944, 0.0
      %4028 = vadd.xlane.f32.xlu0 %v4027
      %v4029 = vpop.xlane.xlu0 %4028
      %v4030 = vsel %vm1588, %v3946, 0.0
      %4031 = vadd.xlane.f32.xlu0 %v4030
      %v4032 = vpop.xlane.xlu0 %4031
      %v4033 = vsel %vm1588, %v3948, 0.0
      %4034 = vadd.xlane.f32.xlu0 %v4033
      %v4035 = vpop.xlane.xlu0 %4034
      %v4036 = vsel %vm1588, %v3950, 0.0
      %4037 = vadd.xlane.f32.xlu0 %v4036
      %v4038 = vpop.xlane.xlu0 %4037
      %v4039 = vsel %vm1588, %v3952, 0.0
      %4040 = vadd.xlane.f32.xlu0 %v4039
      %v4041 = vpop.xlane.xlu0 %4040
      %v4042 = vsel %vm1588, %v3954, 0.0
      %4043 = vadd.xlane.f32.xlu0 %v4042
      %v4044 = vpop.xlane.xlu0 %4043
      %v4045 = vsel %vm1588, %v3956, 0.0
      %4046 = vadd.xlane.f32.xlu0 %v4045
      %v4047 = vpop.xlane.xlu0 %4046
      %v4048 = vsel %vm1588, %v3958, 0.0
      %4049 = vadd.xlane.f32.xlu0 %v4048
      %v4050 = vpop.xlane.xlu0 %4049
      %v4051 = vsel %vm1588, %v3960, 0.0
      %4052 = vadd.xlane.f32.xlu0 %v4051
      %v4053 = vpop.xlane.xlu0 %4052
      %v4054 = vsel %vm1588, %v3962, 0.0
      %4055 = vadd.xlane.f32.xlu0 %v4054
      %v4056 = vpop.xlane.xlu0 %4055
      %v4057 = vsel %vm1588, %v3964, 0.0
      %4058 = vadd.xlane.f32.xlu0 %v4057
      %v4059 = vpop.xlane.xlu0 %4058
      %v4060 = vsel %vm1588, %v3966, 0.0
      %4061 = vadd.xlane.f32.xlu0 %v4060
      %v4062 = vpop.xlane.xlu0 %4061
      %v4063 = vrcp.pop %v3969
      %v4064 = vrcp.pop %v3972
      %v4065 = vrcp.pop %v3975
      %v4066 = vrcp.pop %v3978
      %v4067 = vrcp.pop %v3981
      %v4068 = vrcp.pop %v3984
      %v4069 = vrcp.pop %v3987
      %v4070 = vrcp.pop %v3990
      %v4071 = vrcp.pop %v3993
      %v4072 = vrcp.pop %v3996
      %v4073 = vrcp.pop %v3999
      %v4074 = vrcp.pop %v4002
      %v4075 = vrcp.pop %v4005
      %v4076 = vrcp.pop %v4008
      %v4077 = vrcp.pop %v4011
      %v4078 = vrcp.pop %v4014
      %v4079 = vrcp.pop %v4017
      %v4080 = vrcp.pop %v4020
      %v4081 = vrcp.pop %v4023
      %v4082 = vrcp.pop %v4026
      %v4083 = vrcp.pop %v4029
      %v4084 = vrcp.pop %v4032
      %v4085 = vrcp.pop %v4035
      %v4086 = vrcp.pop %v4038
      %v4087 = vrcp.pop %v4041
      %v4088 = vrcp.pop %v4044
      %v4089 = vrcp.pop %v4047
      %v4090 = vrcp.pop %v4050
      %v4091 = vrcp.pop %v4053
      %v4092 = vrcp.pop %v4056
      %v4093 = vrcp.pop %v4059
      %v4094 = vrcp.pop %v4062
      %v4095 = vmul.f32 %v3904, %v4063
      %v4096 = vmul.f32 %v3906, %v4064
      %v4097 = vmul.f32 %v3908, %v4065
      %v4098 = vmul.f32 %v3910, %v4066
      %v4099 = vmul.f32 %v3912, %v4067
      %v4100 = vmul.f32 %v3914, %v4068
      %v4101 = vmul.f32 %v3916, %v4069
      %v4102 = vmul.f32 %v3918, %v4070
      %v4103 = vmul.f32 %v3920, %v4071
      %v4104 = vmul.f32 %v3922, %v4072
      %v4105 = vmul.f32 %v3924, %v4073
      %v4106 = vmul.f32 %v3926, %v4074
      %v4107 = vmul.f32 %v3928, %v4075
      %v4108 = vmul.f32 %v3930, %v4076
      %v4109 = vmul.f32 %v3932, %v4077
      %v4110 = vmul.f32 %v3934, %v4078
      %v4111 = vmul.f32 %v3936, %v4079
      %v4112 = vmul.f32 %v3938, %v4080
      %v4113 = vmul.f32 %v3940, %v4081
      %v4114 = vmul.f32 %v3942, %v4082
      %v4115 = vmul.f32 %v3944, %v4083
      %v4116 = vmul.f32 %v3946, %v4084
      %v4117 = vmul.f32 %v3948, %v4085
      %v4118 = vmul.f32 %v3950, %v4086
      %v4119 = vmul.f32 %v3952, %v4087
      %v4120 = vmul.f32 %v3954, %v4088
      %v4121 = vmul.f32 %v3956, %v4089
      %v4122 = vmul.f32 %v3958, %v4090
      %v4123 = vmul.f32 %v3960, %v4091
      %v4124 = vmul.f32 %v3962, %v4092
      %v4125 = vmul.f32 %v3964, %v4093
      %v4126 = vmul.f32 %v3966, %v4094
      %v4127 = vpack.c.bf16 %v4096, %v4095
      %v4128 = vpack.c.bf16 %v4098, %v4097
      %v4129 = vpack.c.bf16 %v4100, %v4099
      %v4130 = vpack.c.bf16 %v4102, %v4101
      %v4131 = vpack.c.bf16 %v4104, %v4103
      %v4132 = vpack.c.bf16 %v4106, %v4105
      %v4133 = vpack.c.bf16 %v4108, %v4107
      %v4134 = vpack.c.bf16 %v4110, %v4109
      %v4135 = vpack.c.bf16 %v4112, %v4111
      %v4136 = vpack.c.bf16 %v4114, %v4113
      %v4137 = vpack.c.bf16 %v4116, %v4115
      %v4138 = vpack.c.bf16 %v4118, %v4117
      %v4139 = vpack.c.bf16 %v4120, %v4119
      %v4140 = vpack.c.bf16 %v4122, %v4121
      %v4141 = vpack.c.bf16 %v4124, %v4123
      %v4142 = vpack.c.bf16 %v4126, %v4125
      %4143 = vrot.lane.b32.xlu0 %v3355, 64
      %v4144 = vpop.permute.xlu0 %4143
      %4145 = vrot.lane.b32.xlu0 %v3356, 64
      %v4146 = vpop.permute.xlu0 %4145
      %4147 = vrot.lane.b32.xlu0 %v3357, 64
      %v4148 = vpop.permute.xlu0 %4147
      %4149 = vrot.lane.b32.xlu0 %v3358, 64
      %v4150 = vpop.permute.xlu0 %4149
      %v4156 = vsel %vm1588, %v4127, 0
      %v4159 = vsel %vm1588, %v4128, 0
      %v4162 = vsel %vm1588, %v4129, 0
      %v4165 = vsel %vm1588, %v4130, 0
      %4167 = vmatprep.subr.bf16.mxu0 0
      %4168 = vmatpush1.bf16.msra.mxu0 %v4144
      %4169 = vmatprep.subr.bf16.mxu0 0
      %4170 = vmatpush1.bf16.msra.mxu0 %v4146
      %4171 = vmatprep.subr.bf16.mxu0 0
      %4172 = vmatpush1.bf16.msra.mxu0 %v4148
      %4173 = vmatprep.subr.bf16.mxu0 0
      %4174 = vmatpush1.bf16.msra.mxu0 %v4150
      %4175 = vmatprep.subr.bf16.mxu0 0
      %4176 = vmatpush1.bf16.msra.mxu0 0
      %4177 = vmatprep.subr.bf16.mxu0 0
      %4178 = vmatpush1.bf16.msra.mxu0 0
      %4179 = vmatprep.subr.bf16.mxu0 0
      %4180 = vmatpush1.bf16.msra.mxu0 0
      %4181 = vmatprep.subr.bf16.mxu0 0
      %4182 = vmatpush1.bf16.msra.mxu0 0
      %4183 = vmatprep.subr.bf16.mxu0 0
      %4184 = vmatpush1.bf16.msra.mxu0 0
      %4185 = vmatprep.subr.bf16.mxu0 0
      %4186 = vmatpush1.bf16.msra.mxu0 0
      %4187 = vmatprep.subr.bf16.mxu0 0
      %4188 = vmatpush1.bf16.msra.mxu0 0
      %4189 = vmatprep.subr.bf16.mxu0 0
      %4190 = vmatpush1.bf16.msra.mxu0 0
      %4191 = vmatprep.subr.bf16.mxu0 0
      %4192 = vmatpush1.bf16.msra.mxu0 0
      %4193 = vmatprep.subr.bf16.mxu0 0
      %4194 = vmatpush1.bf16.msra.mxu0 0
      %4195 = vmatprep.subr.bf16.mxu0 0
      %4196 = vmatpush1.bf16.msra.mxu0 0
      %4197 = vmatprep.subr.bf16.mxu0 0
      %4198 = vmatpush1.bf16.msra.mxu0 0
      %4199 = vmatprep.mubr.bf16.mxu0 0
      %4200 = vmatmul.mubr.bf16.gmra.mrb[0].mxu0 %v4156
      %v4201 = vpop.f32.mrb[0].mxu0
      %v4202 = vadd.f32 0.0, %v4201
      %v4203 = vpop.f32.mrb[0].mxu0
      %v4204 = vpop.f32.mrb[0].mxu0
      %v4205 = vadd.f32 0.0, %v4204
      %v4206 = vpop.f32.mrb[0].mxu0
      %4207 = vmatprep.mubr.bf16.mxu0 0
      %4208 = vmatmul.mubr.bf16.gmra.mrb[0].mxu0 %v4159
      %v4209 = vpop.f32.mrb[0].mxu0
      %v4210 = vadd.f32 0.0, %v4209
      %v4211 = vpop.f32.mrb[0].mxu0
      %v4212 = vpop.f32.mrb[0].mxu0
      %v4213 = vadd.f32 0.0, %v4212
      %v4214 = vpop.f32.mrb[0].mxu0
      %4215 = vmatprep.mubr.bf16.mxu0 0
      %4216 = vmatmul.mubr.bf16.gmra.mrb[0].mxu0 %v4162
      %v4217 = vpop.f32.mrb[0].mxu0
      %v4218 = vadd.f32 0.0, %v4217
      %v4219 = vpop.f32.mrb[0].mxu0
      %v4220 = vpop.f32.mrb[0].mxu0
      %v4221 = vadd.f32 0.0, %v4220
      %v4222 = vpop.f32.mrb[0].mxu0
      %4223 = vmatprep.mubr.bf16.mxu0 0
      %4224 = vmatmul.mubr.bf16.gmra.mrb[0].mxu0 %v4165
      %v4225 = vpop.f32.mrb[0].mxu0
      %v4226 = vadd.f32 0.0, %v4225
      %v4227 = vpop.f32.mrb[0].mxu0
      %v4228 = vpop.f32.mrb[0].mxu0
      %v4229 = vadd.f32 0.0, %v4228
      %v4230 = vpop.f32.mrb[0].mxu0
      %4231 = vdwg.mxu0
      %4232 = vrot.lane.b32.xlu0 %v3359, 64
      %v4233 = vpop.permute.xlu0 %4232
      %4234 = vrot.lane.b32.xlu0 %v3360, 64
      %v4235 = vpop.permute.xlu0 %4234
      %4236 = vrot.lane.b32.xlu0 %v3361, 64
      %v4237 = vpop.permute.xlu0 %4236
      %4238 = vrot.lane.b32.xlu0 %v3362, 64
      %v4239 = vpop.permute.xlu0 %4238
      %v4245 = vsel %vm1588, %v4131, 0
      %v4248 = vsel %vm1588, %v4132, 0
      %v4251 = vsel %vm1588, %v4133, 0
      %v4254 = vsel %vm1588, %v4134, 0
      %4256 = vmatprep.subr.bf16.mxu0 0
      %4257 = vmatpush1.bf16.msra.mxu0 %v4233
      %4258 = vmatprep.subr.bf16.mxu0 0
      %4259 = vmatpush1.bf16.msra.mxu0 %v4235
      %4260 = vmatprep.subr.bf16.mxu0 0
      %4261 = vmatpush1.bf16.msra.mxu0 %v4237
      %4262 = vmatprep.subr.bf16.mxu0 0
      %4263 = vmatpush1.bf16.msra.mxu0 %v4239
      %4264 = vmatprep.subr.bf16.mxu0 0
      %4265 = vmatpush1.bf16.msra.mxu0 0
      %4266 = vmatprep.subr.bf16.mxu0 0
      %4267 = vmatpush1.bf16.msra.mxu0 0
      %4268 = vmatprep.subr.bf16.mxu0 0
      %4269 = vmatpush1.bf16.msra.mxu0 0
      %4270 = vmatprep.subr.bf16.mxu0 0
      %4271 = vmatpush1.bf16.msra.mxu0 0
      %4272 = vmatprep.subr.bf16.mxu0 0
      %4273 = vmatpush1.bf16.msra.mxu0 0
      %4274 = vmatprep.subr.bf16.mxu0 0
      %4275 = vmatpush1.bf16.msra.mxu0 0
      %4276 = vmatprep.subr.bf16.mxu0 0
      %4277 = vmatpush1.bf16.msra.mxu0 0
      %4278 = vmatprep.subr.bf16.mxu0 0
      %4279 = vmatpush1.bf16.msra.mxu0 0
      %4280 = vmatprep.subr.bf16.mxu0 0
      %4281 = vmatpush1.bf16.msra.mxu0 0
      %4282 = vmatprep.subr.bf16.mxu0 0
      %4283 = vmatpush1.bf16.msra.mxu0 0
      %4284 = vmatprep.subr.bf16.mxu0 0
      %4285 = vmatpush1.bf16.msra.mxu0 0
      %4286 = vmatprep.subr.bf16.mxu0 0
      %4287 = vmatpush1.bf16.msra.mxu0 0
      %4288 = vmatprep.mubr.bf16.mxu0 0
      %4289 = vmatmul.mubr.bf16.gmra.mrb[0].mxu0 %v4245
      %v4290 = vpop.f32.mrb[0].mxu0
      %v4291 = vadd.f32 0.0, %v4290
      %v4292 = vpop.f32.mrb[0].mxu0
      %v4293 = vpop.f32.mrb[0].mxu0
      %v4294 = vadd.f32 0.0, %v4293
      %v4295 = vpop.f32.mrb[0].mxu0
      %4296 = vmatprep.mubr.bf16.mxu0 0
      %4297 = vmatmul.mubr.bf16.gmra.mrb[0].mxu0 %v4248
      %v4298 = vpop.f32.mrb[0].mxu0
      %v4299 = vadd.f32 0.0, %v4298
      %v4300 = vpop.f32.mrb[0].mxu0
      %v4301 = vpop.f32.mrb[0].mxu0
      %v4302 = vadd.f32 0.0, %v4301
      %v4303 = vpop.f32.mrb[0].mxu0
      %4304 = vmatprep.mubr.bf16.mxu0 0
      %4305 = vmatmul.mubr.bf16.gmra.mrb[0].mxu0 %v4251
      %v4306 = vpop.f32.mrb[0].mxu0
      %v4307 = vadd.f32 0.0, %v4306
      %v4308 = vpop.f32.mrb[0].mxu0
      %v4309 = vpop.f32.mrb[0].mxu0
      %v4310 = vadd.f32 0.0, %v4309
      %v4311 = vpop.f32.mrb[0].mxu0
      %4312 = vmatprep.mubr.bf16.mxu0 0
      %4313 = vmatmul.mubr.bf16.gmra.mrb[0].mxu0 %v4254
      %v4314 = vpop.f32.mrb[0].mxu0
      %v4315 = vadd.f32 0.0, %v4314
      %v4316 = vpop.f32.mrb[0].mxu0
      %v4317 = vpop.f32.mrb[0].mxu0
      %v4318 = vadd.f32 0.0, %v4317
      %v4319 = vpop.f32.mrb[0].mxu0
      %4320 = vdwg.mxu0
      %4321 = vrot.lane.b32.xlu0 %v3363, 64
      %v4322 = vpop.permute.xlu0 %4321
      %4323 = vrot.lane.b32.xlu0 %v3364, 64
      %v4324 = vpop.permute.xlu0 %4323
      %4325 = vrot.lane.b32.xlu0 %v3365, 64
      %v4326 = vpop.permute.xlu0 %4325
      %4327 = vrot.lane.b32.xlu0 %v3366, 64
      %v4328 = vpop.permute.xlu0 %4327
      %v4334 = vsel %vm1588, %v4135, 0
      %v4337 = vsel %vm1588, %v4136, 0
      %v4340 = vsel %vm1588, %v4137, 0
      %v4343 = vsel %vm1588, %v4138, 0
      %4345 = vmatprep.subr.bf16.mxu0 0
      %4346 = vmatpush1.bf16.msra.mxu0 %v4322
      %4347 = vmatprep.subr.bf16.mxu0 0
      %4348 = vmatpush1.bf16.msra.mxu0 %v4324
      %4349 = vmatprep.subr.bf16.mxu0 0
      %4350 = vmatpush1.bf16.msra.mxu0 %v4326
      %4351 = vmatprep.subr.bf16.mxu0 0
      %4352 = vmatpush1.bf16.msra.mxu0 %v4328
      %4353 = vmatprep.subr.bf16.mxu0 0
      %4354 = vmatpush1.bf16.msra.mxu0 0
      %4355 = vmatprep.subr.bf16.mxu0 0
      %4356 = vmatpush1.bf16.msra.mxu0 0
      %4357 = vmatprep.subr.bf16.mxu0 0
      %4358 = vmatpush1.bf16.msra.mxu0 0
      %4359 = vmatprep.subr.bf16.mxu0 0
      %4360 = vmatpush1.bf16.msra.mxu0 0
      %4361 = vmatprep.subr.bf16.mxu0 0
      %4362 = vmatpush1.bf16.msra.mxu0 0
      %4363 = vmatprep.subr.bf16.mxu0 0
      %4364 = vmatpush1.bf16.msra.mxu0 0
      %4365 = vmatprep.subr.bf16.mxu0 0
      %4366 = vmatpush1.bf16.msra.mxu0 0
      %4367 = vmatprep.subr.bf16.mxu0 0
      %4368 = vmatpush1.bf16.msra.mxu0 0
      %4369 = vmatprep.subr.bf16.mxu0 0
      %4370 = vmatpush1.bf16.msra.mxu0 0
      %4371 = vmatprep.subr.bf16.mxu0 0
      %4372 = vmatpush1.bf16.msra.mxu0 0
      %4373 = vmatprep.subr.bf16.mxu0 0
      %4374 = vmatpush1.bf16.msra.mxu0 0
      %4375 = vmatprep.subr.bf16.mxu0 0
      %4376 = vmatpush1.bf16.msra.mxu0 0
      %4377 = vmatprep.mubr.bf16.mxu0 0
      %4378 = vmatmul.mubr.bf16.gmra.mrb[0].mxu0 %v4334
      %v4379 = vpop.f32.mrb[0].mxu0
      %v4380 = vadd.f32 0.0, %v4379
      %v4381 = vpop.f32.mrb[0].mxu0
      %v4382 = vpop.f32.mrb[0].mxu0
      %v4383 = vadd.f32 0.0, %v4382
      %v4384 = vpop.f32.mrb[0].mxu0
      %4385 = vmatprep.mubr.bf16.mxu0 0
      %4386 = vmatmul.mubr.bf16.gmra.mrb[0].mxu0 %v4337
      %v4387 = vpop.f32.mrb[0].mxu0
      %v4388 = vadd.f32 0.0, %v4387
      %v4389 = vpop.f32.mrb[0].mxu0
      %v4390 = vpop.f32.mrb[0].mxu0
      %v4391 = vadd.f32 0.0, %v4390
      %v4392 = vpop.f32.mrb[0].mxu0
      %4393 = vmatprep.mubr.bf16.mxu0 0
      %4394 = vmatmul.mubr.bf16.gmra.mrb[0].mxu0 %v4340
      %v4395 = vpop.f32.mrb[0].mxu0
      %v4396 = vadd.f32 0.0, %v4395
      %v4397 = vpop.f32.mrb[0].mxu0
      %v4398 = vpop.f32.mrb[0].mxu0
      %v4399 = vadd.f32 0.0, %v4398
      %v4400 = vpop.f32.mrb[0].mxu0
      %4401 = vmatprep.mubr.bf16.mxu0 0
      %4402 = vmatmul.mubr.bf16.gmra.mrb[0].mxu0 %v4343
      %v4403 = vpop.f32.mrb[0].mxu0
      %v4404 = vadd.f32 0.0, %v4403
      %v4405 = vpop.f32.mrb[0].mxu0
      %v4406 = vpop.f32.mrb[0].mxu0
      %v4407 = vadd.f32 0.0, %v4406
      %v4408 = vpop.f32.mrb[0].mxu0
      %4409 = vdwg.mxu0
      %4410 = vrot.lane.b32.xlu0 %v3367, 64
      %v4411 = vpop.permute.xlu0 %4410
      %4412 = vrot.lane.b32.xlu0 %v3368, 64
      %v4413 = vpop.permute.xlu0 %4412
      %4414 = vrot.lane.b32.xlu0 %v3369, 64
      %v4415 = vpop.permute.xlu0 %4414
      %4416 = vrot.lane.b32.xlu0 %v3370, 64
      %v4417 = vpop.permute.xlu0 %4416
      %v4423 = vsel %vm1588, %v4139, 0
      %v4426 = vsel %vm1588, %v4140, 0
      %v4429 = vsel %vm1588, %v4141, 0
      %v4432 = vsel %vm1588, %v4142, 0
      %4434 = vmatprep.subr.bf16.mxu0 0
      %4435 = vmatpush1.bf16.msra.mxu0 %v4411
      %4436 = vmatprep.subr.bf16.mxu0 0
      %4437 = vmatpush1.bf16.msra.mxu0 %v4413
      %4438 = vmatprep.subr.bf16.mxu0 0
      %4439 = vmatpush1.bf16.msra.mxu0 %v4415
      %4440 = vmatprep.subr.bf16.mxu0 0
      %4441 = vmatpush1.bf16.msra.mxu0 %v4417
      %4442 = vmatprep.subr.bf16.mxu0 0
      %4443 = vmatpush1.bf16.msra.mxu0 0
      %4444 = vmatprep.subr.bf16.mxu0 0
      %4445 = vmatpush1.bf16.msra.mxu0 0
      %4446 = vmatprep.subr.bf16.mxu0 0
      %4447 = vmatpush1.bf16.msra.mxu0 0
      %4448 = vmatprep.subr.bf16.mxu0 0
      %4449 = vmatpush1.bf16.msra.mxu0 0
      %4450 = vmatprep.subr.bf16.mxu0 0
      %4451 = vmatpush1.bf16.msra.mxu0 0
      %4452 = vmatprep.subr.bf16.mxu0 0
      %4453 = vmatpush1.bf16.msra.mxu0 0
      %4454 = vmatprep.subr.bf16.mxu0 0
      %4455 = vmatpush1.bf16.msra.mxu0 0
      %4456 = vmatprep.subr.bf16.mxu0 0
      %4457 = vmatpush1.bf16.msra.mxu0 0
      %4458 = vmatprep.subr.bf16.mxu0 0
      %4459 = vmatpush1.bf16.msra.mxu0 0
      %4460 = vmatprep.subr.bf16.mxu0 0
      %4461 = vmatpush1.bf16.msra.mxu0 0
      %4462 = vmatprep.subr.bf16.mxu0 0
      %4463 = vmatpush1.bf16.msra.mxu0 0
      %4464 = vmatprep.subr.bf16.mxu0 0
      %4465 = vmatpush1.bf16.msra.mxu0 0
      %4466 = vmatprep.mubr.bf16.mxu0 0
      %4467 = vmatmul.mubr.bf16.gmra.mrb[0].mxu0 %v4423
      %v4468 = vpop.f32.mrb[0].mxu0
      %v4469 = vadd.f32 0.0, %v4468
      %v4470 = vpop.f32.mrb[0].mxu0
      %v4471 = vpop.f32.mrb[0].mxu0
      %v4472 = vadd.f32 0.0, %v4471
      %v4473 = vpop.f32.mrb[0].mxu0
      %4474 = vmatprep.mubr.bf16.mxu0 0
      %4475 = vmatmul.mubr.bf16.gmra.mrb[0].mxu0 %v4426
      %v4476 = vpop.f32.mrb[0].mxu0
      %v4477 = vadd.f32 0.0, %v4476
      %v4478 = vpop.f32.mrb[0].mxu0
      %v4479 = vpop.f32.mrb[0].mxu0
      %v4480 = vadd.f32 0.0, %v4479
      %v4481 = vpop.f32.mrb[0].mxu0
      %4482 = vmatprep.mubr.bf16.mxu0 0
      %4483 = vmatmul.mubr.bf16.gmra.mrb[0].mxu0 %v4429
      %v4484 = vpop.f32.mrb[0].mxu0
      %v4485 = vadd.f32 0.0, %v4484
      %v4486 = vpop.f32.mrb[0].mxu0
      %v4487 = vpop.f32.mrb[0].mxu0
      %v4488 = vadd.f32 0.0, %v4487
      %v4489 = vpop.f32.mrb[0].mxu0
      %4490 = vmatprep.mubr.bf16.mxu0 0
      %4491 = vmatmul.mubr.bf16.gmra.mrb[0].mxu0 %v4432
      %v4492 = vpop.f32.mrb[0].mxu0
      %v4493 = vadd.f32 0.0, %v4492
      %v4494 = vpop.f32.mrb[0].mxu0
      %v4495 = vpop.f32.mrb[0].mxu0
      %v4496 = vadd.f32 0.0, %v4495
      %v4497 = vpop.f32.mrb[0].mxu0
      %4498 = vdwg.mxu0
      %4507 = vrot.lane.b32.xlu0 %v4291, 8
      %v4508 = vpop.permute.xlu0 %4507
      %4509 = vrot.lane.b32.xlu0 %v4294, 8
      %v4510 = vpop.permute.xlu0 %4509
      %4511 = vrot.lane.b32.xlu0 %v4299, 8
      %v4512 = vpop.permute.xlu0 %4511
      %4513 = vrot.lane.b32.xlu0 %v4302, 8
      %v4514 = vpop.permute.xlu0 %4513
      %4515 = vrot.lane.b32.xlu0 %v4307, 8
      %v4516 = vpop.permute.xlu0 %4515
      %4517 = vrot.lane.b32.xlu0 %v4310, 8
      %v4518 = vpop.permute.xlu0 %4517
      %4519 = vrot.lane.b32.xlu0 %v4315, 8
      %v4520 = vpop.permute.xlu0 %4519
      %4521 = vrot.lane.b32.xlu0 %v4318, 8
      %v4522 = vpop.permute.xlu0 %4521
      %4539 = vrot.lane.b32.xlu0 %v4380, 16
      %v4540 = vpop.permute.xlu0 %4539
      %4541 = vrot.lane.b32.xlu0 %v4383, 16
      %v4542 = vpop.permute.xlu0 %4541
      %4543 = vrot.lane.b32.xlu0 %v4388, 16
      %v4544 = vpop.permute.xlu0 %4543
      %4545 = vrot.lane.b32.xlu0 %v4391, 16
      %v4546 = vpop.permute.xlu0 %4545
      %4547 = vrot.lane.b32.xlu0 %v4396, 16
      %v4548 = vpop.permute.xlu0 %4547
      %4549 = vrot.lane.b32.xlu0 %v4399, 16
      %v4550 = vpop.permute.xlu0 %4549
      %4551 = vrot.lane.b32.xlu0 %v4404, 16
      %v4552 = vpop.permute.xlu0 %4551
      %4553 = vrot.lane.b32.xlu0 %v4407, 16
      %v4554 = vpop.permute.xlu0 %4553
      %4571 = vrot.lane.b32.xlu0 %v4469, 24
      %v4572 = vpop.permute.xlu0 %4571
      %4573 = vrot.lane.b32.xlu0 %v4472, 24
      %v4574 = vpop.permute.xlu0 %4573
      %4575 = vrot.lane.b32.xlu0 %v4477, 24
      %v4576 = vpop.permute.xlu0 %4575
      %4577 = vrot.lane.b32.xlu0 %v4480, 24
      %v4578 = vpop.permute.xlu0 %4577
      %4579 = vrot.lane.b32.xlu0 %v4485, 24
      %v4580 = vpop.permute.xlu0 %4579
      %4581 = vrot.lane.b32.xlu0 %v4488, 24
      %v4582 = vpop.permute.xlu0 %4581
      %4583 = vrot.lane.b32.xlu0 %v4493, 24
      %v4584 = vpop.permute.xlu0 %4583
      %4585 = vrot.lane.b32.xlu0 %v4496, 24
      %v4586 = vpop.permute.xlu0 %4585
      %v4595 = vsel %vm1195, %v4202, %v4508
      %v4596 = vsel %vm1195, %v4205, %v4510
      %v4597 = vsel %vm1195, %v4210, %v4512
      %v4598 = vsel %vm1195, %v4213, %v4514
      %v4599 = vsel %vm1195, %v4218, %v4516
      %v4600 = vsel %vm1195, %v4221, %v4518
      %v4601 = vsel %vm1195, %v4226, %v4520
      %v4602 = vsel %vm1195, %v4229, %v4522
      %v4603 = vsel %vm2417, %v4595, %v4540
      %v4604 = vsel %vm2417, %v4596, %v4542
      %v4605 = vsel %vm2417, %v4597, %v4544
      %v4606 = vsel %vm2417, %v4598, %v4546
      %v4607 = vsel %vm2417, %v4599, %v4548
      %v4608 = vsel %vm2417, %v4600, %v4550
      %v4609 = vsel %vm2417, %v4601, %v4552
      %v4610 = vsel %vm2417, %v4602, %v4554
      %v4611 = vsel %vm2426, %v4603, %v4572
      %v4612 = vsel %vm2426, %v4604, %v4574
      %v4613 = vsel %vm2426, %v4605, %v4576
      %v4614 = vsel %vm2426, %v4606, %v4578
      %v4615 = vsel %vm2426, %v4607, %v4580
      %v4616 = vsel %vm2426, %v4608, %v4582
      %v4617 = vsel %vm2426, %v4609, %v4584
      %v4618 = vsel %vm2426, %v4610, %v4586
      %v4619 = vpack.c.bf16 %v4612, %v4611
      %v4620 = vpack.c.bf16 %v4614, %v4613
      %v4621 = vpack.c.bf16 %v4616, %v4615
      %v4622 = vpack.c.bf16 %v4618, %v4617
      %s4623 = scalar_lea.vmem %s7, 16
      %v4624 = vld [vmem:[%s4623] sm:$0xf]
      %v4625 = vld [vmem:[%s4623 + $0x4] sm:$0xf]
      %v4626 = vld [vmem:[%s4623 + $0x8] sm:$0xf]
      %v4627 = vld [vmem:[%s4623 + $0xc] sm:$0xf]
      %s4628 = scalar_lea.vmem %s8, 1
      %v4629 = vld [vmem:[%s4628] sm:$0x1]
      %v4631 = vlaneseq
      %v4632 = vshrl.u32 %v4631, 7
      %v4633 = vsub.s32 0, %v4632
      %v4634 = vrot.slane %v4629, %v4633
      %v4640 = vunpack.c.l.b16 %v4624
      %v4641 = vunpack.c.l.b16 %v4625
      %v4642 = vunpack.c.l.b16 %v4626
      %v4643 = vunpack.c.l.b16 %v4627
      %v4644 = vpack.c.b16 %v4641, %v4640
      %v4645 = vpack.c.b16 %v4643, %v4642
      %v4649 = vsel %vm792, %v4619, 0
      %v4652 = vsel %vm792, %v4620, 0
      %v4655 = vsel %vm792, %v4621, 0
      %v4658 = vsel %vm792, %v4622, 0
      %4660 = vmatprep.subr.bf16.mxu0 0
      %4661 = vmatpush1.bf16.msra.mxu0 %v4644
      %4662 = vmatprep.subr.bf16.mxu0 0
      %4663 = vmatpush1.bf16.msra.mxu0 %v4645
      %4664 = vmatprep.subr.bf16.mxu0 0
      %4665 = vmatpush1.bf16.msra.mxu0 0
      %4666 = vmatprep.subr.bf16.mxu0 0
      %4667 = vmatpush1.bf16.msra.mxu0 0
      %4668 = vmatprep.subr.bf16.mxu0 0
      %4669 = vmatpush1.bf16.msra.mxu0 0
      %4670 = vmatprep.subr.bf16.mxu0 0
      %4671 = vmatpush1.bf16.msra.mxu0 0
      %4672 = vmatprep.subr.bf16.mxu0 0
      %4673 = vmatpush1.bf16.msra.mxu0 0
      %4674 = vmatprep.subr.bf16.mxu0 0
      %4675 = vmatpush1.bf16.msra.mxu0 0
      %4676 = vmatprep.subr.bf16.mxu0 0
      %4677 = vmatpush1.bf16.msra.mxu0 0
      %4678 = vmatprep.subr.bf16.mxu0 0
      %4679 = vmatpush1.bf16.msra.mxu0 0
      %4680 = vmatprep.subr.bf16.mxu0 0
      %4681 = vmatpush1.bf16.msra.mxu0 0
      %4682 = vmatprep.subr.bf16.mxu0 0
      %4683 = vmatpush1.bf16.msra.mxu0 0
      %4684 = vmatprep.subr.bf16.mxu0 0
      %4685 = vmatpush1.bf16.msra.mxu0 0
      %4686 = vmatprep.subr.bf16.mxu0 0
      %4687 = vmatpush1.bf16.msra.mxu0 0
      %4688 = vmatprep.subr.bf16.mxu0 0
      %4689 = vmatpush1.bf16.msra.mxu0 0
      %4690 = vmatprep.subr.bf16.mxu0 0
      %4691 = vmatpush1.bf16.msra.mxu0 0
      %4692 = vmatprep.mubr.bf16.mxu0 0
      %4693 = vmatmul.mubr.bf16.gmra.mrb[0].mxu0 %v4649
      %v4694 = vpop.f32.mrb[0].mxu0
      %v4695 = vadd.f32 %v4634, %v4694
      %v4696 = vpop.f32.mrb[0].mxu0
      %v4697 = vpop.f32.mrb[0].mxu0
      %v4698 = vadd.f32 %v4634, %v4697
      %v4699 = vpop.f32.mrb[0].mxu0
      %4700 = vmatprep.mubr.bf16.mxu0 0
      %4701 = vmatmul.mubr.bf16.gmra.mrb[0].mxu0 %v4652
      %v4702 = vpop.f32.mrb[0].mxu0
      %v4703 = vadd.f32 %v4634, %v4702
      %v4704 = vpop.f32.mrb[0].mxu0
      %v4705 = vpop.f32.mrb[0].mxu0
      %v4706 = vadd.f32 %v4634, %v4705
      %v4707 = vpop.f32.mrb[0].mxu0
      %4708 = vmatprep.mubr.bf16.mxu0 0
      %4709 = vmatmul.mubr.bf16.gmra.mrb[0].mxu0 %v4655
      %v4710 = vpop.f32.mrb[0].mxu0
      %v4711 = vadd.f32 %v4634, %v4710
      %v4712 = vpop.f32.mrb[0].mxu0
      %v4713 = vpop.f32.mrb[0].mxu0
      %v4714 = vadd.f32 %v4634, %v4713
      %v4715 = vpop.f32.mrb[0].mxu0
      %4716 = vmatprep.mubr.bf16.mxu0 0
      %4717 = vmatmul.mubr.bf16.gmra.mrb[0].mxu0 %v4658
      %v4718 = vpop.f32.mrb[0].mxu0
      %v4719 = vadd.f32 %v4634, %v4718
      %v4720 = vpop.f32.mrb[0].mxu0
      %v4721 = vpop.f32.mrb[0].mxu0
      %v4722 = vadd.f32 %v4634, %v4721
      %v4723 = vpop.f32.mrb[0].mxu0
      %4724 = vdwg.mxu0
      %v4725 = vadd.f32 %v2969, %v4695
      %v4726 = vadd.f32 %v2970, %v4698
      %v4727 = vadd.f32 %v2971, %v4703
      %v4728 = vadd.f32 %v2972, %v4706
      %v4729 = vadd.f32 %v2973, %v4711
      %v4730 = vadd.f32 %v2974, %v4714
      %v4731 = vadd.f32 %v2975, %v4719
      %v4732 = vadd.f32 %v2976, %v4722
      %s4733 = scalar_lea.vmem %s9, 1
      %v4734 = vld [vmem:[%s4733] sm:$0x1]
      %s4735 = scalar_lea.vmem %s10, 1
      %v4736 = vld [vmem:[%s4735] sm:$0x1]
      %v4737 = vsel %vm792, %v4725, 0.0
      %4738 = vadd.xlane.f32.xlu0 %v4737
      %v4739 = vpop.xlane.xlu0 %4738
      %v4740 = vsel %vm792, %v4726, 0.0
      %4741 = vadd.xlane.f32.xlu0 %v4740
      %v4742 = vpop.xlane.xlu0 %4741
      %v4743 = vsel %vm792, %v4727, 0.0
      %4744 = vadd.xlane.f32.xlu0 %v4743
      %v4745 = vpop.xlane.xlu0 %4744
      %v4746 = vsel %vm792, %v4728, 0.0
      %4747 = vadd.xlane.f32.xlu0 %v4746
      %v4748 = vpop.xlane.xlu0 %4747
      %v4749 = vsel %vm792, %v4729, 0.0
      %4750 = vadd.xlane.f32.xlu0 %v4749
      %v4751 = vpop.xlane.xlu0 %4750
      %v4752 = vsel %vm792, %v4730, 0.0
      %4753 = vadd.xlane.f32.xlu0 %v4752
      %v4754 = vpop.xlane.xlu0 %4753
      %v4755 = vsel %vm792, %v4731, 0.0
      %4756 = vadd.xlane.f32.xlu0 %v4755
      %v4757 = vpop.xlane.xlu0 %4756
      %v4758 = vsel %vm792, %v4732, 0.0
      %4759 = vadd.xlane.f32.xlu0 %v4758
      %v4760 = vpop.xlane.xlu0 %4759
      %v4761 = vmul.f32 %v4739, %v817
      %v4762 = vmul.f32 %v4742, %v817
      %v4763 = vmul.f32 %v4745, %v817
      %v4764 = vmul.f32 %v4748, %v817
      %v4765 = vmul.f32 %v4751, %v817
      %v4766 = vmul.f32 %v4754, %v817
      %v4767 = vmul.f32 %v4757, %v817
      %v4768 = vmul.f32 %v4760, %v817
      %v4769 = vsub.f32 %v4725, %v4761
      %v4770 = vsub.f32 %v4726, %v4762
      %v4771 = vsub.f32 %v4727, %v4763
      %v4772 = vsub.f32 %v4728, %v4764
      %v4773 = vsub.f32 %v4729, %v4765
      %v4774 = vsub.f32 %v4730, %v4766
      %v4775 = vsub.f32 %v4731, %v4767
      %v4776 = vsub.f32 %v4732, %v4768
      %v4777 = vmul.f32 %v4769, %v4769
      %v4778 = vmul.f32 %v4770, %v4770
      %v4779 = vmul.f32 %v4771, %v4771
      %v4780 = vmul.f32 %v4772, %v4772
      %v4781 = vmul.f32 %v4773, %v4773
      %v4782 = vmul.f32 %v4774, %v4774
      %v4783 = vmul.f32 %v4775, %v4775
      %v4784 = vmul.f32 %v4776, %v4776
      %v4785 = vsel %vm792, %v4777, 0.0
      %4786 = vadd.xlane.f32.xlu0 %v4785
      %v4787 = vpop.xlane.xlu0 %4786
      %v4788 = vsel %vm792, %v4778, 0.0
      %4789 = vadd.xlane.f32.xlu0 %v4788
      %v4790 = vpop.xlane.xlu0 %4789
      %v4791 = vsel %vm792, %v4779, 0.0
      %4792 = vadd.xlane.f32.xlu0 %v4791
      %v4793 = vpop.xlane.xlu0 %4792
      %v4794 = vsel %vm792, %v4780, 0.0
      %4795 = vadd.xlane.f32.xlu0 %v4794
      %v4796 = vpop.xlane.xlu0 %4795
      %v4797 = vsel %vm792, %v4781, 0.0
      %4798 = vadd.xlane.f32.xlu0 %v4797
      %v4799 = vpop.xlane.xlu0 %4798
      %v4800 = vsel %vm792, %v4782, 0.0
      %4801 = vadd.xlane.f32.xlu0 %v4800
      %v4802 = vpop.xlane.xlu0 %4801
      %v4803 = vsel %vm792, %v4783, 0.0
      %4804 = vadd.xlane.f32.xlu0 %v4803
      %v4805 = vpop.xlane.xlu0 %4804
      %v4806 = vsel %vm792, %v4784, 0.0
      %4807 = vadd.xlane.f32.xlu0 %v4806
      %v4808 = vpop.xlane.xlu0 %4807
      %v4809 = vmul.f32 %v4787, %v866
      %v4810 = vmul.f32 %v4790, %v866
      %v4811 = vmul.f32 %v4793, %v866
      %v4812 = vmul.f32 %v4796, %v866
      %v4813 = vmul.f32 %v4799, %v866
      %v4814 = vmul.f32 %v4802, %v866
      %v4815 = vmul.f32 %v4805, %v866
      %v4816 = vmul.f32 %v4808, %v866
      %v4817 = vrsqrt.pop %v4809
      %v4818 = vmul.f32 %v4809, %v4817
      %vm4819 = vcmp.eq.f32.partialorder %v4809, inf
      %v4820 = vsel %vm4819, %v4809, %v4818
      %vm4821 = vcmp.eq.f32.partialorder %v4809, 0.0
      %v4822 = vand.u32 %v4809, 2147483648
      %v4823 = vsel %vm4821, %v4822, %v4820
      %v4824 = vrsqrt.pop %v4810
      %v4825 = vmul.f32 %v4810, %v4824
      %vm4826 = vcmp.eq.f32.partialorder %v4810, inf
      %v4827 = vsel %vm4826, %v4810, %v4825
      %vm4828 = vcmp.eq.f32.partialorder %v4810, 0.0
      %v4829 = vand.u32 %v4810, 2147483648
      %v4830 = vsel %vm4828, %v4829, %v4827
      %v4831 = vrsqrt.pop %v4811
      %v4832 = vmul.f32 %v4811, %v4831
      %vm4833 = vcmp.eq.f32.partialorder %v4811, inf
      %v4834 = vsel %vm4833, %v4811, %v4832
      %vm4835 = vcmp.eq.f32.partialorder %v4811, 0.0
      %v4836 = vand.u32 %v4811, 2147483648
      %v4837 = vsel %vm4835, %v4836, %v4834
      %v4838 = vrsqrt.pop %v4812
      %v4839 = vmul.f32 %v4812, %v4838
      %vm4840 = vcmp.eq.f32.partialorder %v4812, inf
      %v4841 = vsel %vm4840, %v4812, %v4839
      %vm4842 = vcmp.eq.f32.partialorder %v4812, 0.0
      %v4843 = vand.u32 %v4812, 2147483648
      %v4844 = vsel %vm4842, %v4843, %v4841
      %v4845 = vrsqrt.pop %v4813
      %v4846 = vmul.f32 %v4813, %v4845
      %vm4847 = vcmp.eq.f32.partialorder %v4813, inf
      %v4848 = vsel %vm4847, %v4813, %v4846
      %vm4849 = vcmp.eq.f32.partialorder %v4813, 0.0
      %v4850 = vand.u32 %v4813, 2147483648
      %v4851 = vsel %vm4849, %v4850, %v4848
      %v4852 = vrsqrt.pop %v4814
      %v4853 = vmul.f32 %v4814, %v4852
      %vm4854 = vcmp.eq.f32.partialorder %v4814, inf
      %v4855 = vsel %vm4854, %v4814, %v4853
      %vm4856 = vcmp.eq.f32.partialorder %v4814, 0.0
      %v4857 = vand.u32 %v4814, 2147483648
      %v4858 = vsel %vm4856, %v4857, %v4855
      %v4859 = vrsqrt.pop %v4815
      %v4860 = vmul.f32 %v4815, %v4859
      %vm4861 = vcmp.eq.f32.partialorder %v4815, inf
      %v4862 = vsel %vm4861, %v4815, %v4860
      %vm4863 = vcmp.eq.f32.partialorder %v4815, 0.0
      %v4864 = vand.u32 %v4815, 2147483648
      %v4865 = vsel %vm4863, %v4864, %v4862
      %v4866 = vrsqrt.pop %v4816
      %v4867 = vmul.f32 %v4816, %v4866
      %vm4868 = vcmp.eq.f32.partialorder %v4816, inf
      %v4869 = vsel %vm4868, %v4816, %v4867
      %vm4870 = vcmp.eq.f32.partialorder %v4816, 0.0
      %v4871 = vand.u32 %v4816, 2147483648
      %v4872 = vsel %vm4870, %v4871, %v4869
      %v4873 = vadd.f32 %v4823, 1e-06
      %v4874 = vadd.f32 %v4830, 1e-06
      %v4875 = vadd.f32 %v4837, 1e-06
      %v4876 = vadd.f32 %v4844, 1e-06
      %v4877 = vadd.f32 %v4851, 1e-06
      %v4878 = vadd.f32 %v4858, 1e-06
      %v4879 = vadd.f32 %v4865, 1e-06
      %v4880 = vadd.f32 %v4872, 1e-06
      %v4882 = vlaneseq
      %v4883 = vshrl.u32 %v4882, 7
      %v4884 = vsub.s32 0, %v4883
      %v4885 = vrot.slane %v4734, %v4884
      %v4887 = vmul.f32 %v4885, %v4769
      %v4888 = vmul.f32 %v4885, %v4770
      %v4889 = vmul.f32 %v4885, %v4771
      %v4890 = vmul.f32 %v4885, %v4772
      %v4891 = vmul.f32 %v4885, %v4773
      %v4892 = vmul.f32 %v4885, %v4774
      %v4893 = vmul.f32 %v4885, %v4775
      %v4894 = vmul.f32 %v4885, %v4776
      %v4895 = vrcp.pop %v4873
      %v4896 = vrcp.pop %v4874
      %v4897 = vrcp.pop %v4875
      %v4898 = vrcp.pop %v4876
      %v4899 = vrcp.pop %v4877
      %v4900 = vrcp.pop %v4878
      %v4901 = vrcp.pop %v4879
      %v4902 = vrcp.pop %v4880
      %v4903 = vmul.f32 %v4887, %v4895
      %v4904 = vmul.f32 %v4888, %v4896
      %v4905 = vmul.f32 %v4889, %v4897
      %v4906 = vmul.f32 %v4890, %v4898
      %v4907 = vmul.f32 %v4891, %v4899
      %v4908 = vmul.f32 %v4892, %v4900
      %v4909 = vmul.f32 %v4893, %v4901
      %v4910 = vmul.f32 %v4894, %v4902
      %v4912 = vlaneseq
      %v4913 = vshrl.u32 %v4912, 7
      %v4914 = vsub.s32 0, %v4913
      %v4915 = vrot.slane %v4736, %v4914
      %v4917 = vadd.f32 %v4903, %v4915
      %v4918 = vadd.f32 %v4904, %v4915
      %v4919 = vadd.f32 %v4905, %v4915
      %v4920 = vadd.f32 %v4906, %v4915
      %v4921 = vadd.f32 %v4907, %v4915
      %v4922 = vadd.f32 %v4908, %v4915
      %v4923 = vadd.f32 %v4909, %v4915
      %v4924 = vadd.f32 %v4910, %v4915
      %v4925 = vpack.c.bf16 %v4918, %v4917
      %v4926 = vpack.c.bf16 %v4920, %v4919
      %v4927 = vpack.c.bf16 %v4922, %v4921
      %v4928 = vpack.c.bf16 %v4924, %v4923
      %s4929 = scalar_lea.vmem %s11, 16
      %v4930 = vld [vmem:[%s4929] sm:$0xf]
      %v4931 = vld [vmem:[%s4929 + $0x4] sm:$0xf]
      %v4932 = vld [vmem:[%s4929 + $0x8] sm:$0xf]
      %v4933 = vld [vmem:[%s4929 + $0xc] sm:$0xf]
      %s4934 = scalar_lea.vmem %s12, 1
      %v4935 = vld [vmem:[%s4934] sm:$0x1]
      %v4937 = vlaneseq
      %v4938 = vshrl.u32 %v4937, 7
      %v4939 = vsub.s32 0, %v4938
      %v4940 = vrot.slane %v4935, %v4939
      %v4946 = vunpack.c.l.b16 %v4930
      %v4947 = vunpack.c.l.b16 %v4931
      %v4948 = vunpack.c.l.b16 %v4932
      %v4949 = vunpack.c.l.b16 %v4933
      %v4950 = vpack.c.b16 %v4947, %v4946
      %v4951 = vpack.c.b16 %v4949, %v4948
      %v4955 = vsel %vm792, %v4925, 0
      %v4958 = vsel %vm792, %v4926, 0
      %v4961 = vsel %vm792, %v4927, 0
      %v4964 = vsel %vm792, %v4928, 0
      %4966 = vmatprep.subr.bf16.mxu0 0
      %4967 = vmatpush1.bf16.msra.mxu0 %v4950
      %4968 = vmatprep.subr.bf16.mxu0 0
      %4969 = vmatpush1.bf16.msra.mxu0 %v4951
      %4970 = vmatprep.subr.bf16.mxu0 0
      %4971 = vmatpush1.bf16.msra.mxu0 0
      %4972 = vmatprep.subr.bf16.mxu0 0
      %4973 = vmatpush1.bf16.msra.mxu0 0
      %4974 = vmatprep.subr.bf16.mxu0 0
      %4975 = vmatpush1.bf16.msra.mxu0 0
      %4976 = vmatprep.subr.bf16.mxu0 0
      %4977 = vmatpush1.bf16.msra.mxu0 0
      %4978 = vmatprep.subr.bf16.mxu0 0
      %4979 = vmatpush1.bf16.msra.mxu0 0
      %4980 = vmatprep.subr.bf16.mxu0 0
      %4981 = vmatpush1.bf16.msra.mxu0 0
      %4982 = vmatprep.subr.bf16.mxu0 0
      %4983 = vmatpush1.bf16.msra.mxu0 0
      %4984 = vmatprep.subr.bf16.mxu0 0
      %4985 = vmatpush1.bf16.msra.mxu0 0
      %4986 = vmatprep.subr.bf16.mxu0 0
      %4987 = vmatpush1.bf16.msra.mxu0 0
      %4988 = vmatprep.subr.bf16.mxu0 0
      %4989 = vmatpush1.bf16.msra.mxu0 0
      %4990 = vmatprep.subr.bf16.mxu0 0
      %4991 = vmatpush1.bf16.msra.mxu0 0
      %4992 = vmatprep.subr.bf16.mxu0 0
      %4993 = vmatpush1.bf16.msra.mxu0 0
      %4994 = vmatprep.subr.bf16.mxu0 0
      %4995 = vmatpush1.bf16.msra.mxu0 0
      %4996 = vmatprep.subr.bf16.mxu0 0
      %4997 = vmatpush1.bf16.msra.mxu0 0
      %4998 = vmatprep.mubr.bf16.mxu0 0
      %4999 = vmatmul.mubr.bf16.gmra.mrb[0].mxu0 %v4955
      %v5000 = vpop.f32.mrb[0].mxu0
      %v5001 = vadd.f32 %v4940, %v5000
      %v5002 = vpop.f32.mrb[0].mxu0
      %v5003 = vpop.f32.mrb[0].mxu0
      %v5004 = vadd.f32 %v4940, %v5003
      %v5005 = vpop.f32.mrb[0].mxu0
      %5006 = vmatprep.mubr.bf16.mxu0 0
      %5007 = vmatmul.mubr.bf16.gmra.mrb[0].mxu0 %v4958
      %v5008 = vpop.f32.mrb[0].mxu0
      %v5009 = vadd.f32 %v4940, %v5008
      %v5010 = vpop.f32.mrb[0].mxu0
      %v5011 = vpop.f32.mrb[0].mxu0
      %v5012 = vadd.f32 %v4940, %v5011
      %v5013 = vpop.f32.mrb[0].mxu0
      %5014 = vmatprep.mubr.bf16.mxu0 0
      %5015 = vmatmul.mubr.bf16.gmra.mrb[0].mxu0 %v4961
      %v5016 = vpop.f32.mrb[0].mxu0
      %v5017 = vadd.f32 %v4940, %v5016
      %v5018 = vpop.f32.mrb[0].mxu0
      %v5019 = vpop.f32.mrb[0].mxu0
      %v5020 = vadd.f32 %v4940, %v5019
      %v5021 = vpop.f32.mrb[0].mxu0
      %5022 = vmatprep.mubr.bf16.mxu0 0
      %5023 = vmatmul.mubr.bf16.gmra.mrb[0].mxu0 %v4964
      %v5024 = vpop.f32.mrb[0].mxu0
      %v5025 = vadd.f32 %v4940, %v5024
      %v5026 = vpop.f32.mrb[0].mxu0
      %v5027 = vpop.f32.mrb[0].mxu0
      %v5028 = vadd.f32 %v4940, %v5027
      %v5029 = vpop.f32.mrb[0].mxu0
      %5030 = vdwg.mxu0
      %v5031 = vmax.f32 %v5001, 0.0
      %v5032 = vmax.f32 %v5004, 0.0
      %v5033 = vmax.f32 %v5009, 0.0
      %v5034 = vmax.f32 %v5012, 0.0
      %v5035 = vmax.f32 %v5017, 0.0
      %v5036 = vmax.f32 %v5020, 0.0
      %v5037 = vmax.f32 %v5025, 0.0
      %v5038 = vmax.f32 %v5028, 0.0
      %v5039 = vpack.c.bf16 %v5032, %v5031
      %v5040 = vpack.c.bf16 %v5034, %v5033
      %v5041 = vpack.c.bf16 %v5036, %v5035
      %v5042 = vpack.c.bf16 %v5038, %v5037
      %s5043 = scalar_lea.vmem %s13, 32
      %v5044 = vld [vmem:[%s5043] sm:$0xf]
      %v5045 = vld [vmem:[%s5043 + $0x4] sm:$0xf]
      %v5046 = vld [vmem:[%s5043 + $0x8] sm:$0xf]
      %v5047 = vld [vmem:[%s5043 + $0xc] sm:$0xf]
      %v5048 = vld [vmem:[%s5043 + $0x10] sm:$0xf]
      %v5049 = vld [vmem:[%s5043 + $0x14] sm:$0xf]
      %v5050 = vld [vmem:[%s5043 + $0x18] sm:$0xf]
      %v5051 = vld [vmem:[%s5043 + $0x1c] sm:$0xf]
      %s5052 = scalar_lea.vmem %s14, 1
      %v5053 = vld [vmem:[%s5052] sm:$0x1]
      %v5055 = vlaneseq
      %v5056 = vshrl.u32 %v5055, 7
      %v5057 = vsub.s32 0, %v5056
      %v5058 = vrot.slane %v5053, %v5057
      %v5068 = vunpack.c.l.b16 %v5044
      %v5069 = vunpack.c.l.b16 %v5045
      %v5070 = vunpack.c.l.b16 %v5046
      %v5071 = vunpack.c.l.b16 %v5047
      %v5072 = vunpack.c.l.b16 %v5048
      %v5073 = vunpack.c.l.b16 %v5049
      %v5074 = vunpack.c.l.b16 %v5050
      %v5075 = vunpack.c.l.b16 %v5051
      %v5076 = vpack.c.b16 %v5069, %v5068
      %v5077 = vpack.c.b16 %v5071, %v5070
      %v5078 = vpack.c.b16 %v5073, %v5072
      %v5079 = vpack.c.b16 %v5075, %v5074
      %v5085 = vsel %vm1588, %v5039, 0
      %v5088 = vsel %vm1588, %v5040, 0
      %v5091 = vsel %vm1588, %v5041, 0
      %v5094 = vsel %vm1588, %v5042, 0
      %5096 = vmatprep.subr.bf16.mxu0 0
      %5097 = vmatpush1.bf16.msra.mxu0 %v5076
      %5098 = vmatprep.subr.bf16.mxu0 0
      %5099 = vmatpush1.bf16.msra.mxu0 %v5077
      %5100 = vmatprep.subr.bf16.mxu0 0
      %5101 = vmatpush1.bf16.msra.mxu0 %v5078
      %5102 = vmatprep.subr.bf16.mxu0 0
      %5103 = vmatpush1.bf16.msra.mxu0 %v5079
      %5104 = vmatprep.subr.bf16.mxu0 0
      %5105 = vmatpush1.bf16.msra.mxu0 0
      %5106 = vmatprep.subr.bf16.mxu0 0
      %5107 = vmatpush1.bf16.msra.mxu0 0
      %5108 = vmatprep.subr.bf16.mxu0 0
      %5109 = vmatpush1.bf16.msra.mxu0 0
      %5110 = vmatprep.subr.bf16.mxu0 0
      %5111 = vmatpush1.bf16.msra.mxu0 0
      %5112 = vmatprep.subr.bf16.mxu0 0
      %5113 = vmatpush1.bf16.msra.mxu0 0
      %5114 = vmatprep.subr.bf16.mxu0 0
      %5115 = vmatpush1.bf16.msra.mxu0 0
      %5116 = vmatprep.subr.bf16.mxu0 0
      %5117 = vmatpush1.bf16.msra.mxu0 0
      %5118 = vmatprep.subr.bf16.mxu0 0
      %5119 = vmatpush1.bf16.msra.mxu0 0
      %5120 = vmatprep.subr.bf16.mxu0 0
      %5121 = vmatpush1.bf16.msra.mxu0 0
      %5122 = vmatprep.subr.bf16.mxu0 0
      %5123 = vmatpush1.bf16.msra.mxu0 0
      %5124 = vmatprep.subr.bf16.mxu0 0
      %5125 = vmatpush1.bf16.msra.mxu0 0
      %5126 = vmatprep.subr.bf16.mxu0 0
      %5127 = vmatpush1.bf16.msra.mxu0 0
      %5128 = vmatprep.mubr.bf16.mxu0 0
      %5129 = vmatmul.mubr.bf16.gmra.mrb[0].mxu0 %v5085
      %v5130 = vpop.f32.mrb[0].mxu0
      %v5131 = vadd.f32 %v5058, %v5130
      %v5132 = vpop.f32.mrb[0].mxu0
      %v5133 = vpop.f32.mrb[0].mxu0
      %v5134 = vadd.f32 %v5058, %v5133
      %v5135 = vpop.f32.mrb[0].mxu0
      %5136 = vmatprep.mubr.bf16.mxu0 0
      %5137 = vmatmul.mubr.bf16.gmra.mrb[0].mxu0 %v5088
      %v5138 = vpop.f32.mrb[0].mxu0
      %v5139 = vadd.f32 %v5058, %v5138
      %v5140 = vpop.f32.mrb[0].mxu0
      %v5141 = vpop.f32.mrb[0].mxu0
      %v5142 = vadd.f32 %v5058, %v5141
      %v5143 = vpop.f32.mrb[0].mxu0
      %5144 = vmatprep.mubr.bf16.mxu0 0
      %5145 = vmatmul.mubr.bf16.gmra.mrb[0].mxu0 %v5091
      %v5146 = vpop.f32.mrb[0].mxu0
      %v5147 = vadd.f32 %v5058, %v5146
      %v5148 = vpop.f32.mrb[0].mxu0
      %v5149 = vpop.f32.mrb[0].mxu0
      %v5150 = vadd.f32 %v5058, %v5149
      %v5151 = vpop.f32.mrb[0].mxu0
      %5152 = vmatprep.mubr.bf16.mxu0 0
      %5153 = vmatmul.mubr.bf16.gmra.mrb[0].mxu0 %v5094
      %v5154 = vpop.f32.mrb[0].mxu0
      %v5155 = vadd.f32 %v5058, %v5154
      %v5156 = vpop.f32.mrb[0].mxu0
      %v5157 = vpop.f32.mrb[0].mxu0
      %v5158 = vadd.f32 %v5058, %v5157
      %v5159 = vpop.f32.mrb[0].mxu0
      %5160 = vdwg.mxu0
      %v5161 = vadd.f32 %v4725, %v5131
      %v5162 = vadd.f32 %v4726, %v5134
      %v5163 = vadd.f32 %v4727, %v5139
      %v5164 = vadd.f32 %v4728, %v5142
      %v5165 = vadd.f32 %v4729, %v5147
      %v5166 = vadd.f32 %v4730, %v5150
      %v5167 = vadd.f32 %v4731, %v5155
      %v5168 = vadd.f32 %v4732, %v5158
      %v5169 = vld [vmem:[%s15] sm:$0x1]
      %v5170 = vld [vmem:[%s16] sm:$0x1]
      %v5171 = vsel %vm792, %v5161, 0.0
      %5172 = vadd.xlane.f32.xlu0 %v5171
      %v5173 = vpop.xlane.xlu0 %5172
      %v5174 = vsel %vm792, %v5162, 0.0
      %5175 = vadd.xlane.f32.xlu0 %v5174
      %v5176 = vpop.xlane.xlu0 %5175
      %v5177 = vsel %vm792, %v5163, 0.0
      %5178 = vadd.xlane.f32.xlu0 %v5177
      %v5179 = vpop.xlane.xlu0 %5178
      %v5180 = vsel %vm792, %v5164, 0.0
      %5181 = vadd.xlane.f32.xlu0 %v5180
      %v5182 = vpop.xlane.xlu0 %5181
      %v5183 = vsel %vm792, %v5165, 0.0
      %5184 = vadd.xlane.f32.xlu0 %v5183
      %v5185 = vpop.xlane.xlu0 %5184
      %v5186 = vsel %vm792, %v5166, 0.0
      %5187 = vadd.xlane.f32.xlu0 %v5186
      %v5188 = vpop.xlane.xlu0 %5187
      %v5189 = vsel %vm792, %v5167, 0.0
      %5190 = vadd.xlane.f32.xlu0 %v5189
      %v5191 = vpop.xlane.xlu0 %5190
      %v5192 = vsel %vm792, %v5168, 0.0
      %5193 = vadd.xlane.f32.xlu0 %v5192
      %v5194 = vpop.xlane.xlu0 %5193
      %v5195 = vmul.f32 %v5173, %v817
      %v5196 = vmul.f32 %v5176, %v817
      %v5197 = vmul.f32 %v5179, %v817
      %v5198 = vmul.f32 %v5182, %v817
      %v5199 = vmul.f32 %v5185, %v817
      %v5200 = vmul.f32 %v5188, %v817
      %v5201 = vmul.f32 %v5191, %v817
      %v5202 = vmul.f32 %v5194, %v817
      %v5203 = vsub.f32 %v5161, %v5195
      %v5204 = vsub.f32 %v5162, %v5196
      %v5205 = vsub.f32 %v5163, %v5197
      %v5206 = vsub.f32 %v5164, %v5198
      %v5207 = vsub.f32 %v5165, %v5199
      %v5208 = vsub.f32 %v5166, %v5200
      %v5209 = vsub.f32 %v5167, %v5201
      %v5210 = vsub.f32 %v5168, %v5202
      %v5211 = vmul.f32 %v5203, %v5203
      %v5212 = vmul.f32 %v5204, %v5204
      %v5213 = vmul.f32 %v5205, %v5205
      %v5214 = vmul.f32 %v5206, %v5206
      %v5215 = vmul.f32 %v5207, %v5207
      %v5216 = vmul.f32 %v5208, %v5208
      %v5217 = vmul.f32 %v5209, %v5209
      %v5218 = vmul.f32 %v5210, %v5210
      %v5219 = vsel %vm792, %v5211, 0.0
      %5220 = vadd.xlane.f32.xlu0 %v5219
      %v5221 = vpop.xlane.xlu0 %5220
      %v5222 = vsel %vm792, %v5212, 0.0
      %5223 = vadd.xlane.f32.xlu0 %v5222
      %v5224 = vpop.xlane.xlu0 %5223
      %v5225 = vsel %vm792, %v5213, 0.0
      %5226 = vadd.xlane.f32.xlu0 %v5225
      %v5227 = vpop.xlane.xlu0 %5226
      %v5228 = vsel %vm792, %v5214, 0.0
      %5229 = vadd.xlane.f32.xlu0 %v5228
      %v5230 = vpop.xlane.xlu0 %5229
      %v5231 = vsel %vm792, %v5215, 0.0
      %5232 = vadd.xlane.f32.xlu0 %v5231
      %v5233 = vpop.xlane.xlu0 %5232
      %v5234 = vsel %vm792, %v5216, 0.0
      %5235 = vadd.xlane.f32.xlu0 %v5234
      %v5236 = vpop.xlane.xlu0 %5235
      %v5237 = vsel %vm792, %v5217, 0.0
      %5238 = vadd.xlane.f32.xlu0 %v5237
      %v5239 = vpop.xlane.xlu0 %5238
      %v5240 = vsel %vm792, %v5218, 0.0
      %5241 = vadd.xlane.f32.xlu0 %v5240
      %v5242 = vpop.xlane.xlu0 %5241
      %v5243 = vmul.f32 %v5221, %v866
      %v5244 = vmul.f32 %v5224, %v866
      %v5245 = vmul.f32 %v5227, %v866
      %v5246 = vmul.f32 %v5230, %v866
      %v5247 = vmul.f32 %v5233, %v866
      %v5248 = vmul.f32 %v5236, %v866
      %v5249 = vmul.f32 %v5239, %v866
      %v5250 = vmul.f32 %v5242, %v866
      %v5251 = vrsqrt.pop %v5243
      %v5252 = vmul.f32 %v5243, %v5251
      %vm5253 = vcmp.eq.f32.partialorder %v5243, inf
      %v5254 = vsel %vm5253, %v5243, %v5252
      %vm5255 = vcmp.eq.f32.partialorder %v5243, 0.0
      %v5256 = vand.u32 %v5243, 2147483648
      %v5257 = vsel %vm5255, %v5256, %v5254
      %v5258 = vrsqrt.pop %v5244
      %v5259 = vmul.f32 %v5244, %v5258
      %vm5260 = vcmp.eq.f32.partialorder %v5244, inf
      %v5261 = vsel %vm5260, %v5244, %v5259
      %vm5262 = vcmp.eq.f32.partialorder %v5244, 0.0
      %v5263 = vand.u32 %v5244, 2147483648
      %v5264 = vsel %vm5262, %v5263, %v5261
      %v5265 = vrsqrt.pop %v5245
      %v5266 = vmul.f32 %v5245, %v5265
      %vm5267 = vcmp.eq.f32.partialorder %v5245, inf
      %v5268 = vsel %vm5267, %v5245, %v5266
      %vm5269 = vcmp.eq.f32.partialorder %v5245, 0.0
      %v5270 = vand.u32 %v5245, 2147483648
      %v5271 = vsel %vm5269, %v5270, %v5268
      %v5272 = vrsqrt.pop %v5246
      %v5273 = vmul.f32 %v5246, %v5272
      %vm5274 = vcmp.eq.f32.partialorder %v5246, inf
      %v5275 = vsel %vm5274, %v5246, %v5273
      %vm5276 = vcmp.eq.f32.partialorder %v5246, 0.0
      %v5277 = vand.u32 %v5246, 2147483648
      %v5278 = vsel %vm5276, %v5277, %v5275
      %v5279 = vrsqrt.pop %v5247
      %v5280 = vmul.f32 %v5247, %v5279
      %vm5281 = vcmp.eq.f32.partialorder %v5247, inf
      %v5282 = vsel %vm5281, %v5247, %v5280
      %vm5283 = vcmp.eq.f32.partialorder %v5247, 0.0
      %v5284 = vand.u32 %v5247, 2147483648
      %v5285 = vsel %vm5283, %v5284, %v5282
      %v5286 = vrsqrt.pop %v5248
      %v5287 = vmul.f32 %v5248, %v5286
      %vm5288 = vcmp.eq.f32.partialorder %v5248, inf
      %v5289 = vsel %vm5288, %v5248, %v5287
      %vm5290 = vcmp.eq.f32.partialorder %v5248, 0.0
      %v5291 = vand.u32 %v5248, 2147483648
      %v5292 = vsel %vm5290, %v5291, %v5289
      %v5293 = vrsqrt.pop %v5249
      %v5294 = vmul.f32 %v5249, %v5293
      %vm5295 = vcmp.eq.f32.partialorder %v5249, inf
      %v5296 = vsel %vm5295, %v5249, %v5294
      %vm5297 = vcmp.eq.f32.partialorder %v5249, 0.0
      %v5298 = vand.u32 %v5249, 2147483648
      %v5299 = vsel %vm5297, %v5298, %v5296
      %v5300 = vrsqrt.pop %v5250
      %v5301 = vmul.f32 %v5250, %v5300
      %vm5302 = vcmp.eq.f32.partialorder %v5250, inf
      %v5303 = vsel %vm5302, %v5250, %v5301
      %vm5304 = vcmp.eq.f32.partialorder %v5250, 0.0
      %v5305 = vand.u32 %v5250, 2147483648
      %v5306 = vsel %vm5304, %v5305, %v5303
      %v5307 = vadd.f32 %v5257, 1e-06
      %v5308 = vadd.f32 %v5264, 1e-06
      %v5309 = vadd.f32 %v5271, 1e-06
      %v5310 = vadd.f32 %v5278, 1e-06
      %v5311 = vadd.f32 %v5285, 1e-06
      %v5312 = vadd.f32 %v5292, 1e-06
      %v5313 = vadd.f32 %v5299, 1e-06
      %v5314 = vadd.f32 %v5306, 1e-06
      %v5316 = vlaneseq
      %v5317 = vshrl.u32 %v5316, 7
      %v5318 = vsub.s32 0, %v5317
      %v5319 = vrot.slane %v5169, %v5318
      %v5321 = vmul.f32 %v5319, %v5203
      %v5322 = vmul.f32 %v5319, %v5204
      %v5323 = vmul.f32 %v5319, %v5205
      %v5324 = vmul.f32 %v5319, %v5206
      %v5325 = vmul.f32 %v5319, %v5207
      %v5326 = vmul.f32 %v5319, %v5208
      %v5327 = vmul.f32 %v5319, %v5209
      %v5328 = vmul.f32 %v5319, %v5210
      %v5329 = vrcp.pop %v5307
      %v5330 = vrcp.pop %v5308
      %v5331 = vrcp.pop %v5309
      %v5332 = vrcp.pop %v5310
      %v5333 = vrcp.pop %v5311
      %v5334 = vrcp.pop %v5312
      %v5335 = vrcp.pop %v5313
      %v5336 = vrcp.pop %v5314
      %v5337 = vmul.f32 %v5321, %v5329
      %v5338 = vmul.f32 %v5322, %v5330
      %v5339 = vmul.f32 %v5323, %v5331
      %v5340 = vmul.f32 %v5324, %v5332
      %v5341 = vmul.f32 %v5325, %v5333
      %v5342 = vmul.f32 %v5326, %v5334
      %v5343 = vmul.f32 %v5327, %v5335
      %v5344 = vmul.f32 %v5328, %v5336
      %v5346 = vlaneseq
      %v5347 = vshrl.u32 %v5346, 7
      %v5348 = vsub.s32 0, %v5347
      %v5349 = vrot.slane %v5170, %v5348
      %v5351 = vadd.f32 %v5337, %v5349
      %v5352 = vadd.f32 %v5338, %v5349
      %v5353 = vadd.f32 %v5339, %v5349
      %v5354 = vadd.f32 %v5340, %v5349
      %v5355 = vadd.f32 %v5341, %v5349
      %v5356 = vadd.f32 %v5342, %v5349
      %v5357 = vadd.f32 %v5343, %v5349
      %v5358 = vadd.f32 %v5344, %v5349
      %5359 = vst.msk [vmem:[%s550] sm:$0xff] %vm792, %v5351
      %5360 = vst.msk [vmem:[%s550 + $0x8] sm:$0xff] %vm792, %v5352
      %5361 = vst.msk [vmem:[%s550 + $0x10] sm:$0xff] %vm792, %v5353
      %5362 = vst.msk [vmem:[%s550 + $0x18] sm:$0xff] %vm792, %v5354
      %5363 = vst.msk [vmem:[%s550 + $0x20] sm:$0xff] %vm792, %v5355
      %5364 = vst.msk [vmem:[%s550 + $0x28] sm:$0xff] %vm792, %v5356
      %5365 = vst.msk [vmem:[%s550 + $0x30] sm:$0xff] %vm792, %v5357
      %5366 = vst.msk [vmem:[%s550 + $0x38] sm:$0xff] %vm792, %v5358
      %s5367 = smul.u32 8, %s28
      %p5368 = scmp.lt.s32.totalorder %s5367, 15
      %s5369 = scalar_select %p5368, %s5367, 15
      %s5370 = smul.addr %s5369, 8
      %s5371 = scalar_lea.vmem %s17, %s5370
      // Predicated region
      $region89: #{encoder_forward.1} parent=87 // pred_check
        %p5372 = pneg %p408
      $region90: #{encoder_forward.1} parent=87 // pred_check_branch
        %5374 = sbr.rel (%p5372) target = $region92
      $region91: #{encoder_forward.1} parent=87 // pred_region
        %s5375 = smul.u32 8, %s28
      $region92: #{encoder_forward.1} parent=87 // pred_fallthru
        _
    $region88: #{encoder_forward.1} parent=5 // pred_fallthru
      _
    %p5376 = scmp.le.s32.totalorder 2, %s23
    // Predicated region
    $region93: #{encoder_forward.1} parent=5 // pred_check
      %p5377 = pneg %p5376
    $region94: #{encoder_forward.1} parent=5 // pred_check_branch
      %5379 = sbr.rel (%p5377) target = $region96
    $region95: #{encoder_forward.1} parent=5 // pred_region
      %s5380 = ssub.s32 %s23, 2
      // Predicated region
      $region97: #{encoder_forward.1} parent=95 // pred_check
        %p5381 = pneg %p414
      $region98: #{encoder_forward.1} parent=95 // pred_check_branch
        %5383 = sbr.rel (%p5381) target = $region100
      $region99: #{encoder_forward.1} parent=95 // pred_region
        %s5384 = smul.u32 8, %s29
        %p5385 = scmp.lt.s32.totalorder %s5384, 15
        %s5386 = scalar_select %p5385, %s5384, 15
        %s5387 = smul.addr %s5386, 8
        %s5388 = scalar_lea.vmem %s17, %s5387
      $region100: #{encoder_forward.1} parent=95 // pred_fallthru
        _
    $region96: #{encoder_forward.1} parent=5 // pred_fallthru
      _
  $region6: #{encoder_forward.1} parent=0 // loop_footer
    %s27 = sadd.s32 1, %s23
  $region7: #{encoder_forward.1} parent=0 // loop_footer_branch
    %22 = sbr.rel target = $region3
  $region8: #{encoder_forward.1} parent=0 // loop_exit
    _

</llo_original>
